<compile_context>
chip_gen: v6e
topology: v6e:2x2x1
jax: 0.10.0
libtpu: 0.0.40
codegen_flags: <defaults>
</compile_context>

<pallas_src>
import functools

import jax
import jax.numpy as jnp
from jax.experimental import pallas as pl
from jax.experimental.pallas import tpu as pltpu

_LANE = 128      # lane width (last dim) for lane-dense layout
_SUBLANE = 8     # sublane granularity for f32


def _round_up(n, m):
    return ((n + m - 1) // m) * m


def _fused_mlp_kernel(*refs, num_layers: int, mxu_dtype, precision, fast_sigmoid: bool):
    """refs = (x_ref, w0, b0, w1, b1, ..., o_ref); all dims pre-padded to lane multiples."""
    x_ref = refs[0]
    o_ref = refs[-1]
    wb = refs[1:-1]

    y = x_ref[...]
    for i in range(num_layers):
        w = wb[2 * i][...]                      # (in_pad, out_pad), stored in mxu_dtype
        b = wb[2 * i + 1][...]                  # (1, out_pad)      -> broadcasts over batch
        y = jnp.dot(y.astype(mxu_dtype), w,
                    preferred_element_type=jnp.float32,
                    precision=precision) + b.astype(jnp.float32)
        if i < num_layers - 1:
            if fast_sigmoid:
                # exp and reciprocal both live in the EUP slot -> free filler next to MXU/VPU.
                y = pl.reciprocal(1.0 + jnp.exp(-y), approx=True)
            else:
                y = jax.nn.sigmoid(y)
    o_ref[...] = y.astype(o_ref.dtype)


def init_mlp_params(key, input_size, layer_sizes, output_size, dtype=jnp.float32):
    """Deterministic init mirroring nn.Linear default (uniform +/- 1/sqrt(fan_in)).

    Weights are stored pre-transposed as (in_features, out_features); bias as (1, out_features).
    """
    dims = [input_size] + list(layer_sizes) + [output_size]
    params = []
    for fan_in, fan_out in zip(dims[:-1], dims[1:]):
        key, wk, bk = jax.random.split(key, 3)
        bound = 1.0 / jnp.sqrt(jnp.asarray(fan_in, dtype))
        w_t = jax.random.uniform(wk, (fan_in, fan_out), dtype, -bound, bound)
        b = jax.random.uniform(bk, (1, fan_out), dtype, -bound, bound)
        params.append((w_t, b))
    return params


def prepare_mlp_params(params, input_size, *, use_bf16=False):
    """Pad (and optionally cast) weights/biases ONCE; reuse the result for every forward call.

    Padding is exact: padded W rows/cols and bias lanes are zero, so padded activation lanes
    (sigmoid(0)=0.5) hit zero weight rows in the next layer and contribute nothing.
    """
    dims = [input_size] + [int(w.shape[1]) for w, _ in params]
    pdims = [_round_up(d, _LANE) for d in dims]
    wdtype = jnp.bfloat16 if use_bf16 else jnp.float32

    padded = []
    for (w_t, b), pin, pout in zip(params, pdims[:-1], pdims[1:]):
        fi, fo = w_t.shape
        w_pad = jnp.zeros((pin, pout), wdtype).at[:fi, :fo].set(w_t.astype(wdtype))
        b_pad = jnp.zeros((1, pout), wdtype).at[:, :fo].set(b.reshape(1, -1).astype(wdtype))
        padded.append((w_pad, b_pad))

    return {"weights": padded, "dims": dims, "pdims": pdims, "use_bf16": use_bf16}


def mlp_forward(prepared, x, *, batch_tile=256):
    """Fused MLP forward. `prepared` comes from prepare_mlp_params; x is (B, input_size)."""
    dims, pdims = prepared["dims"], prepared["pdims"]
    use_bf16 = prepared["use_bf16"]
    padded = prepared["weights"]
    num_layers = len(padded)

    B, in_dim = x.shape
    assert in_dim == dims[0], f"expected input dim {dims[0]}, got {in_dim}"

    # --- batch tiling -----------------------------------------------------------------------
    B_pad0 = _round_up(B, _SUBLANE)
    tile_cap = _round_up(batch_tile, _SUBLANE)
    # >=2 grid steps when the batch allows it so ("parallel",) shards across v7x's 2 TCs;
    # tb ~ ceil(B/n_tiles) bounds padding waste to one sublane group per tile.
    n_tiles = max(pl.cdiv(B_pad0, tile_cap), 2 if B_pad0 >= 2 * _SUBLANE else 1)
    tb = _round_up(pl.cdiv(B_pad0, n_tiles), _SUBLANE)
    n_tiles = pl.cdiv(B_pad0, tb)
    B_pad = n_tiles * tb
    grid = (n_tiles,)

    in_pad, out_pad = pdims[0], pdims[-1]

    # Only the activations are padded per call (they change every call anyway).
    x_pad = jnp.zeros((B_pad, in_pad), jnp.float32).at[:B, :in_dim].set(x.astype(jnp.float32))

    flat_wb = []
    for w_pad, b_pad in padded:
        flat_wb += [w_pad, b_pad]

    # --- specs ------------------------------------------------------------------------------
    def build_in_specs(single_buffer_weights):
        specs = [pl.BlockSpec((tb, in_pad), lambda i: (i, 0))]
        for pin, pout in zip(pdims[:-1], pdims[1:]):
            if single_buffer_weights:
                # index_map is constant -> never re-fetched; one buffer halves weight VMEM.
                specs.append(pl.BlockSpec((pin, pout), lambda i: (0, 0),
                                          pipeline_mode=pl.Buffered(1)))
                specs.append(pl.BlockSpec((1, pout), lambda i: (0, 0),
                                          pipeline_mode=pl.Buffered(1)))
            else:
                specs.append(pl.BlockSpec((pin, pout), lambda i: (0, 0)))
                specs.append(pl.BlockSpec((1, pout), lambda i: (0, 0)))
        return specs

    out_specs = pl.BlockSpec((tb, out_pad), lambda i: (i, 0))

    mxu_dtype = jnp.bfloat16 if use_bf16 else jnp.float32
    precision = None if use_bf16 else jax.lax.Precision.HIGHEST
    kernel = functools.partial(
        _fused_mlp_kernel, num_layers=num_layers, mxu_dtype=mxu_dtype,
        precision=precision, fast_sigmoid=use_bf16)

    # --- cost estimate & VMEM budget ---------------------------------------------------------
    w_itemsize = 2 if use_bf16 else 4
    weight_bytes = sum((pin * pout + pout) * w_itemsize
                       for pin, pout in zip(pdims[:-1], pdims[1:]))
    flops = 2 * B_pad * sum(pin * pout for pin, pout in zip(pdims[:-1], pdims[1:]))
    transcendentals = B_pad * sum(pdims[1:-1])
    bytes_accessed = x_pad.size * 4 + weight_bytes + B_pad * out_pad * 4
    cost = pl.CostEstimate(flops=flops, transcendentals=transcendentals,
                           bytes_accessed=bytes_accessed)

    def vmem_limit(weight_bufs):
        act_bytes = 2 * tb * (in_pad + out_pad) * 4          # double-buffered in/out tiles
        interm_bytes = 4 * tb * max(pdims) * 4                # intermediate-activation headroom
        total = act_bytes + weight_bufs * weight_bytes + interm_bytes + (8 << 20)
        return int(min(max(total, 16 << 20), 56 << 20))       # cap v7x-safe (< 64 MiB physical)

    def run(single_buffer_weights):
        return pl.pallas_call(
            kernel,
            out_shape=jax.ShapeDtypeStruct((B_pad, out_pad), jnp.float32),
            grid=grid,
            in_specs=build_in_specs(single_buffer_weights),
            out_specs=out_specs,
            cost_estimate=cost,
            compiler_params=pltpu.CompilerParams(
                dimension_semantics=("parallel",),
                vmem_limit_bytes=vmem_limit(1 if single_buffer_weights else 2),
            ),
        )(x_pad, *flat_wb)

    try:
        out = run(True)
    except Exception:
        # Fallback if single-buffered (Buffered(1)) weight specs are rejected by this runtime.
        out = run(False)

    return out[:B, :dims[-1]]


def mlp_reference(params, x):
    for w_t, b in params[:-1]:
        x = jax.nn.sigmoid(x @ w_t + b)
    w_t, b = params[-1]
    return x @ w_t + b


if __name__ == "__main__":
    key = jax.random.PRNGKey(0)

    # Small shapes consistent with the module: MLP(input_size=32, layer_sizes=[64, 32], output_size=16)
    batch = 8
    input_size = 32
    layer_sizes = [64, 32]
    output_size = 16

    key, pkey, xkey = jax.random.split(key, 3)
    params = init_mlp_params(pkey, input_size, layer_sizes, output_size)
    x = jax.random.normal(xkey, (batch, input_size), jnp.float32)

    ref = mlp_reference(params, x)

    # f32 path (default): faithful to the float64 module within f32 limits.
    prepared_f32 = prepare_mlp_params(params, input_size, use_bf16=False)
    out = mlp_forward(prepared_f32, x)
    jax.block_until_ready(out)
    assert out.shape == (batch, output_size)
    assert jnp.allclose(out, ref, atol=1e-4, rtol=1e-4), "f32 path mismatch vs reference"

    # bf16 fast path (perf option): bf16 MXU inputs, f32 accumulation -> looser tolerance.
    prepared_bf16 = prepare_mlp_params(params, input_size, use_bf16=True)
    out_bf16 = mlp_forward(prepared_bf16, x)
    jax.block_until_ready(out_bf16)
    assert out_bf16.shape == (batch, output_size)
    assert jnp.allclose(out_bf16, ref, atol=5e-2, rtol=5e-2), "bf16 path mismatch vs reference"

    print("KERNEL_OK")
</pallas_src>

<mosaic_0001>
module attributes {stable_mosaic.version = 11 : i64} {
  func.func @_fused_mlp_kernel(%arg0: i32, %arg1: memref<8x128xf32, #tpu.memory_space<vmem>>, %arg2: memref<128x128xf32, #tpu.memory_space<vmem>>, %arg3: memref<1x128xf32, #tpu.memory_space<vmem>>, %arg4: memref<128x128xf32, #tpu.memory_space<vmem>>, %arg5: memref<1x128xf32, #tpu.memory_space<vmem>>, %arg6: memref<128x128xf32, #tpu.memory_space<vmem>>, %arg7: memref<1x128xf32, #tpu.memory_space<vmem>>, %arg8: memref<8x128xf32, #tpu.memory_space<vmem>>) attributes {dimension_semantics = [#tpu.dimension_semantics<parallel>], iteration_bounds = array<i64: 1>, scalar_prefetch = 0 : i64, scratch_operands = 0 : i64, tpu.core_type = #tpu.core_type<tc>, window_params = [{transform_indices = @transform_0, window_bounds = array<i64: 8, 128>}, {pipeline_mode = #tpu.pipeline_mode<synchronous>, transform_indices = @transform_1, window_bounds = array<i64: 128, 128>}, {pipeline_mode = #tpu.pipeline_mode<synchronous>, transform_indices = @transform_2, window_bounds = array<i64: 1, 128>}, {pipeline_mode = #tpu.pipeline_mode<synchronous>, transform_indices = @transform_3, window_bounds = array<i64: 128, 128>}, {pipeline_mode = #tpu.pipeline_mode<synchronous>, transform_indices = @transform_4, window_bounds = array<i64: 1, 128>}, {pipeline_mode = #tpu.pipeline_mode<synchronous>, transform_indices = @transform_5, window_bounds = array<i64: 128, 128>}, {pipeline_mode = #tpu.pipeline_mode<synchronous>, transform_indices = @transform_6, window_bounds = array<i64: 1, 128>}, {transform_indices = @transform_7, window_bounds = array<i64: 8, 128>}]} {
    %c0 = arith.constant 0 : index
    %c0_0 = arith.constant 0 : index
    %0 = vector.load %arg1[%c0, %c0_0] : memref<8x128xf32, #tpu.memory_space<vmem>>, vector<8x128xf32>
    %c0_1 = arith.constant 0 : index
    %c0_2 = arith.constant 0 : index
    %1 = vector.load %arg2[%c0_1, %c0_2] : memref<128x128xf32, #tpu.memory_space<vmem>>, vector<128x128xf32>
    %c0_3 = arith.constant 0 : index
    %c0_4 = arith.constant 0 : index
    %2 = vector.load %arg3[%c0_3, %c0_4] : memref<1x128xf32, #tpu.memory_space<vmem>>, vector<1x128xf32>
    %cst = arith.constant dense<0.000000e+00> : vector<8x128xf32>
    %3 = tpu.matmul %0, %1, %cst {dimension_numbers = #tpu.dot_dimension_numbers<[1], [0], [0], [1], [0, 0, 1, 1], [], []>, precision = #tpu.contract_precision<fp32>} : vector<8x128xf32>, vector<128x128xf32>, vector<8x128xf32> -> vector<8x128xf32>
    %4 = vector.broadcast %2 : vector<1x128xf32> to vector<8x128xf32>
    %5 = arith.addf %3, %4 : vector<8x128xf32>
    %6 = arith.negf %5 : vector<8x128xf32>
    %7 = math.exp %6 : vector<8x128xf32>
    %cst_5 = arith.constant 1.000000e+00 : f32
    %8 = vector.broadcast %cst_5 : f32 to vector<8x128xf32>
    %9 = arith.addf %8, %7 : vector<8x128xf32>
    %10 = arith.divf %8, %9 : vector<8x128xf32>
    %c0_6 = arith.constant 0 : index
    %c0_7 = arith.constant 0 : index
    %11 = vector.load %arg4[%c0_6, %c0_7] : memref<128x128xf32, #tpu.memory_space<vmem>>, vector<128x128xf32>
    %c0_8 = arith.constant 0 : index
    %c0_9 = arith.constant 0 : index
    %12 = vector.load %arg5[%c0_8, %c0_9] : memref<1x128xf32, #tpu.memory_space<vmem>>, vector<1x128xf32>
    %cst_10 = arith.constant dense<0.000000e+00> : vector<8x128xf32>
    %13 = tpu.matmul %10, %11, %cst_10 {dimension_numbers = #tpu.dot_dimension_numbers<[1], [0], [0], [1], [0, 0, 1, 1], [], []>, precision = #tpu.contract_precision<fp32>} : vector<8x128xf32>, vector<128x128xf32>, vector<8x128xf32> -> vector<8x128xf32>
    %14 = vector.broadcast %12 : vector<1x128xf32> to vector<8x128xf32>
    %15 = arith.addf %13, %14 : vector<8x128xf32>
    %16 = arith.negf %15 : vector<8x128xf32>
    %17 = math.exp %16 : vector<8x128xf32>
    %cst_11 = arith.constant 1.000000e+00 : f32
    %18 = vector.broadcast %cst_11 : f32 to vector<8x128xf32>
    %19 = arith.addf %18, %17 : vector<8x128xf32>
    %20 = arith.divf %18, %19 : vector<8x128xf32>
    %c0_12 = arith.constant 0 : index
    %c0_13 = arith.constant 0 : index
    %21 = vector.load %arg6[%c0_12, %c0_13] : memref<128x128xf32, #tpu.memory_space<vmem>>, vector<128x128xf32>
    %c0_14 = arith.constant 0 : index
    %c0_15 = arith.constant 0 : index
    %22 = vector.load %arg7[%c0_14, %c0_15] : memref<1x128xf32, #tpu.memory_space<vmem>>, vector<1x128xf32>
    %cst_16 = arith.constant dense<0.000000e+00> : vector<8x128xf32>
    %23 = tpu.matmul %20, %21, %cst_16 {dimension_numbers = #tpu.dot_dimension_numbers<[1], [0], [0], [1], [0, 0, 1, 1], [], []>, precision = #tpu.contract_precision<fp32>} : vector<8x128xf32>, vector<128x128xf32>, vector<8x128xf32> -> vector<8x128xf32>
    %24 = vector.broadcast %22 : vector<1x128xf32> to vector<8x128xf32>
    %25 = arith.addf %23, %24 : vector<8x128xf32>
    %c0_17 = arith.constant 0 : index
    %c0_18 = arith.constant 0 : index
    %26 = vector.load %arg8[%c0_17, %c0_18] : memref<8x128xf32, #tpu.memory_space<vmem>>, vector<8x128xf32>
    tpu.vector_store %arg8[%c0_17, %c0_18], %25 {strides = array<i32>} : memref<8x128xf32, #tpu.memory_space<vmem>>, vector<8x128xf32>,
    return
  }
  func.func @transform_0(%arg0: i32) -> (i32, i32) {
    %c0_i32 = arith.constant 0 : i32
    %c0_i32_0 = arith.constant 0 : i32
    return %arg0, %c0_i32 : i32, i32
  }
  func.func @transform_1(%arg0: i32) -> (i32, i32) {
    %c0_i32 = arith.constant 0 : i32
    %c0_i32_0 = arith.constant 0 : i32
    %c0_i32_1 = arith.constant 0 : i32
    return %c0_i32, %c0_i32_0 : i32, i32
  }
  func.func @transform_2(%arg0: i32) -> (i32, i32) {
    %c0_i32 = arith.constant 0 : i32
    %c0_i32_0 = arith.constant 0 : i32
    %c0_i32_1 = arith.constant 0 : i32
    return %c0_i32, %c0_i32_0 : i32, i32
  }
  func.func @transform_3(%arg0: i32) -> (i32, i32) {
    %c0_i32 = arith.constant 0 : i32
    %c0_i32_0 = arith.constant 0 : i32
    %c0_i32_1 = arith.constant 0 : i32
    return %c0_i32, %c0_i32_0 : i32, i32
  }
  func.func @transform_4(%arg0: i32) -> (i32, i32) {
    %c0_i32 = arith.constant 0 : i32
    %c0_i32_0 = arith.constant 0 : i32
    %c0_i32_1 = arith.constant 0 : i32
    return %c0_i32, %c0_i32_0 : i32, i32
  }
  func.func @transform_5(%arg0: i32) -> (i32, i32) {
    %c0_i32 = arith.constant 0 : i32
    %c0_i32_0 = arith.constant 0 : i32
    %c0_i32_1 = arith.constant 0 : i32
    return %c0_i32, %c0_i32_0 : i32, i32
  }
  func.func @transform_6(%arg0: i32) -> (i32, i32) {
    %c0_i32 = arith.constant 0 : i32
    %c0_i32_0 = arith.constant 0 : i32
    %c0_i32_1 = arith.constant 0 : i32
    return %c0_i32, %c0_i32_0 : i32, i32
  }
  func.func @transform_7(%arg0: i32) -> (i32, i32) {
    %c0_i32 = arith.constant 0 : i32
    %c0_i32_0 = arith.constant 0 : i32
    return %arg0, %c0_i32 : i32, i32
  }
}

module attributes {stable_mosaic.version = 11 : i64} {
  func.func @_fused_mlp_kernel(%arg0: i32, %arg1: memref<8x128xf32, #tpu.memory_space<vmem>>, %arg2: memref<128x128xf32, #tpu.memory_space<vmem>>, %arg3: memref<1x128xf32, #tpu.memory_space<vmem>>, %arg4: memref<128x128xf32, #tpu.memory_space<vmem>>, %arg5: memref<1x128xf32, #tpu.memory_space<vmem>>, %arg6: memref<128x128xf32, #tpu.memory_space<vmem>>, %arg7: memref<1x128xf32, #tpu.memory_space<vmem>>, %arg8: memref<8x128xf32, #tpu.memory_space<vmem>>) attributes {dimension_semantics = [#tpu.dimension_semantics<parallel>], iteration_bounds = array<i64: 1>, scalar_prefetch = 0 : i64, scratch_operands = 0 : i64, tpu.core_type = #tpu.core_type<tc>, window_params = [{transform_indices = @transform_0, window_bounds = array<i64: 8, 128>}, {pipeline_mode = #tpu.pipeline_mode<synchronous>, transform_indices = @transform_1, window_bounds = array<i64: 128, 128>}, {pipeline_mode = #tpu.pipeline_mode<synchronous>, transform_indices = @transform_2, window_bounds = array<i64: 1, 128>}, {pipeline_mode = #tpu.pipeline_mode<synchronous>, transform_indices = @transform_3, window_bounds = array<i64: 128, 128>}, {pipeline_mode = #tpu.pipeline_mode<synchronous>, transform_indices = @transform_4, window_bounds = array<i64: 1, 128>}, {pipeline_mode = #tpu.pipeline_mode<synchronous>, transform_indices = @transform_5, window_bounds = array<i64: 128, 128>}, {pipeline_mode = #tpu.pipeline_mode<synchronous>, transform_indices = @transform_6, window_bounds = array<i64: 1, 128>}, {transform_indices = @transform_7, window_bounds = array<i64: 8, 128>}]} {
    %c0 = arith.constant 0 : index
    %c0_0 = arith.constant 0 : index
    %0 = vector.load %arg1[%c0, %c0_0] : memref<8x128xf32, #tpu.memory_space<vmem>>, vector<8x128xf32>
    %c0_1 = arith.constant 0 : index
    %c0_2 = arith.constant 0 : index
    %1 = vector.load %arg2[%c0_1, %c0_2] : memref<128x128xf32, #tpu.memory_space<vmem>>, vector<128x128xf32>
    %c0_3 = arith.constant 0 : index
    %c0_4 = arith.constant 0 : index
    %2 = vector.load %arg3[%c0_3, %c0_4] : memref<1x128xf32, #tpu.memory_space<vmem>>, vector<1x128xf32>
    %cst = arith.constant dense<0.000000e+00> : vector<8x128xf32>
    %3 = tpu.matmul %0, %1, %cst {dimension_numbers = #tpu.dot_dimension_numbers<[1], [0], [0], [1], [0, 0, 1, 1], [], []>, precision = #tpu.contract_precision<fp32>} : vector<8x128xf32>, vector<128x128xf32>, vector<8x128xf32> -> vector<8x128xf32>
    %4 = vector.broadcast %2 : vector<1x128xf32> to vector<8x128xf32>
    %5 = arith.addf %3, %4 : vector<8x128xf32>
    %6 = arith.negf %5 : vector<8x128xf32>
    %7 = math.exp %6 : vector<8x128xf32>
    %cst_5 = arith.constant 1.000000e+00 : f32
    %8 = vector.broadcast %cst_5 : f32 to vector<8x128xf32>
    %9 = arith.addf %8, %7 : vector<8x128xf32>
    %10 = arith.divf %8, %9 : vector<8x128xf32>
    %c0_6 = arith.constant 0 : index
    %c0_7 = arith.constant 0 : index
    %11 = vector.load %arg4[%c0_6, %c0_7] : memref<128x128xf32, #tpu.memory_space<vmem>>, vector<128x128xf32>
    %c0_8 = arith.constant 0 : index
    %c0_9 = arith.constant 0 : index
    %12 = vector.load %arg5[%c0_8, %c0_9] : memref<1x128xf32, #tpu.memory_space<vmem>>, vector<1x128xf32>
    %cst_10 = arith.constant dense<0.000000e+00> : vector<8x128xf32>
    %13 = tpu.matmul %10, %11, %cst_10 {dimension_numbers = #tpu.dot_dimension_numbers<[1], [0], [0], [1], [0, 0, 1, 1], [], []>, precision = #tpu.contract_precision<fp32>} : vector<8x128xf32>, vector<128x128xf32>, vector<8x128xf32> -> vector<8x128xf32>
    %14 = vector.broadcast %12 : vector<1x128xf32> to vector<8x128xf32>
    %15 = arith.addf %13, %14 : vector<8x128xf32>
    %16 = arith.negf %15 : vector<8x128xf32>
    %17 = math.exp %16 : vector<8x128xf32>
    %cst_11 = arith.constant 1.000000e+00 : f32
    %18 = vector.broadcast %cst_11 : f32 to vector<8x128xf32>
    %19 = arith.addf %18, %17 : vector<8x128xf32>
    %20 = arith.divf %18, %19 : vector<8x128xf32>
    %c0_12 = arith.constant 0 : index
    %c0_13 = arith.constant 0 : index
    %21 = vector.load %arg6[%c0_12, %c0_13] : memref<128x128xf32, #tpu.memory_space<vmem>>, vector<128x128xf32>
    %c0_14 = arith.constant 0 : index
    %c0_15 = arith.constant 0 : index
    %22 = vector.load %arg7[%c0_14, %c0_15] : memref<1x128xf32, #tpu.memory_space<vmem>>, vector<1x128xf32>
    %cst_16 = arith.constant dense<0.000000e+00> : vector<8x128xf32>
    %23 = tpu.matmul %20, %21, %cst_16 {dimension_numbers = #tpu.dot_dimension_numbers<[1], [0], [0], [1], [0, 0, 1, 1], [], []>, precision = #tpu.contract_precision<fp32>} : vector<8x128xf32>, vector<128x128xf32>, vector<8x128xf32> -> vector<8x128xf32>
    %24 = vector.broadcast %22 : vector<1x128xf32> to vector<8x128xf32>
    %25 = arith.addf %23, %24 : vector<8x128xf32>
    %c0_17 = arith.constant 0 : index
    %c0_18 = arith.constant 0 : index
    %26 = vector.load %arg8[%c0_17, %c0_18] : memref<8x128xf32, #tpu.memory_space<vmem>>, vector<8x128xf32>
    tpu.vector_store %arg8[%c0_17, %c0_18], %25 {strides = array<i32>} : memref<8x128xf32, #tpu.memory_space<vmem>>, vector<8x128xf32>,
    return
  }
  func.func @transform_0(%arg0: i32) -> (i32, i32) {
    %c0_i32 = arith.constant 0 : i32
    %c0_i32_0 = arith.constant 0 : i32
    return %arg0, %c0_i32 : i32, i32
  }
  func.func @transform_1(%arg0: i32) -> (i32, i32) {
    %c0_i32 = arith.constant 0 : i32
    %c0_i32_0 = arith.constant 0 : i32
    %c0_i32_1 = arith.constant 0 : i32
    return %c0_i32, %c0_i32_0 : i32, i32
  }
  func.func @transform_2(%arg0: i32) -> (i32, i32) {
    %c0_i32 = arith.constant 0 : i32
    %c0_i32_0 = arith.constant 0 : i32
    %c0_i32_1 = arith.constant 0 : i32
    return %c0_i32, %c0_i32_0 : i32, i32
  }
  func.func @transform_3(%arg0: i32) -> (i32, i32) {
    %c0_i32 = arith.constant 0 : i32
    %c0_i32_0 = arith.constant 0 : i32
    %c0_i32_1 = arith.constant 0 : i32
    return %c0_i32, %c0_i32_0 : i32, i32
  }
  func.func @transform_4(%arg0: i32) -> (i32, i32) {
    %c0_i32 = arith.constant 0 : i32
    %c0_i32_0 = arith.constant 0 : i32
    %c0_i32_1 = arith.constant 0 : i32
    return %c0_i32, %c0_i32_0 : i32, i32
  }
  func.func @transform_5(%arg0: i32) -> (i32, i32) {
    %c0_i32 = arith.constant 0 : i32
    %c0_i32_0 = arith.constant 0 : i32
    %c0_i32_1 = arith.constant 0 : i32
    return %c0_i32, %c0_i32_0 : i32, i32
  }
  func.func @transform_6(%arg0: i32) -> (i32, i32) {
    %c0_i32 = arith.constant 0 : i32
    %c0_i32_0 = arith.constant 0 : i32
    %c0_i32_1 = arith.constant 0 : i32
    return %c0_i32, %c0_i32_0 : i32, i32
  }
  func.func @transform_7(%arg0: i32) -> (i32, i32) {
    %c0_i32 = arith.constant 0 : i32
    %c0_i32_0 = arith.constant 0 : i32
    return %arg0, %c0_i32 : i32, i32
  }
}

</mosaic_0001>

<llo_original>
// kernel: tpu_custom_call.1
$region0: #{tpu_custom_call.1}
  #allocation0 [shape = 'u32[]', space=smem, size = 0x4, offset = 0x4, fixed_abs, tag = 'smem constant byte address 0x4 - core index']
  #allocation1 [shape = 'u32[144,128]{1,0:T(1,128)}', space=vmem, size = 0x12000, scoped, tag = 'internal scratch']
  %s0 = inlined_call_operand.hbm [shape: f32[8,128], index: 0, kind: input, shape index: {}]
  %s1 = inlined_call_operand.hbm [shape: f32[128,128], index: 1, kind: input, shape index: {}]
  %s2 = inlined_call_operand.vmem [shape: f32[1,128], index: 2, kind: input, shape index: {}]
  %s3 = inlined_call_operand.hbm [shape: f32[128,128], index: 3, kind: input, shape index: {}]
  %s4 = inlined_call_operand.vmem [shape: f32[1,128], index: 4, kind: input, shape index: {}]
  %s5 = inlined_call_operand.hbm [shape: f32[128,128], index: 5, kind: input, shape index: {}]
  %s6 = inlined_call_operand.vmem [shape: f32[1,128], index: 6, kind: input, shape index: {}]
  %s7 = inlined_call_operand.hbm [shape: f32[8,128], index: 7, kind: output, shape index: {}]
  %s8 = sld [smem:[#allocation0]]
  $region54: #{tpu_custom_call.1} parent=0
    _
  %s10 = ssub.s32 1, %s8
  %s11 = scalar_select 0, %s10, %s8
  $region1: #{tpu_custom_call.1} parent=0
    #allocation2 [shape = 'u8[4096]{0}', space=vmem, size = 0x1000, scoped, tag = 'input window, operand 0, single buffered']
    #allocation3 [shape = 's32[1]{0}', space=sflag, size = 0x4, scoped, tag = 'scoped memory for tpu_custom_call.1']
    #allocation4 [shape = 's32[1]{0}', space=sflag, size = 0x4, scoped, tag = 'scoped memory for tpu_custom_call.1']
    #allocation5 [shape = 'u8[65536]{0}', space=vmem, size = 0x10000, scoped, tag = 'input window, operand 1, single buffered']
    #allocation6 [shape = 's32[1]{0}', space=sflag, size = 0x4, scoped, tag = 'scoped memory for tpu_custom_call.1']
    #allocation7 [shape = 'u8[65536]{0}', space=vmem, size = 0x10000, scoped, tag = 'input window, operand 3, single buffered']
    #allocation8 [shape = 'u8[65536]{0}', space=vmem, size = 0x10000, scoped, tag = 'input window, operand 5, single buffered']
    #allocation9 [shape = 's32[1]{0}', space=sflag, size = 0x4, scoped, tag = 'scoped memory for tpu_custom_call.1']
    #allocation10 [shape = 'u8[4096]{0}', space=vmem, size = 0x1000, scoped, tag = 'output window, operand 0, single buffered']
    %12 = vsyncpa [#allocation3], 0
    %13 = vsyncpa [#allocation6], 0
    %14 = vsyncpa [#allocation9], 0
    %15 = vsyncpa [#allocation4], 0
    // Predicated region
    $region2: #{tpu_custom_call.1} parent=1 // pred_check
      _
    $region3: #{tpu_custom_call.1} parent=1 // pred_check_branch
      %17 = sbr.rel (0) target = $region5
    $region4: #{tpu_custom_call.1} parent=1 // pred_region
      %s19 = ssub.s32 128, 128
      %20 = vsyncadd [#allocation3], %s19
      %s22 = sshll.u32 [#allocation2], 4
      %s23 = int_to_ptr.vmem [resolvable:$true] %s22
      %25 = dma.hbm_to_vmem [thread:$0]  %s0, 128, %s23, [#allocation3]
    $region5: #{tpu_custom_call.1} parent=1 // pred_fallthru
      _
    // Predicated region
    $region6: #{tpu_custom_call.1} parent=1 // pred_check
      _
    $region7: #{tpu_custom_call.1} parent=1 // pred_check_branch
      %27 = sbr.rel (0) target = $region9
    $region8: #{tpu_custom_call.1} parent=1 // pred_region
      %s29 = ssub.s32 2048, 2048
      %30 = vsyncadd [#allocation6], %s29
      %s31 = sshll.u32 [#allocation5], 4
      %s32 = int_to_ptr.vmem [resolvable:$true] %s31
      %37 = dma.hbm_to_vmem [thread:$0]  %s1, 2048, %s32, [#allocation6], 128, 128, 8
    $region9: #{tpu_custom_call.1} parent=1 // pred_fallthru
      _
    // Predicated region
    $region10: #{tpu_custom_call.1} parent=1 // pred_check
      _
    $region11: #{tpu_custom_call.1} parent=1 // pred_check_branch
      %39 = sbr.rel (0) target = $region13
    $region12: #{tpu_custom_call.1} parent=1 // pred_region
      _
    $region13: #{tpu_custom_call.1} parent=1 // pred_fallthru
      _
    // Predicated region
    $region14: #{tpu_custom_call.1} parent=1 // pred_check
      _
    $region15: #{tpu_custom_call.1} parent=1 // pred_check_branch
      %41 = sbr.rel (0) target = $region17
    $region16: #{tpu_custom_call.1} parent=1 // pred_region
      %s43 = ssub.s32 2048, 2048
      %44 = vsyncadd [#allocation6], %s43
      %s45 = sshll.u32 [#allocation7], 4
      %s46 = int_to_ptr.vmem [resolvable:$true] %s45
      %51 = dma.hbm_to_vmem [thread:$0]  %s3, 2048, %s46, [#allocation6], 128, 128, 8
    $region17: #{tpu_custom_call.1} parent=1 // pred_fallthru
      _
    // Predicated region
    $region18: #{tpu_custom_call.1} parent=1 // pred_check
      _
    $region19: #{tpu_custom_call.1} parent=1 // pred_check_branch
      %53 = sbr.rel (0) target = $region21
    $region20: #{tpu_custom_call.1} parent=1 // pred_region
      _
    $region21: #{tpu_custom_call.1} parent=1 // pred_fallthru
      _
    // Predicated region
    $region22: #{tpu_custom_call.1} parent=1 // pred_check
      _
    $region23: #{tpu_custom_call.1} parent=1 // pred_check_branch
      %55 = sbr.rel (0) target = $region25
    $region24: #{tpu_custom_call.1} parent=1 // pred_region
      %s57 = ssub.s32 2048, 2048
      %58 = vsyncadd [#allocation9], %s57
      %s59 = sshll.u32 [#allocation8], 4
      %s60 = int_to_ptr.vmem [resolvable:$true] %s59
      %65 = dma.hbm_to_vmem [thread:$0]  %s5, 2048, %s60, [#allocation9], 128, 128, 8
    $region25: #{tpu_custom_call.1} parent=1 // pred_fallthru
      _
    // Predicated region
    $region26: #{tpu_custom_call.1} parent=1 // pred_check
      _
    $region27: #{tpu_custom_call.1} parent=1 // pred_check_branch
      %67 = sbr.rel (0) target = $region29
    $region28: #{tpu_custom_call.1} parent=1 // pred_region
      _
    $region29: #{tpu_custom_call.1} parent=1 // pred_fallthru
      _
    // Predicated region
    $region30: #{tpu_custom_call.1} parent=1 // pred_check
      _
    $region31: #{tpu_custom_call.1} parent=1 // pred_check_branch
      %69 = sbr.rel (0) target = $region33
    $region32: #{tpu_custom_call.1} parent=1 // pred_region
      %70 = dma.done [#allocation3], 128
    $region33: #{tpu_custom_call.1} parent=1 // pred_fallthru
      _
    // Predicated region
    $region34: #{tpu_custom_call.1} parent=1 // pred_check
      _
    $region35: #{tpu_custom_call.1} parent=1 // pred_check_branch
      %72 = sbr.rel (0) target = $region37
    $region36: #{tpu_custom_call.1} parent=1 // pred_region
      %73 = dma.done [#allocation6], 2048
    $region37: #{tpu_custom_call.1} parent=1 // pred_fallthru
      _
    // Predicated region
    $region38: #{tpu_custom_call.1} parent=1 // pred_check
      _
    $region39: #{tpu_custom_call.1} parent=1 // pred_check_branch
      %75 = sbr.rel (0) target = $region41
    $region40: #{tpu_custom_call.1} parent=1 // pred_region
      %76 = dma.done [#allocation6], 2048
    $region41: #{tpu_custom_call.1} parent=1 // pred_fallthru
      _
    // Predicated region
    $region42: #{tpu_custom_call.1} parent=1 // pred_check
      _
    $region43: #{tpu_custom_call.1} parent=1 // pred_check_branch
      %78 = sbr.rel (0) target = $region45
    $region44: #{tpu_custom_call.1} parent=1 // pred_region
      %79 = dma.done [#allocation9], 2048
    $region45: #{tpu_custom_call.1} parent=1 // pred_fallthru
      _
    %v80 = vld [vmem:[#allocation2] sm:$0xff]
    %v81 = vld [vmem:[#allocation5] sm:$0xff]
    %v82 = vld [vmem:[#allocation5 + $0x8] sm:$0xff]
    %v83 = vld [vmem:[#allocation5 + $0x10] sm:$0xff]
    %v84 = vld [vmem:[#allocation5 + $0x18] sm:$0xff]
    %v85 = vld [vmem:[#allocation5 + $0x20] sm:$0xff]
    %v86 = vld [vmem:[#allocation5 + $0x28] sm:$0xff]
    %v87 = vld [vmem:[#allocation5 + $0x30] sm:$0xff]
    %v88 = vld [vmem:[#allocation5 + $0x38] sm:$0xff]
    %v89 = vld [vmem:[#allocation5 + $0x40] sm:$0xff]
    %v90 = vld [vmem:[#allocation5 + $0x48] sm:$0xff]
    %v91 = vld [vmem:[#allocation5 + $0x50] sm:$0xff]
    %v92 = vld [vmem:[#allocation5 + $0x58] sm:$0xff]
    %v93 = vld [vmem:[#allocation5 + $0x60] sm:$0xff]
    %v94 = vld [vmem:[#allocation5 + $0x68] sm:$0xff]
    %v95 = vld [vmem:[#allocation5 + $0x70] sm:$0xff]
    %v96 = vld [vmem:[#allocation5 + $0x78] sm:$0xff]
    %v97 = vld [vmem:[%s2] sm:$0x1]
    %v99 = vlaneseq
    %v100 = vshrl.u32 %v99, 7
    %v101 = vsub.s32 0, %v100
    %v102 = vrot.slane %v97, %v101
    %104 = vmatprep.subr.mxu0 0.0
    %v105 = vand.u32 %v96, 4294901760
    %106 = vmatpush1.msra.mxu0 %v105
    %107 = vmatprep.subr.mxu0 0.0
    %v108 = vand.u32 %v95, 4294901760
    %109 = vmatpush1.msra.mxu0 %v108
    %110 = vmatprep.subr.mxu0 0.0
    %v111 = vand.u32 %v94, 4294901760
    %112 = vmatpush1.msra.mxu0 %v111
    %113 = vmatprep.subr.mxu0 0.0
    %v114 = vand.u32 %v93, 4294901760
    %115 = vmatpush1.msra.mxu0 %v114
    %116 = vmatprep.subr.mxu0 0.0
    %v117 = vand.u32 %v92, 4294901760
    %118 = vmatpush1.msra.mxu0 %v117
    %119 = vmatprep.subr.mxu0 0.0
    %v120 = vand.u32 %v91, 4294901760
    %121 = vmatpush1.msra.mxu0 %v120
    %122 = vmatprep.subr.mxu0 0.0
    %v123 = vand.u32 %v90, 4294901760
    %124 = vmatpush1.msra.mxu0 %v123
    %125 = vmatprep.subr.mxu0 0.0
    %v126 = vand.u32 %v89, 4294901760
    %127 = vmatpush1.msra.mxu0 %v126
    %128 = vmatprep.subr.mxu0 0.0
    %v129 = vand.u32 %v88, 4294901760
    %130 = vmatpush1.msra.mxu0 %v129
    %131 = vmatprep.subr.mxu0 0.0
    %v132 = vand.u32 %v87, 4294901760
    %133 = vmatpush1.msra.mxu0 %v132
    %134 = vmatprep.subr.mxu0 0.0
    %v135 = vand.u32 %v86, 4294901760
    %136 = vmatpush1.msra.mxu0 %v135
    %137 = vmatprep.subr.mxu0 0.0
    %v138 = vand.u32 %v85, 4294901760
    %139 = vmatpush1.msra.mxu0 %v138
    %140 = vmatprep.subr.mxu0 0.0
    %v141 = vand.u32 %v84, 4294901760
    %142 = vmatpush1.msra.mxu0 %v141
    %143 = vmatprep.subr.mxu0 0.0
    %v144 = vand.u32 %v83, 4294901760
    %145 = vmatpush1.msra.mxu0 %v144
    %146 = vmatprep.subr.mxu0 0.0
    %v147 = vand.u32 %v82, 4294901760
    %148 = vmatpush1.msra.mxu0 %v147
    %149 = vmatprep.subr.mxu0 0.0
    %v150 = vand.u32 %v81, 4294901760
    %151 = vmatpush1.msra.mxu0 %v150
    %152 = vmatprep.subr.mxu0 0.0
    %153 = vmatpush2.msra.mxu0 0.0
    %154 = vmatprep.subr.mxu0 0.0
    %155 = vmatpush2.msra.mxu0 0.0
    %156 = vmatprep.subr.mxu0 0.0
    %157 = vmatpush2.msra.mxu0 0.0
    %158 = vmatprep.subr.mxu0 0.0
    %159 = vmatpush2.msra.mxu0 0.0
    %160 = vmatprep.subr.mxu0 0.0
    %161 = vmatpush2.msra.mxu0 0.0
    %162 = vmatprep.subr.mxu0 0.0
    %163 = vmatpush2.msra.mxu0 0.0
    %164 = vmatprep.subr.mxu0 0.0
    %165 = vmatpush2.msra.mxu0 0.0
    %166 = vmatprep.subr.mxu0 0.0
    %167 = vmatpush2.msra.mxu0 0.0
    %168 = vmatprep.subr.mxu0 0.0
    %169 = vmatpush2.msra.mxu0 0.0
    %170 = vmatprep.subr.mxu0 0.0
    %171 = vmatpush2.msra.mxu0 0.0
    %172 = vmatprep.subr.mxu0 0.0
    %173 = vmatpush2.msra.mxu0 0.0
    %174 = vmatprep.subr.mxu0 0.0
    %175 = vmatpush2.msra.mxu0 0.0
    %176 = vmatprep.subr.mxu0 0.0
    %177 = vmatpush2.msra.mxu0 0.0
    %178 = vmatprep.subr.mxu0 0.0
    %179 = vmatpush2.msra.mxu0 0.0
    %180 = vmatprep.subr.mxu0 0.0
    %181 = vmatpush2.msra.mxu0 0.0
    %182 = vmatprep.subr.mxu0 0.0
    %183 = vmatpush2.msra.mxu0 0.0
    %184 = vmatprep.mubr.f32.mxu0 0.0
    %v185 = vand.u32 %v80, 4294901760
    %v186 = vsub.f32 %v80, %v185
    %v187 = vand.u32 %v186, 4294901760
    %v188 = vsub.f32 %v186, %v187
    %v189 = vand.u32 %v188, 4294901760
    %190 = vmatmul.mubr.f32.gmra.mxu0 %v189
    %v191 = vpop.f32.mrf.mxu0
    %v192 = vadd.f32 %v102, %v191
    %v193 = vpop.f32.mrf.mxu0
    %194 = vdwg.mxu0
    %195 = vmatprep.subr.mxu0 0.0
    %v196 = vand.u32 %v96, 4294901760
    %v197 = vsub.f32 %v96, %v196
    %v198 = vand.u32 %v197, 4294901760
    %v199 = vsub.f32 %v197, %v198
    %v200 = vand.u32 %v199, 4294901760
    %201 = vmatpush1.msra.mxu0 %v200
    %202 = vmatprep.subr.mxu0 0.0
    %v203 = vand.u32 %v95, 4294901760
    %v204 = vsub.f32 %v95, %v203
    %v205 = vand.u32 %v204, 4294901760
    %v206 = vsub.f32 %v204, %v205
    %v207 = vand.u32 %v206, 4294901760
    %208 = vmatpush1.msra.mxu0 %v207
    %209 = vmatprep.subr.mxu0 0.0
    %v210 = vand.u32 %v94, 4294901760
    %v211 = vsub.f32 %v94, %v210
    %v212 = vand.u32 %v211, 4294901760
    %v213 = vsub.f32 %v211, %v212
    %v214 = vand.u32 %v213, 4294901760
    %215 = vmatpush1.msra.mxu0 %v214
    %216 = vmatprep.subr.mxu0 0.0
    %v217 = vand.u32 %v93, 4294901760
    %v218 = vsub.f32 %v93, %v217
    %v219 = vand.u32 %v218, 4294901760
    %v220 = vsub.f32 %v218, %v219
    %v221 = vand.u32 %v220, 4294901760
    %222 = vmatpush1.msra.mxu0 %v221
    %223 = vmatprep.subr.mxu0 0.0
    %v224 = vand.u32 %v92, 4294901760
    %v225 = vsub.f32 %v92, %v224
    %v226 = vand.u32 %v225, 4294901760
    %v227 = vsub.f32 %v225, %v226
    %v228 = vand.u32 %v227, 4294901760
    %229 = vmatpush1.msra.mxu0 %v228
    %230 = vmatprep.subr.mxu0 0.0
    %v231 = vand.u32 %v91, 4294901760
    %v232 = vsub.f32 %v91, %v231
    %v233 = vand.u32 %v232, 4294901760
    %v234 = vsub.f32 %v232, %v233
    %v235 = vand.u32 %v234, 4294901760
    %236 = vmatpush1.msra.mxu0 %v235
    %237 = vmatprep.subr.mxu0 0.0
    %v238 = vand.u32 %v90, 4294901760
    %v239 = vsub.f32 %v90, %v238
    %v240 = vand.u32 %v239, 4294901760
    %v241 = vsub.f32 %v239, %v240
    %v242 = vand.u32 %v241, 4294901760
    %243 = vmatpush1.msra.mxu0 %v242
    %244 = vmatprep.subr.mxu0 0.0
    %v245 = vand.u32 %v89, 4294901760
    %v246 = vsub.f32 %v89, %v245
    %v247 = vand.u32 %v246, 4294901760
    %v248 = vsub.f32 %v246, %v247
    %v249 = vand.u32 %v248, 4294901760
    %250 = vmatpush1.msra.mxu0 %v249
    %251 = vmatprep.subr.mxu0 0.0
    %v252 = vand.u32 %v88, 4294901760
    %v253 = vsub.f32 %v88, %v252
    %v254 = vand.u32 %v253, 4294901760
    %v255 = vsub.f32 %v253, %v254
    %v256 = vand.u32 %v255, 4294901760
    %257 = vmatpush1.msra.mxu0 %v256
    %258 = vmatprep.subr.mxu0 0.0
    %v259 = vand.u32 %v87, 4294901760
    %v260 = vsub.f32 %v87, %v259
    %v261 = vand.u32 %v260, 4294901760
    %v262 = vsub.f32 %v260, %v261
    %v263 = vand.u32 %v262, 4294901760
    %264 = vmatpush1.msra.mxu0 %v263
    %265 = vmatprep.subr.mxu0 0.0
    %v266 = vand.u32 %v86, 4294901760
    %v267 = vsub.f32 %v86, %v266
    %v268 = vand.u32 %v267, 4294901760
    %v269 = vsub.f32 %v267, %v268
    %v270 = vand.u32 %v269, 4294901760
    %271 = vmatpush1.msra.mxu0 %v270
    %272 = vmatprep.subr.mxu0 0.0
    %v273 = vand.u32 %v85, 4294901760
    %v274 = vsub.f32 %v85, %v273
    %v275 = vand.u32 %v274, 4294901760
    %v276 = vsub.f32 %v274, %v275
    %v277 = vand.u32 %v276, 4294901760
    %278 = vmatpush1.msra.mxu0 %v277
    %279 = vmatprep.subr.mxu0 0.0
    %v280 = vand.u32 %v84, 4294901760
    %v281 = vsub.f32 %v84, %v280
    %v282 = vand.u32 %v281, 4294901760
    %v283 = vsub.f32 %v281, %v282
    %v284 = vand.u32 %v283, 4294901760
    %285 = vmatpush1.msra.mxu0 %v284
    %286 = vmatprep.subr.mxu0 0.0
    %v287 = vand.u32 %v83, 4294901760
    %v288 = vsub.f32 %v83, %v287
    %v289 = vand.u32 %v288, 4294901760
    %v290 = vsub.f32 %v288, %v289
    %v291 = vand.u32 %v290, 4294901760
    %292 = vmatpush1.msra.mxu0 %v291
    %293 = vmatprep.subr.mxu0 0.0
    %v294 = vand.u32 %v82, 4294901760
    %v295 = vsub.f32 %v82, %v294
    %v296 = vand.u32 %v295, 4294901760
    %v297 = vsub.f32 %v295, %v296
    %v298 = vand.u32 %v297, 4294901760
    %299 = vmatpush1.msra.mxu0 %v298
    %300 = vmatprep.subr.mxu0 0.0
    %v301 = vand.u32 %v81, 4294901760
    %v302 = vsub.f32 %v81, %v301
    %v303 = vand.u32 %v302, 4294901760
    %v304 = vsub.f32 %v302, %v303
    %v305 = vand.u32 %v304, 4294901760
    %306 = vmatpush1.msra.mxu0 %v305
    %307 = vmatprep.subr.mxu0 0.0
    %308 = vmatpush2.msra.mxu0 0.0
    %309 = vmatprep.subr.mxu0 0.0
    %310 = vmatpush2.msra.mxu0 0.0
    %311 = vmatprep.subr.mxu0 0.0
    %312 = vmatpush2.msra.mxu0 0.0
    %313 = vmatprep.subr.mxu0 0.0
    %314 = vmatpush2.msra.mxu0 0.0
    %315 = vmatprep.subr.mxu0 0.0
    %316 = vmatpush2.msra.mxu0 0.0
    %317 = vmatprep.subr.mxu0 0.0
    %318 = vmatpush2.msra.mxu0 0.0
    %319 = vmatprep.subr.mxu0 0.0
    %320 = vmatpush2.msra.mxu0 0.0
    %321 = vmatprep.subr.mxu0 0.0
    %322 = vmatpush2.msra.mxu0 0.0
    %323 = vmatprep.subr.mxu0 0.0
    %324 = vmatpush2.msra.mxu0 0.0
    %325 = vmatprep.subr.mxu0 0.0
    %326 = vmatpush2.msra.mxu0 0.0
    %327 = vmatprep.subr.mxu0 0.0
    %328 = vmatpush2.msra.mxu0 0.0
    %329 = vmatprep.subr.mxu0 0.0
    %330 = vmatpush2.msra.mxu0 0.0
    %331 = vmatprep.subr.mxu0 0.0
    %332 = vmatpush2.msra.mxu0 0.0
    %333 = vmatprep.subr.mxu0 0.0
    %334 = vmatpush2.msra.mxu0 0.0
    %335 = vmatprep.subr.mxu0 0.0
    %336 = vmatpush2.msra.mxu0 0.0
    %337 = vmatprep.subr.mxu0 0.0
    %338 = vmatpush2.msra.mxu0 0.0
    %339 = vmatprep.mubr.f32.mxu0 0.0
    %v340 = vand.u32 %v80, 4294901760
    %341 = vmatmul.mubr.f32.gmra.mxu0 %v340
    %v342 = vpop.f32.mrf.mxu0
    %v343 = vadd.f32 %v192, %v342
    %v344 = vpop.f32.mrf.mxu0
    %345 = vdwg.mxu0
    %346 = vmatprep.subr.mxu0 0.0
    %v347 = vand.u32 %v96, 4294901760
    %v348 = vsub.f32 %v96, %v347
    %349 = vmatpush1.msra.mxu0 %v348
    %350 = vmatprep.subr.mxu0 0.0
    %v351 = vand.u32 %v95, 4294901760
    %v352 = vsub.f32 %v95, %v351
    %353 = vmatpush1.msra.mxu0 %v352
    %354 = vmatprep.subr.mxu0 0.0
    %v355 = vand.u32 %v94, 4294901760
    %v356 = vsub.f32 %v94, %v355
    %357 = vmatpush1.msra.mxu0 %v356
    %358 = vmatprep.subr.mxu0 0.0
    %v359 = vand.u32 %v93, 4294901760
    %v360 = vsub.f32 %v93, %v359
    %361 = vmatpush1.msra.mxu0 %v360
    %362 = vmatprep.subr.mxu0 0.0
    %v363 = vand.u32 %v92, 4294901760
    %v364 = vsub.f32 %v92, %v363
    %365 = vmatpush1.msra.mxu0 %v364
    %366 = vmatprep.subr.mxu0 0.0
    %v367 = vand.u32 %v91, 4294901760
    %v368 = vsub.f32 %v91, %v367
    %369 = vmatpush1.msra.mxu0 %v368
    %370 = vmatprep.subr.mxu0 0.0
    %v371 = vand.u32 %v90, 4294901760
    %v372 = vsub.f32 %v90, %v371
    %373 = vmatpush1.msra.mxu0 %v372
    %374 = vmatprep.subr.mxu0 0.0
    %v375 = vand.u32 %v89, 4294901760
    %v376 = vsub.f32 %v89, %v375
    %377 = vmatpush1.msra.mxu0 %v376
    %378 = vmatprep.subr.mxu0 0.0
    %v379 = vand.u32 %v88, 4294901760
    %v380 = vsub.f32 %v88, %v379
    %381 = vmatpush1.msra.mxu0 %v380
    %382 = vmatprep.subr.mxu0 0.0
    %v383 = vand.u32 %v87, 4294901760
    %v384 = vsub.f32 %v87, %v383
    %385 = vmatpush1.msra.mxu0 %v384
    %386 = vmatprep.subr.mxu0 0.0
    %v387 = vand.u32 %v86, 4294901760
    %v388 = vsub.f32 %v86, %v387
    %389 = vmatpush1.msra.mxu0 %v388
    %390 = vmatprep.subr.mxu0 0.0
    %v391 = vand.u32 %v85, 4294901760
    %v392 = vsub.f32 %v85, %v391
    %393 = vmatpush1.msra.mxu0 %v392
    %394 = vmatprep.subr.mxu0 0.0
    %v395 = vand.u32 %v84, 4294901760
    %v396 = vsub.f32 %v84, %v395
    %397 = vmatpush1.msra.mxu0 %v396
    %398 = vmatprep.subr.mxu0 0.0
    %v399 = vand.u32 %v83, 4294901760
    %v400 = vsub.f32 %v83, %v399
    %401 = vmatpush1.msra.mxu0 %v400
    %402 = vmatprep.subr.mxu0 0.0
    %v403 = vand.u32 %v82, 4294901760
    %v404 = vsub.f32 %v82, %v403
    %405 = vmatpush1.msra.mxu0 %v404
    %406 = vmatprep.subr.mxu0 0.0
    %v407 = vand.u32 %v81, 4294901760
    %v408 = vsub.f32 %v81, %v407
    %409 = vmatpush1.msra.mxu0 %v408
    %410 = vmatprep.subr.mxu0 0.0
    %411 = vmatpush2.msra.mxu0 0.0
    %412 = vmatprep.subr.mxu0 0.0
    %413 = vmatpush2.msra.mxu0 0.0
    %414 = vmatprep.subr.mxu0 0.0
    %415 = vmatpush2.msra.mxu0 0.0
    %416 = vmatprep.subr.mxu0 0.0
    %417 = vmatpush2.msra.mxu0 0.0
    %418 = vmatprep.subr.mxu0 0.0
    %419 = vmatpush2.msra.mxu0 0.0
    %420 = vmatprep.subr.mxu0 0.0
    %421 = vmatpush2.msra.mxu0 0.0
    %422 = vmatprep.subr.mxu0 0.0
    %423 = vmatpush2.msra.mxu0 0.0
    %424 = vmatprep.subr.mxu0 0.0
    %425 = vmatpush2.msra.mxu0 0.0
    %426 = vmatprep.subr.mxu0 0.0
    %427 = vmatpush2.msra.mxu0 0.0
    %428 = vmatprep.subr.mxu0 0.0
    %429 = vmatpush2.msra.mxu0 0.0
    %430 = vmatprep.subr.mxu0 0.0
    %431 = vmatpush2.msra.mxu0 0.0
    %432 = vmatprep.subr.mxu0 0.0
    %433 = vmatpush2.msra.mxu0 0.0
    %434 = vmatprep.subr.mxu0 0.0
    %435 = vmatpush2.msra.mxu0 0.0
    %436 = vmatprep.subr.mxu0 0.0
    %437 = vmatpush2.msra.mxu0 0.0
    %438 = vmatprep.subr.mxu0 0.0
    %439 = vmatpush2.msra.mxu0 0.0
    %440 = vmatprep.subr.mxu0 0.0
    %441 = vmatpush2.msra.mxu0 0.0
    %442 = vmatprep.mubr.f32.mxu0 0.0
    %v443 = vand.u32 %v80, 4294901760
    %v444 = vsub.f32 %v80, %v443
    %445 = vmatmul.mubr.f32.gmra.mxu0 %v444
    %v446 = vpop.f32.mrf.mxu0
    %v447 = vadd.f32 %v343, %v446
    %v448 = vpop.f32.mrf.mxu0
    %449 = vdwg.mxu0
    %450 = vmatprep.subr.mxu0 0.0
    %v451 = vand.u32 %v96, 4294901760
    %452 = vmatpush1.msra.mxu0 %v451
    %453 = vmatprep.subr.mxu0 0.0
    %v454 = vand.u32 %v95, 4294901760
    %455 = vmatpush1.msra.mxu0 %v454
    %456 = vmatprep.subr.mxu0 0.0
    %v457 = vand.u32 %v94, 4294901760
    %458 = vmatpush1.msra.mxu0 %v457
    %459 = vmatprep.subr.mxu0 0.0
    %v460 = vand.u32 %v93, 4294901760
    %461 = vmatpush1.msra.mxu0 %v460
    %462 = vmatprep.subr.mxu0 0.0
    %v463 = vand.u32 %v92, 4294901760
    %464 = vmatpush1.msra.mxu0 %v463
    %465 = vmatprep.subr.mxu0 0.0
    %v466 = vand.u32 %v91, 4294901760
    %467 = vmatpush1.msra.mxu0 %v466
    %468 = vmatprep.subr.mxu0 0.0
    %v469 = vand.u32 %v90, 4294901760
    %470 = vmatpush1.msra.mxu0 %v469
    %471 = vmatprep.subr.mxu0 0.0
    %v472 = vand.u32 %v89, 4294901760
    %473 = vmatpush1.msra.mxu0 %v472
    %474 = vmatprep.subr.mxu0 0.0
    %v475 = vand.u32 %v88, 4294901760
    %476 = vmatpush1.msra.mxu0 %v475
    %477 = vmatprep.subr.mxu0 0.0
    %v478 = vand.u32 %v87, 4294901760
    %479 = vmatpush1.msra.mxu0 %v478
    %480 = vmatprep.subr.mxu0 0.0
    %v481 = vand.u32 %v86, 4294901760
    %482 = vmatpush1.msra.mxu0 %v481
    %483 = vmatprep.subr.mxu0 0.0
    %v484 = vand.u32 %v85, 4294901760
    %485 = vmatpush1.msra.mxu0 %v484
    %486 = vmatprep.subr.mxu0 0.0
    %v487 = vand.u32 %v84, 4294901760
    %488 = vmatpush1.msra.mxu0 %v487
    %489 = vmatprep.subr.mxu0 0.0
    %v490 = vand.u32 %v83, 4294901760
    %491 = vmatpush1.msra.mxu0 %v490
    %492 = vmatprep.subr.mxu0 0.0
    %v493 = vand.u32 %v82, 4294901760
    %494 = vmatpush1.msra.mxu0 %v493
    %495 = vmatprep.subr.mxu0 0.0
    %v496 = vand.u32 %v81, 4294901760
    %497 = vmatpush1.msra.mxu0 %v496
    %498 = vmatprep.subr.mxu0 0.0
    %499 = vmatpush2.msra.mxu0 0.0
    %500 = vmatprep.subr.mxu0 0.0
    %501 = vmatpush2.msra.mxu0 0.0
    %502 = vmatprep.subr.mxu0 0.0
    %503 = vmatpush2.msra.mxu0 0.0
    %504 = vmatprep.subr.mxu0 0.0
    %505 = vmatpush2.msra.mxu0 0.0
    %506 = vmatprep.subr.mxu0 0.0
    %507 = vmatpush2.msra.mxu0 0.0
    %508 = vmatprep.subr.mxu0 0.0
    %509 = vmatpush2.msra.mxu0 0.0
    %510 = vmatprep.subr.mxu0 0.0
    %511 = vmatpush2.msra.mxu0 0.0
    %512 = vmatprep.subr.mxu0 0.0
    %513 = vmatpush2.msra.mxu0 0.0
    %514 = vmatprep.subr.mxu0 0.0
    %515 = vmatpush2.msra.mxu0 0.0
    %516 = vmatprep.subr.mxu0 0.0
    %517 = vmatpush2.msra.mxu0 0.0
    %518 = vmatprep.subr.mxu0 0.0
    %519 = vmatpush2.msra.mxu0 0.0
    %520 = vmatprep.subr.mxu0 0.0
    %521 = vmatpush2.msra.mxu0 0.0
    %522 = vmatprep.subr.mxu0 0.0
    %523 = vmatpush2.msra.mxu0 0.0
    %524 = vmatprep.subr.mxu0 0.0
    %525 = vmatpush2.msra.mxu0 0.0
    %526 = vmatprep.subr.mxu0 0.0
    %527 = vmatpush2.msra.mxu0 0.0
    %528 = vmatprep.subr.mxu0 0.0
    %529 = vmatpush2.msra.mxu0 0.0
    %530 = vmatprep.mubr.f32.mxu0 0.0
    %v531 = vand.u32 %v80, 4294901760
    %v532 = vsub.f32 %v80, %v531
    %v533 = vand.u32 %v532, 4294901760
    %534 = vmatmul.mubr.f32.gmra.mxu0 %v533
    %v535 = vpop.f32.mrf.mxu0
    %v536 = vadd.f32 %v447, %v535
    %v537 = vpop.f32.mrf.mxu0
    %538 = vdwg.mxu0
    %539 = vmatprep.subr.mxu0 0.0
    %v540 = vand.u32 %v96, 4294901760
    %v541 = vsub.f32 %v96, %v540
    %v542 = vand.u32 %v541, 4294901760
    %543 = vmatpush1.msra.mxu0 %v542
    %544 = vmatprep.subr.mxu0 0.0
    %v545 = vand.u32 %v95, 4294901760
    %v546 = vsub.f32 %v95, %v545
    %v547 = vand.u32 %v546, 4294901760
    %548 = vmatpush1.msra.mxu0 %v547
    %549 = vmatprep.subr.mxu0 0.0
    %v550 = vand.u32 %v94, 4294901760
    %v551 = vsub.f32 %v94, %v550
    %v552 = vand.u32 %v551, 4294901760
    %553 = vmatpush1.msra.mxu0 %v552
    %554 = vmatprep.subr.mxu0 0.0
    %v555 = vand.u32 %v93, 4294901760
    %v556 = vsub.f32 %v93, %v555
    %v557 = vand.u32 %v556, 4294901760
    %558 = vmatpush1.msra.mxu0 %v557
    %559 = vmatprep.subr.mxu0 0.0
    %v560 = vand.u32 %v92, 4294901760
    %v561 = vsub.f32 %v92, %v560
    %v562 = vand.u32 %v561, 4294901760
    %563 = vmatpush1.msra.mxu0 %v562
    %564 = vmatprep.subr.mxu0 0.0
    %v565 = vand.u32 %v91, 4294901760
    %v566 = vsub.f32 %v91, %v565
    %v567 = vand.u32 %v566, 4294901760
    %568 = vmatpush1.msra.mxu0 %v567
    %569 = vmatprep.subr.mxu0 0.0
    %v570 = vand.u32 %v90, 4294901760
    %v571 = vsub.f32 %v90, %v570
    %v572 = vand.u32 %v571, 4294901760
    %573 = vmatpush1.msra.mxu0 %v572
    %574 = vmatprep.subr.mxu0 0.0
    %v575 = vand.u32 %v89, 4294901760
    %v576 = vsub.f32 %v89, %v575
    %v577 = vand.u32 %v576, 4294901760
    %578 = vmatpush1.msra.mxu0 %v577
    %579 = vmatprep.subr.mxu0 0.0
    %v580 = vand.u32 %v88, 4294901760
    %v581 = vsub.f32 %v88, %v580
    %v582 = vand.u32 %v581, 4294901760
    %583 = vmatpush1.msra.mxu0 %v582
    %584 = vmatprep.subr.mxu0 0.0
    %v585 = vand.u32 %v87, 4294901760
    %v586 = vsub.f32 %v87, %v585
    %v587 = vand.u32 %v586, 4294901760
    %588 = vmatpush1.msra.mxu0 %v587
    %589 = vmatprep.subr.mxu0 0.0
    %v590 = vand.u32 %v86, 4294901760
    %v591 = vsub.f32 %v86, %v590
    %v592 = vand.u32 %v591, 4294901760
    %593 = vmatpush1.msra.mxu0 %v592
    %594 = vmatprep.subr.mxu0 0.0
    %v595 = vand.u32 %v85, 4294901760
    %v596 = vsub.f32 %v85, %v595
    %v597 = vand.u32 %v596, 4294901760
    %598 = vmatpush1.msra.mxu0 %v597
    %599 = vmatprep.subr.mxu0 0.0
    %v600 = vand.u32 %v84, 4294901760
    %v601 = vsub.f32 %v84, %v600
    %v602 = vand.u32 %v601, 4294901760
    %603 = vmatpush1.msra.mxu0 %v602
    %604 = vmatprep.subr.mxu0 0.0
    %v605 = vand.u32 %v83, 4294901760
    %v606 = vsub.f32 %v83, %v605
    %v607 = vand.u32 %v606, 4294901760
    %608 = vmatpush1.msra.mxu0 %v607
    %609 = vmatprep.subr.mxu0 0.0
    %v610 = vand.u32 %v82, 4294901760
    %v611 = vsub.f32 %v82, %v610
    %v612 = vand.u32 %v611, 4294901760
    %613 = vmatpush1.msra.mxu0 %v612
    %614 = vmatprep.subr.mxu0 0.0
    %v615 = vand.u32 %v81, 4294901760
    %v616 = vsub.f32 %v81, %v615
    %v617 = vand.u32 %v616, 4294901760
    %618 = vmatpush1.msra.mxu0 %v617
    %619 = vmatprep.subr.mxu0 0.0
    %620 = vmatpush2.msra.mxu0 0.0
    %621 = vmatprep.subr.mxu0 0.0
    %622 = vmatpush2.msra.mxu0 0.0
    %623 = vmatprep.subr.mxu0 0.0
    %624 = vmatpush2.msra.mxu0 0.0
    %625 = vmatprep.subr.mxu0 0.0
    %626 = vmatpush2.msra.mxu0 0.0
    %627 = vmatprep.subr.mxu0 0.0
    %628 = vmatpush2.msra.mxu0 0.0
    %629 = vmatprep.subr.mxu0 0.0
    %630 = vmatpush2.msra.mxu0 0.0
    %631 = vmatprep.subr.mxu0 0.0
    %632 = vmatpush2.msra.mxu0 0.0
    %633 = vmatprep.subr.mxu0 0.0
    %634 = vmatpush2.msra.mxu0 0.0
    %635 = vmatprep.subr.mxu0 0.0
    %636 = vmatpush2.msra.mxu0 0.0
    %637 = vmatprep.subr.mxu0 0.0
    %638 = vmatpush2.msra.mxu0 0.0
    %639 = vmatprep.subr.mxu0 0.0
    %640 = vmatpush2.msra.mxu0 0.0
    %641 = vmatprep.subr.mxu0 0.0
    %642 = vmatpush2.msra.mxu0 0.0
    %643 = vmatprep.subr.mxu0 0.0
    %644 = vmatpush2.msra.mxu0 0.0
    %645 = vmatprep.subr.mxu0 0.0
    %646 = vmatpush2.msra.mxu0 0.0
    %647 = vmatprep.subr.mxu0 0.0
    %648 = vmatpush2.msra.mxu0 0.0
    %649 = vmatprep.subr.mxu0 0.0
    %650 = vmatpush2.msra.mxu0 0.0
    %651 = vmatprep.mubr.f32.mxu0 0.0
    %v652 = vand.u32 %v80, 4294901760
    %653 = vmatmul.mubr.f32.gmra.mxu0 %v652
    %v654 = vpop.f32.mrf.mxu0
    %v655 = vadd.f32 %v536, %v654
    %v656 = vpop.f32.mrf.mxu0
    %657 = vdwg.mxu0
    %658 = vmatprep.subr.mxu0 0.0
    %v659 = vand.u32 %v96, 4294901760
    %660 = vmatpush1.msra.mxu0 %v659
    %661 = vmatprep.subr.mxu0 0.0
    %v662 = vand.u32 %v95, 4294901760
    %663 = vmatpush1.msra.mxu0 %v662
    %664 = vmatprep.subr.mxu0 0.0
    %v665 = vand.u32 %v94, 4294901760
    %666 = vmatpush1.msra.mxu0 %v665
    %667 = vmatprep.subr.mxu0 0.0
    %v668 = vand.u32 %v93, 4294901760
    %669 = vmatpush1.msra.mxu0 %v668
    %670 = vmatprep.subr.mxu0 0.0
    %v671 = vand.u32 %v92, 4294901760
    %672 = vmatpush1.msra.mxu0 %v671
    %673 = vmatprep.subr.mxu0 0.0
    %v674 = vand.u32 %v91, 4294901760
    %675 = vmatpush1.msra.mxu0 %v674
    %676 = vmatprep.subr.mxu0 0.0
    %v677 = vand.u32 %v90, 4294901760
    %678 = vmatpush1.msra.mxu0 %v677
    %679 = vmatprep.subr.mxu0 0.0
    %v680 = vand.u32 %v89, 4294901760
    %681 = vmatpush1.msra.mxu0 %v680
    %682 = vmatprep.subr.mxu0 0.0
    %v683 = vand.u32 %v88, 4294901760
    %684 = vmatpush1.msra.mxu0 %v683
    %685 = vmatprep.subr.mxu0 0.0
    %v686 = vand.u32 %v87, 4294901760
    %687 = vmatpush1.msra.mxu0 %v686
    %688 = vmatprep.subr.mxu0 0.0
    %v689 = vand.u32 %v86, 4294901760
    %690 = vmatpush1.msra.mxu0 %v689
    %691 = vmatprep.subr.mxu0 0.0
    %v692 = vand.u32 %v85, 4294901760
    %693 = vmatpush1.msra.mxu0 %v692
    %694 = vmatprep.subr.mxu0 0.0
    %v695 = vand.u32 %v84, 4294901760
    %696 = vmatpush1.msra.mxu0 %v695
    %697 = vmatprep.subr.mxu0 0.0
    %v698 = vand.u32 %v83, 4294901760
    %699 = vmatpush1.msra.mxu0 %v698
    %700 = vmatprep.subr.mxu0 0.0
    %v701 = vand.u32 %v82, 4294901760
    %702 = vmatpush1.msra.mxu0 %v701
    %703 = vmatprep.subr.mxu0 0.0
    %v704 = vand.u32 %v81, 4294901760
    %705 = vmatpush1.msra.mxu0 %v704
    %706 = vmatprep.subr.mxu0 0.0
    %707 = vmatpush2.msra.mxu0 0.0
    %708 = vmatprep.subr.mxu0 0.0
    %709 = vmatpush2.msra.mxu0 0.0
    %710 = vmatprep.subr.mxu0 0.0
    %711 = vmatpush2.msra.mxu0 0.0
    %712 = vmatprep.subr.mxu0 0.0
    %713 = vmatpush2.msra.mxu0 0.0
    %714 = vmatprep.subr.mxu0 0.0
    %715 = vmatpush2.msra.mxu0 0.0
    %716 = vmatprep.subr.mxu0 0.0
    %717 = vmatpush2.msra.mxu0 0.0
    %718 = vmatprep.subr.mxu0 0.0
    %719 = vmatpush2.msra.mxu0 0.0
    %720 = vmatprep.subr.mxu0 0.0
    %721 = vmatpush2.msra.mxu0 0.0
    %722 = vmatprep.subr.mxu0 0.0
    %723 = vmatpush2.msra.mxu0 0.0
    %724 = vmatprep.subr.mxu0 0.0
    %725 = vmatpush2.msra.mxu0 0.0
    %726 = vmatprep.subr.mxu0 0.0
    %727 = vmatpush2.msra.mxu0 0.0
    %728 = vmatprep.subr.mxu0 0.0
    %729 = vmatpush2.msra.mxu0 0.0
    %730 = vmatprep.subr.mxu0 0.0
    %731 = vmatpush2.msra.mxu0 0.0
    %732 = vmatprep.subr.mxu0 0.0
    %733 = vmatpush2.msra.mxu0 0.0
    %734 = vmatprep.subr.mxu0 0.0
    %735 = vmatpush2.msra.mxu0 0.0
    %736 = vmatprep.subr.mxu0 0.0
    %737 = vmatpush2.msra.mxu0 0.0
    %738 = vmatprep.mubr.f32.mxu0 0.0
    %v739 = vand.u32 %v80, 4294901760
    %740 = vmatmul.mubr.f32.gmra.mxu0 %v739
    %v741 = vpop.f32.mrf.mxu0
    %v742 = vadd.f32 %v655, %v741
    %v743 = vpop.f32.mrf.mxu0
    %744 = vdwg.mxu0
    %v745 = vxor.u32 %v742, 2147483648
    %v746 = vmul.f32 %v745, 1.442695
    %v747 = vpow.pop %v746
    %v748 = vadd.f32 %v747, 1.0
    %v749 = vrcp.pop %v748
    %v750 = vmul.f32 1.0, %v749
    %v751 = vld [vmem:[#allocation7] sm:$0xff]
    %v752 = vld [vmem:[#allocation7 + $0x8] sm:$0xff]
    %v753 = vld [vmem:[#allocation7 + $0x10] sm:$0xff]
    %v754 = vld [vmem:[#allocation7 + $0x18] sm:$0xff]
    %v755 = vld [vmem:[#allocation7 + $0x20] sm:$0xff]
    %v756 = vld [vmem:[#allocation7 + $0x28] sm:$0xff]
    %v757 = vld [vmem:[#allocation7 + $0x30] sm:$0xff]
    %v758 = vld [vmem:[#allocation7 + $0x38] sm:$0xff]
    %v759 = vld [vmem:[#allocation7 + $0x40] sm:$0xff]
    %v760 = vld [vmem:[#allocation7 + $0x48] sm:$0xff]
    %v761 = vld [vmem:[#allocation7 + $0x50] sm:$0xff]
    %v762 = vld [vmem:[#allocation7 + $0x58] sm:$0xff]
    %v763 = vld [vmem:[#allocation7 + $0x60] sm:$0xff]
    %v764 = vld [vmem:[#allocation7 + $0x68] sm:$0xff]
    %v765 = vld [vmem:[#allocation7 + $0x70] sm:$0xff]
    %v766 = vld [vmem:[#allocation7 + $0x78] sm:$0xff]
    %v767 = vld [vmem:[%s4] sm:$0x1]
    %v769 = vlaneseq
    %v770 = vshrl.u32 %v769, 7
    %v771 = vsub.s32 0, %v770
    %v772 = vrot.slane %v767, %v771
    %774 = vmatprep.subr.mxu0 0.0
    %v775 = vand.u32 %v766, 4294901760
    %776 = vmatpush1.msra.mxu0 %v775
    %777 = vmatprep.subr.mxu0 0.0
    %v778 = vand.u32 %v765, 4294901760
    %779 = vmatpush1.msra.mxu0 %v778
    %780 = vmatprep.subr.mxu0 0.0
    %v781 = vand.u32 %v764, 4294901760
    %782 = vmatpush1.msra.mxu0 %v781
    %783 = vmatprep.subr.mxu0 0.0
    %v784 = vand.u32 %v763, 4294901760
    %785 = vmatpush1.msra.mxu0 %v784
    %786 = vmatprep.subr.mxu0 0.0
    %v787 = vand.u32 %v762, 4294901760
    %788 = vmatpush1.msra.mxu0 %v787
    %789 = vmatprep.subr.mxu0 0.0
    %v790 = vand.u32 %v761, 4294901760
    %791 = vmatpush1.msra.mxu0 %v790
    %792 = vmatprep.subr.mxu0 0.0
    %v793 = vand.u32 %v760, 4294901760
    %794 = vmatpush1.msra.mxu0 %v793
    %795 = vmatprep.subr.mxu0 0.0
    %v796 = vand.u32 %v759, 4294901760
    %797 = vmatpush1.msra.mxu0 %v796
    %798 = vmatprep.subr.mxu0 0.0
    %v799 = vand.u32 %v758, 4294901760
    %800 = vmatpush1.msra.mxu0 %v799
    %801 = vmatprep.subr.mxu0 0.0
    %v802 = vand.u32 %v757, 4294901760
    %803 = vmatpush1.msra.mxu0 %v802
    %804 = vmatprep.subr.mxu0 0.0
    %v805 = vand.u32 %v756, 4294901760
    %806 = vmatpush1.msra.mxu0 %v805
    %807 = vmatprep.subr.mxu0 0.0
    %v808 = vand.u32 %v755, 4294901760
    %809 = vmatpush1.msra.mxu0 %v808
    %810 = vmatprep.subr.mxu0 0.0
    %v811 = vand.u32 %v754, 4294901760
    %812 = vmatpush1.msra.mxu0 %v811
    %813 = vmatprep.subr.mxu0 0.0
    %v814 = vand.u32 %v753, 4294901760
    %815 = vmatpush1.msra.mxu0 %v814
    %816 = vmatprep.subr.mxu0 0.0
    %v817 = vand.u32 %v752, 4294901760
    %818 = vmatpush1.msra.mxu0 %v817
    %819 = vmatprep.subr.mxu0 0.0
    %v820 = vand.u32 %v751, 4294901760
    %821 = vmatpush1.msra.mxu0 %v820
    %822 = vmatprep.subr.mxu0 0.0
    %823 = vmatpush2.msra.mxu0 0.0
    %824 = vmatprep.subr.mxu0 0.0
    %825 = vmatpush2.msra.mxu0 0.0
    %826 = vmatprep.subr.mxu0 0.0
    %827 = vmatpush2.msra.mxu0 0.0
    %828 = vmatprep.subr.mxu0 0.0
    %829 = vmatpush2.msra.mxu0 0.0
    %830 = vmatprep.subr.mxu0 0.0
    %831 = vmatpush2.msra.mxu0 0.0
    %832 = vmatprep.subr.mxu0 0.0
    %833 = vmatpush2.msra.mxu0 0.0
    %834 = vmatprep.subr.mxu0 0.0
    %835 = vmatpush2.msra.mxu0 0.0
    %836 = vmatprep.subr.mxu0 0.0
    %837 = vmatpush2.msra.mxu0 0.0
    %838 = vmatprep.subr.mxu0 0.0
    %839 = vmatpush2.msra.mxu0 0.0
    %840 = vmatprep.subr.mxu0 0.0
    %841 = vmatpush2.msra.mxu0 0.0
    %842 = vmatprep.subr.mxu0 0.0
    %843 = vmatpush2.msra.mxu0 0.0
    %844 = vmatprep.subr.mxu0 0.0
    %845 = vmatpush2.msra.mxu0 0.0
    %846 = vmatprep.subr.mxu0 0.0
    %847 = vmatpush2.msra.mxu0 0.0
    %848 = vmatprep.subr.mxu0 0.0
    %849 = vmatpush2.msra.mxu0 0.0
    %850 = vmatprep.subr.mxu0 0.0
    %851 = vmatpush2.msra.mxu0 0.0
    %852 = vmatprep.subr.mxu0 0.0
    %853 = vmatpush2.msra.mxu0 0.0
    %854 = vmatprep.mubr.f32.mxu0 0.0
    %v855 = vand.u32 %v750, 4294901760
    %v856 = vsub.f32 %v750, %v855
    %v857 = vand.u32 %v856, 4294901760
    %v858 = vsub.f32 %v856, %v857
    %v859 = vand.u32 %v858, 4294901760
    %860 = vmatmul.mubr.f32.gmra.mxu0 %v859
    %v861 = vpop.f32.mrf.mxu0
    %v862 = vadd.f32 %v772, %v861
    %v863 = vpop.f32.mrf.mxu0
    %864 = vdwg.mxu0
    %865 = vmatprep.subr.mxu0 0.0
    %v866 = vand.u32 %v766, 4294901760
    %v867 = vsub.f32 %v766, %v866
    %v868 = vand.u32 %v867, 4294901760
    %v869 = vsub.f32 %v867, %v868
    %v870 = vand.u32 %v869, 4294901760
    %871 = vmatpush1.msra.mxu0 %v870
    %872 = vmatprep.subr.mxu0 0.0
    %v873 = vand.u32 %v765, 4294901760
    %v874 = vsub.f32 %v765, %v873
    %v875 = vand.u32 %v874, 4294901760
    %v876 = vsub.f32 %v874, %v875
    %v877 = vand.u32 %v876, 4294901760
    %878 = vmatpush1.msra.mxu0 %v877
    %879 = vmatprep.subr.mxu0 0.0
    %v880 = vand.u32 %v764, 4294901760
    %v881 = vsub.f32 %v764, %v880
    %v882 = vand.u32 %v881, 4294901760
    %v883 = vsub.f32 %v881, %v882
    %v884 = vand.u32 %v883, 4294901760
    %885 = vmatpush1.msra.mxu0 %v884
    %886 = vmatprep.subr.mxu0 0.0
    %v887 = vand.u32 %v763, 4294901760
    %v888 = vsub.f32 %v763, %v887
    %v889 = vand.u32 %v888, 4294901760
    %v890 = vsub.f32 %v888, %v889
    %v891 = vand.u32 %v890, 4294901760
    %892 = vmatpush1.msra.mxu0 %v891
    %893 = vmatprep.subr.mxu0 0.0
    %v894 = vand.u32 %v762, 4294901760
    %v895 = vsub.f32 %v762, %v894
    %v896 = vand.u32 %v895, 4294901760
    %v897 = vsub.f32 %v895, %v896
    %v898 = vand.u32 %v897, 4294901760
    %899 = vmatpush1.msra.mxu0 %v898
    %900 = vmatprep.subr.mxu0 0.0
    %v901 = vand.u32 %v761, 4294901760
    %v902 = vsub.f32 %v761, %v901
    %v903 = vand.u32 %v902, 4294901760
    %v904 = vsub.f32 %v902, %v903
    %v905 = vand.u32 %v904, 4294901760
    %906 = vmatpush1.msra.mxu0 %v905
    %907 = vmatprep.subr.mxu0 0.0
    %v908 = vand.u32 %v760, 4294901760
    %v909 = vsub.f32 %v760, %v908
    %v910 = vand.u32 %v909, 4294901760
    %v911 = vsub.f32 %v909, %v910
    %v912 = vand.u32 %v911, 4294901760
    %913 = vmatpush1.msra.mxu0 %v912
    %914 = vmatprep.subr.mxu0 0.0
    %v915 = vand.u32 %v759, 4294901760
    %v916 = vsub.f32 %v759, %v915
    %v917 = vand.u32 %v916, 4294901760
    %v918 = vsub.f32 %v916, %v917
    %v919 = vand.u32 %v918, 4294901760
    %920 = vmatpush1.msra.mxu0 %v919
    %921 = vmatprep.subr.mxu0 0.0
    %v922 = vand.u32 %v758, 4294901760
    %v923 = vsub.f32 %v758, %v922
    %v924 = vand.u32 %v923, 4294901760
    %v925 = vsub.f32 %v923, %v924
    %v926 = vand.u32 %v925, 4294901760
    %927 = vmatpush1.msra.mxu0 %v926
    %928 = vmatprep.subr.mxu0 0.0
    %v929 = vand.u32 %v757, 4294901760
    %v930 = vsub.f32 %v757, %v929
    %v931 = vand.u32 %v930, 4294901760
    %v932 = vsub.f32 %v930, %v931
    %v933 = vand.u32 %v932, 4294901760
    %934 = vmatpush1.msra.mxu0 %v933
    %935 = vmatprep.subr.mxu0 0.0
    %v936 = vand.u32 %v756, 4294901760
    %v937 = vsub.f32 %v756, %v936
    %v938 = vand.u32 %v937, 4294901760
    %v939 = vsub.f32 %v937, %v938
    %v940 = vand.u32 %v939, 4294901760
    %941 = vmatpush1.msra.mxu0 %v940
    %942 = vmatprep.subr.mxu0 0.0
    %v943 = vand.u32 %v755, 4294901760
    %v944 = vsub.f32 %v755, %v943
    %v945 = vand.u32 %v944, 4294901760
    %v946 = vsub.f32 %v944, %v945
    %v947 = vand.u32 %v946, 4294901760
    %948 = vmatpush1.msra.mxu0 %v947
    %949 = vmatprep.subr.mxu0 0.0
    %v950 = vand.u32 %v754, 4294901760
    %v951 = vsub.f32 %v754, %v950
    %v952 = vand.u32 %v951, 4294901760
    %v953 = vsub.f32 %v951, %v952
    %v954 = vand.u32 %v953, 4294901760
    %955 = vmatpush1.msra.mxu0 %v954
    %956 = vmatprep.subr.mxu0 0.0
    %v957 = vand.u32 %v753, 4294901760
    %v958 = vsub.f32 %v753, %v957
    %v959 = vand.u32 %v958, 4294901760
    %v960 = vsub.f32 %v958, %v959
    %v961 = vand.u32 %v960, 4294901760
    %962 = vmatpush1.msra.mxu0 %v961
    %963 = vmatprep.subr.mxu0 0.0
    %v964 = vand.u32 %v752, 4294901760
    %v965 = vsub.f32 %v752, %v964
    %v966 = vand.u32 %v965, 4294901760
    %v967 = vsub.f32 %v965, %v966
    %v968 = vand.u32 %v967, 4294901760
    %969 = vmatpush1.msra.mxu0 %v968
    %970 = vmatprep.subr.mxu0 0.0
    %v971 = vand.u32 %v751, 4294901760
    %v972 = vsub.f32 %v751, %v971
    %v973 = vand.u32 %v972, 4294901760
    %v974 = vsub.f32 %v972, %v973
    %v975 = vand.u32 %v974, 4294901760
    %976 = vmatpush1.msra.mxu0 %v975
    %977 = vmatprep.subr.mxu0 0.0
    %978 = vmatpush2.msra.mxu0 0.0
    %979 = vmatprep.subr.mxu0 0.0
    %980 = vmatpush2.msra.mxu0 0.0
    %981 = vmatprep.subr.mxu0 0.0
    %982 = vmatpush2.msra.mxu0 0.0
    %983 = vmatprep.subr.mxu0 0.0
    %984 = vmatpush2.msra.mxu0 0.0
    %985 = vmatprep.subr.mxu0 0.0
    %986 = vmatpush2.msra.mxu0 0.0
    %987 = vmatprep.subr.mxu0 0.0
    %988 = vmatpush2.msra.mxu0 0.0
    %989 = vmatprep.subr.mxu0 0.0
    %990 = vmatpush2.msra.mxu0 0.0
    %991 = vmatprep.subr.mxu0 0.0
    %992 = vmatpush2.msra.mxu0 0.0
    %993 = vmatprep.subr.mxu0 0.0
    %994 = vmatpush2.msra.mxu0 0.0
    %995 = vmatprep.subr.mxu0 0.0
    %996 = vmatpush2.msra.mxu0 0.0
    %997 = vmatprep.subr.mxu0 0.0
    %998 = vmatpush2.msra.mxu0 0.0
    %999 = vmatprep.subr.mxu0 0.0
    %1000 = vmatpush2.msra.mxu0 0.0
    %1001 = vmatprep.subr.mxu0 0.0
    %1002 = vmatpush2.msra.mxu0 0.0
    %1003 = vmatprep.subr.mxu0 0.0
    %1004 = vmatpush2.msra.mxu0 0.0
    %1005 = vmatprep.subr.mxu0 0.0
    %1006 = vmatpush2.msra.mxu0 0.0
    %1007 = vmatprep.subr.mxu0 0.0
    %1008 = vmatpush2.msra.mxu0 0.0
    %1009 = vmatprep.mubr.f32.mxu0 0.0
    %v1010 = vand.u32 %v750, 4294901760
    %1011 = vmatmul.mubr.f32.gmra.mxu0 %v1010
    %v1012 = vpop.f32.mrf.mxu0
    %v1013 = vadd.f32 %v862, %v1012
    %v1014 = vpop.f32.mrf.mxu0
    %1015 = vdwg.mxu0
    %1016 = vmatprep.subr.mxu0 0.0
    %v1017 = vand.u32 %v766, 4294901760
    %v1018 = vsub.f32 %v766, %v1017
    %1019 = vmatpush1.msra.mxu0 %v1018
    %1020 = vmatprep.subr.mxu0 0.0
    %v1021 = vand.u32 %v765, 4294901760
    %v1022 = vsub.f32 %v765, %v1021
    %1023 = vmatpush1.msra.mxu0 %v1022
    %1024 = vmatprep.subr.mxu0 0.0
    %v1025 = vand.u32 %v764, 4294901760
    %v1026 = vsub.f32 %v764, %v1025
    %1027 = vmatpush1.msra.mxu0 %v1026
    %1028 = vmatprep.subr.mxu0 0.0
    %v1029 = vand.u32 %v763, 4294901760
    %v1030 = vsub.f32 %v763, %v1029
    %1031 = vmatpush1.msra.mxu0 %v1030
    %1032 = vmatprep.subr.mxu0 0.0
    %v1033 = vand.u32 %v762, 4294901760
    %v1034 = vsub.f32 %v762, %v1033
    %1035 = vmatpush1.msra.mxu0 %v1034
    %1036 = vmatprep.subr.mxu0 0.0
    %v1037 = vand.u32 %v761, 4294901760
    %v1038 = vsub.f32 %v761, %v1037
    %1039 = vmatpush1.msra.mxu0 %v1038
    %1040 = vmatprep.subr.mxu0 0.0
    %v1041 = vand.u32 %v760, 4294901760
    %v1042 = vsub.f32 %v760, %v1041
    %1043 = vmatpush1.msra.mxu0 %v1042
    %1044 = vmatprep.subr.mxu0 0.0
    %v1045 = vand.u32 %v759, 4294901760
    %v1046 = vsub.f32 %v759, %v1045
    %1047 = vmatpush1.msra.mxu0 %v1046
    %1048 = vmatprep.subr.mxu0 0.0
    %v1049 = vand.u32 %v758, 4294901760
    %v1050 = vsub.f32 %v758, %v1049
    %1051 = vmatpush1.msra.mxu0 %v1050
    %1052 = vmatprep.subr.mxu0 0.0
    %v1053 = vand.u32 %v757, 4294901760
    %v1054 = vsub.f32 %v757, %v1053
    %1055 = vmatpush1.msra.mxu0 %v1054
    %1056 = vmatprep.subr.mxu0 0.0
    %v1057 = vand.u32 %v756, 4294901760
    %v1058 = vsub.f32 %v756, %v1057
    %1059 = vmatpush1.msra.mxu0 %v1058
    %1060 = vmatprep.subr.mxu0 0.0
    %v1061 = vand.u32 %v755, 4294901760
    %v1062 = vsub.f32 %v755, %v1061
    %1063 = vmatpush1.msra.mxu0 %v1062
    %1064 = vmatprep.subr.mxu0 0.0
    %v1065 = vand.u32 %v754, 4294901760
    %v1066 = vsub.f32 %v754, %v1065
    %1067 = vmatpush1.msra.mxu0 %v1066
    %1068 = vmatprep.subr.mxu0 0.0
    %v1069 = vand.u32 %v753, 4294901760
    %v1070 = vsub.f32 %v753, %v1069
    %1071 = vmatpush1.msra.mxu0 %v1070
    %1072 = vmatprep.subr.mxu0 0.0
    %v1073 = vand.u32 %v752, 4294901760
    %v1074 = vsub.f32 %v752, %v1073
    %1075 = vmatpush1.msra.mxu0 %v1074
    %1076 = vmatprep.subr.mxu0 0.0
    %v1077 = vand.u32 %v751, 4294901760
    %v1078 = vsub.f32 %v751, %v1077
    %1079 = vmatpush1.msra.mxu0 %v1078
    %1080 = vmatprep.subr.mxu0 0.0
    %1081 = vmatpush2.msra.mxu0 0.0
    %1082 = vmatprep.subr.mxu0 0.0
    %1083 = vmatpush2.msra.mxu0 0.0
    %1084 = vmatprep.subr.mxu0 0.0
    %1085 = vmatpush2.msra.mxu0 0.0
    %1086 = vmatprep.subr.mxu0 0.0
    %1087 = vmatpush2.msra.mxu0 0.0
    %1088 = vmatprep.subr.mxu0 0.0
    %1089 = vmatpush2.msra.mxu0 0.0
    %1090 = vmatprep.subr.mxu0 0.0
    %1091 = vmatpush2.msra.mxu0 0.0
    %1092 = vmatprep.subr.mxu0 0.0
    %1093 = vmatpush2.msra.mxu0 0.0
    %1094 = vmatprep.subr.mxu0 0.0
    %1095 = vmatpush2.msra.mxu0 0.0
    %1096 = vmatprep.subr.mxu0 0.0
    %1097 = vmatpush2.msra.mxu0 0.0
    %1098 = vmatprep.subr.mxu0 0.0
    %1099 = vmatpush2.msra.mxu0 0.0
    %1100 = vmatprep.subr.mxu0 0.0
    %1101 = vmatpush2.msra.mxu0 0.0
    %1102 = vmatprep.subr.mxu0 0.0
    %1103 = vmatpush2.msra.mxu0 0.0
    %1104 = vmatprep.subr.mxu0 0.0
    %1105 = vmatpush2.msra.mxu0 0.0
    %1106 = vmatprep.subr.mxu0 0.0
    %1107 = vmatpush2.msra.mxu0 0.0
    %1108 = vmatprep.subr.mxu0 0.0
    %1109 = vmatpush2.msra.mxu0 0.0
    %1110 = vmatprep.subr.mxu0 0.0
    %1111 = vmatpush2.msra.mxu0 0.0
    %1112 = vmatprep.mubr.f32.mxu0 0.0
    %v1113 = vand.u32 %v750, 4294901760
    %v1114 = vsub.f32 %v750, %v1113
    %1115 = vmatmul.mubr.f32.gmra.mxu0 %v1114
    %v1116 = vpop.f32.mrf.mxu0
    %v1117 = vadd.f32 %v1013, %v1116
    %v1118 = vpop.f32.mrf.mxu0
    %1119 = vdwg.mxu0
    %1120 = vmatprep.subr.mxu0 0.0
    %v1121 = vand.u32 %v766, 4294901760
    %1122 = vmatpush1.msra.mxu0 %v1121
    %1123 = vmatprep.subr.mxu0 0.0
    %v1124 = vand.u32 %v765, 4294901760
    %1125 = vmatpush1.msra.mxu0 %v1124
    %1126 = vmatprep.subr.mxu0 0.0
    %v1127 = vand.u32 %v764, 4294901760
    %1128 = vmatpush1.msra.mxu0 %v1127
    %1129 = vmatprep.subr.mxu0 0.0
    %v1130 = vand.u32 %v763, 4294901760
    %1131 = vmatpush1.msra.mxu0 %v1130
    %1132 = vmatprep.subr.mxu0 0.0
    %v1133 = vand.u32 %v762, 4294901760
    %1134 = vmatpush1.msra.mxu0 %v1133
    %1135 = vmatprep.subr.mxu0 0.0
    %v1136 = vand.u32 %v761, 4294901760
    %1137 = vmatpush1.msra.mxu0 %v1136
    %1138 = vmatprep.subr.mxu0 0.0
    %v1139 = vand.u32 %v760, 4294901760
    %1140 = vmatpush1.msra.mxu0 %v1139
    %1141 = vmatprep.subr.mxu0 0.0
    %v1142 = vand.u32 %v759, 4294901760
    %1143 = vmatpush1.msra.mxu0 %v1142
    %1144 = vmatprep.subr.mxu0 0.0
    %v1145 = vand.u32 %v758, 4294901760
    %1146 = vmatpush1.msra.mxu0 %v1145
    %1147 = vmatprep.subr.mxu0 0.0
    %v1148 = vand.u32 %v757, 4294901760
    %1149 = vmatpush1.msra.mxu0 %v1148
    %1150 = vmatprep.subr.mxu0 0.0
    %v1151 = vand.u32 %v756, 4294901760
    %1152 = vmatpush1.msra.mxu0 %v1151
    %1153 = vmatprep.subr.mxu0 0.0
    %v1154 = vand.u32 %v755, 4294901760
    %1155 = vmatpush1.msra.mxu0 %v1154
    %1156 = vmatprep.subr.mxu0 0.0
    %v1157 = vand.u32 %v754, 4294901760
    %1158 = vmatpush1.msra.mxu0 %v1157
    %1159 = vmatprep.subr.mxu0 0.0
    %v1160 = vand.u32 %v753, 4294901760
    %1161 = vmatpush1.msra.mxu0 %v1160
    %1162 = vmatprep.subr.mxu0 0.0
    %v1163 = vand.u32 %v752, 4294901760
    %1164 = vmatpush1.msra.mxu0 %v1163
    %1165 = vmatprep.subr.mxu0 0.0
    %v1166 = vand.u32 %v751, 4294901760
    %1167 = vmatpush1.msra.mxu0 %v1166
    %1168 = vmatprep.subr.mxu0 0.0
    %1169 = vmatpush2.msra.mxu0 0.0
    %1170 = vmatprep.subr.mxu0 0.0
    %1171 = vmatpush2.msra.mxu0 0.0
    %1172 = vmatprep.subr.mxu0 0.0
    %1173 = vmatpush2.msra.mxu0 0.0
    %1174 = vmatprep.subr.mxu0 0.0
    %1175 = vmatpush2.msra.mxu0 0.0
    %1176 = vmatprep.subr.mxu0 0.0
    %1177 = vmatpush2.msra.mxu0 0.0
    %1178 = vmatprep.subr.mxu0 0.0
    %1179 = vmatpush2.msra.mxu0 0.0
    %1180 = vmatprep.subr.mxu0 0.0
    %1181 = vmatpush2.msra.mxu0 0.0
    %1182 = vmatprep.subr.mxu0 0.0
    %1183 = vmatpush2.msra.mxu0 0.0
    %1184 = vmatprep.subr.mxu0 0.0
    %1185 = vmatpush2.msra.mxu0 0.0
    %1186 = vmatprep.subr.mxu0 0.0
    %1187 = vmatpush2.msra.mxu0 0.0
    %1188 = vmatprep.subr.mxu0 0.0
    %1189 = vmatpush2.msra.mxu0 0.0
    %1190 = vmatprep.subr.mxu0 0.0
    %1191 = vmatpush2.msra.mxu0 0.0
    %1192 = vmatprep.subr.mxu0 0.0
    %1193 = vmatpush2.msra.mxu0 0.0
    %1194 = vmatprep.subr.mxu0 0.0
    %1195 = vmatpush2.msra.mxu0 0.0
    %1196 = vmatprep.subr.mxu0 0.0
    %1197 = vmatpush2.msra.mxu0 0.0
    %1198 = vmatprep.subr.mxu0 0.0
    %1199 = vmatpush2.msra.mxu0 0.0
    %1200 = vmatprep.mubr.f32.mxu0 0.0
    %v1201 = vand.u32 %v750, 4294901760
    %v1202 = vsub.f32 %v750, %v1201
    %v1203 = vand.u32 %v1202, 4294901760
    %1204 = vmatmul.mubr.f32.gmra.mxu0 %v1203
    %v1205 = vpop.f32.mrf.mxu0
    %v1206 = vadd.f32 %v1117, %v1205
    %v1207 = vpop.f32.mrf.mxu0
    %1208 = vdwg.mxu0
    %1209 = vmatprep.subr.mxu0 0.0
    %v1210 = vand.u32 %v766, 4294901760
    %v1211 = vsub.f32 %v766, %v1210
    %v1212 = vand.u32 %v1211, 4294901760
    %1213 = vmatpush1.msra.mxu0 %v1212
    %1214 = vmatprep.subr.mxu0 0.0
    %v1215 = vand.u32 %v765, 4294901760
    %v1216 = vsub.f32 %v765, %v1215
    %v1217 = vand.u32 %v1216, 4294901760
    %1218 = vmatpush1.msra.mxu0 %v1217
    %1219 = vmatprep.subr.mxu0 0.0
    %v1220 = vand.u32 %v764, 4294901760
    %v1221 = vsub.f32 %v764, %v1220
    %v1222 = vand.u32 %v1221, 4294901760
    %1223 = vmatpush1.msra.mxu0 %v1222
    %1224 = vmatprep.subr.mxu0 0.0
    %v1225 = vand.u32 %v763, 4294901760
    %v1226 = vsub.f32 %v763, %v1225
    %v1227 = vand.u32 %v1226, 4294901760
    %1228 = vmatpush1.msra.mxu0 %v1227
    %1229 = vmatprep.subr.mxu0 0.0
    %v1230 = vand.u32 %v762, 4294901760
    %v1231 = vsub.f32 %v762, %v1230
    %v1232 = vand.u32 %v1231, 4294901760
    %1233 = vmatpush1.msra.mxu0 %v1232
    %1234 = vmatprep.subr.mxu0 0.0
    %v1235 = vand.u32 %v761, 4294901760
    %v1236 = vsub.f32 %v761, %v1235
    %v1237 = vand.u32 %v1236, 4294901760
    %1238 = vmatpush1.msra.mxu0 %v1237
    %1239 = vmatprep.subr.mxu0 0.0
    %v1240 = vand.u32 %v760, 4294901760
    %v1241 = vsub.f32 %v760, %v1240
    %v1242 = vand.u32 %v1241, 4294901760
    %1243 = vmatpush1.msra.mxu0 %v1242
    %1244 = vmatprep.subr.mxu0 0.0
    %v1245 = vand.u32 %v759, 4294901760
    %v1246 = vsub.f32 %v759, %v1245
    %v1247 = vand.u32 %v1246, 4294901760
    %1248 = vmatpush1.msra.mxu0 %v1247
    %1249 = vmatprep.subr.mxu0 0.0
    %v1250 = vand.u32 %v758, 4294901760
    %v1251 = vsub.f32 %v758, %v1250
    %v1252 = vand.u32 %v1251, 4294901760
    %1253 = vmatpush1.msra.mxu0 %v1252
    %1254 = vmatprep.subr.mxu0 0.0
    %v1255 = vand.u32 %v757, 4294901760
    %v1256 = vsub.f32 %v757, %v1255
    %v1257 = vand.u32 %v1256, 4294901760
    %1258 = vmatpush1.msra.mxu0 %v1257
    %1259 = vmatprep.subr.mxu0 0.0
    %v1260 = vand.u32 %v756, 4294901760
    %v1261 = vsub.f32 %v756, %v1260
    %v1262 = vand.u32 %v1261, 4294901760
    %1263 = vmatpush1.msra.mxu0 %v1262
    %1264 = vmatprep.subr.mxu0 0.0
    %v1265 = vand.u32 %v755, 4294901760
    %v1266 = vsub.f32 %v755, %v1265
    %v1267 = vand.u32 %v1266, 4294901760
    %1268 = vmatpush1.msra.mxu0 %v1267
    %1269 = vmatprep.subr.mxu0 0.0
    %v1270 = vand.u32 %v754, 4294901760
    %v1271 = vsub.f32 %v754, %v1270
    %v1272 = vand.u32 %v1271, 4294901760
    %1273 = vmatpush1.msra.mxu0 %v1272
    %1274 = vmatprep.subr.mxu0 0.0
    %v1275 = vand.u32 %v753, 4294901760
    %v1276 = vsub.f32 %v753, %v1275
    %v1277 = vand.u32 %v1276, 4294901760
    %1278 = vmatpush1.msra.mxu0 %v1277
    %1279 = vmatprep.subr.mxu0 0.0
    %v1280 = vand.u32 %v752, 4294901760
    %v1281 = vsub.f32 %v752, %v1280
    %v1282 = vand.u32 %v1281, 4294901760
    %1283 = vmatpush1.msra.mxu0 %v1282
    %1284 = vmatprep.subr.mxu0 0.0
    %v1285 = vand.u32 %v751, 4294901760
    %v1286 = vsub.f32 %v751, %v1285
    %v1287 = vand.u32 %v1286, 4294901760
    %1288 = vmatpush1.msra.mxu0 %v1287
    %1289 = vmatprep.subr.mxu0 0.0
    %1290 = vmatpush2.msra.mxu0 0.0
    %1291 = vmatprep.subr.mxu0 0.0
    %1292 = vmatpush2.msra.mxu0 0.0
    %1293 = vmatprep.subr.mxu0 0.0
    %1294 = vmatpush2.msra.mxu0 0.0
    %1295 = vmatprep.subr.mxu0 0.0
    %1296 = vmatpush2.msra.mxu0 0.0
    %1297 = vmatprep.subr.mxu0 0.0
    %1298 = vmatpush2.msra.mxu0 0.0
    %1299 = vmatprep.subr.mxu0 0.0
    %1300 = vmatpush2.msra.mxu0 0.0
    %1301 = vmatprep.subr.mxu0 0.0
    %1302 = vmatpush2.msra.mxu0 0.0
    %1303 = vmatprep.subr.mxu0 0.0
    %1304 = vmatpush2.msra.mxu0 0.0
    %1305 = vmatprep.subr.mxu0 0.0
    %1306 = vmatpush2.msra.mxu0 0.0
    %1307 = vmatprep.subr.mxu0 0.0
    %1308 = vmatpush2.msra.mxu0 0.0
    %1309 = vmatprep.subr.mxu0 0.0
    %1310 = vmatpush2.msra.mxu0 0.0
    %1311 = vmatprep.subr.mxu0 0.0
    %1312 = vmatpush2.msra.mxu0 0.0
    %1313 = vmatprep.subr.mxu0 0.0
    %1314 = vmatpush2.msra.mxu0 0.0
    %1315 = vmatprep.subr.mxu0 0.0
    %1316 = vmatpush2.msra.mxu0 0.0
    %1317 = vmatprep.subr.mxu0 0.0
    %1318 = vmatpush2.msra.mxu0 0.0
    %1319 = vmatprep.subr.mxu0 0.0
    %1320 = vmatpush2.msra.mxu0 0.0
    %1321 = vmatprep.mubr.f32.mxu0 0.0
    %v1322 = vand.u32 %v750, 4294901760
    %1323 = vmatmul.mubr.f32.gmra.mxu0 %v1322
    %v1324 = vpop.f32.mrf.mxu0
    %v1325 = vadd.f32 %v1206, %v1324
    %v1326 = vpop.f32.mrf.mxu0
    %1327 = vdwg.mxu0
    %1328 = vmatprep.subr.mxu0 0.0
    %v1329 = vand.u32 %v766, 4294901760
    %1330 = vmatpush1.msra.mxu0 %v1329
    %1331 = vmatprep.subr.mxu0 0.0
    %v1332 = vand.u32 %v765, 4294901760
    %1333 = vmatpush1.msra.mxu0 %v1332
    %1334 = vmatprep.subr.mxu0 0.0
    %v1335 = vand.u32 %v764, 4294901760
    %1336 = vmatpush1.msra.mxu0 %v1335
    %1337 = vmatprep.subr.mxu0 0.0
    %v1338 = vand.u32 %v763, 4294901760
    %1339 = vmatpush1.msra.mxu0 %v1338
    %1340 = vmatprep.subr.mxu0 0.0
    %v1341 = vand.u32 %v762, 4294901760
    %1342 = vmatpush1.msra.mxu0 %v1341
    %1343 = vmatprep.subr.mxu0 0.0
    %v1344 = vand.u32 %v761, 4294901760
    %1345 = vmatpush1.msra.mxu0 %v1344
    %1346 = vmatprep.subr.mxu0 0.0
    %v1347 = vand.u32 %v760, 4294901760
    %1348 = vmatpush1.msra.mxu0 %v1347
    %1349 = vmatprep.subr.mxu0 0.0
    %v1350 = vand.u32 %v759, 4294901760
    %1351 = vmatpush1.msra.mxu0 %v1350
    %1352 = vmatprep.subr.mxu0 0.0
    %v1353 = vand.u32 %v758, 4294901760
    %1354 = vmatpush1.msra.mxu0 %v1353
    %1355 = vmatprep.subr.mxu0 0.0
    %v1356 = vand.u32 %v757, 4294901760
    %1357 = vmatpush1.msra.mxu0 %v1356
    %1358 = vmatprep.subr.mxu0 0.0
    %v1359 = vand.u32 %v756, 4294901760
    %1360 = vmatpush1.msra.mxu0 %v1359
    %1361 = vmatprep.subr.mxu0 0.0
    %v1362 = vand.u32 %v755, 4294901760
    %1363 = vmatpush1.msra.mxu0 %v1362
    %1364 = vmatprep.subr.mxu0 0.0
    %v1365 = vand.u32 %v754, 4294901760
    %1366 = vmatpush1.msra.mxu0 %v1365
    %1367 = vmatprep.subr.mxu0 0.0
    %v1368 = vand.u32 %v753, 4294901760
    %1369 = vmatpush1.msra.mxu0 %v1368
    %1370 = vmatprep.subr.mxu0 0.0
    %v1371 = vand.u32 %v752, 4294901760
    %1372 = vmatpush1.msra.mxu0 %v1371
    %1373 = vmatprep.subr.mxu0 0.0
    %v1374 = vand.u32 %v751, 4294901760
    %1375 = vmatpush1.msra.mxu0 %v1374
    %1376 = vmatprep.subr.mxu0 0.0
    %1377 = vmatpush2.msra.mxu0 0.0
    %1378 = vmatprep.subr.mxu0 0.0
    %1379 = vmatpush2.msra.mxu0 0.0
    %1380 = vmatprep.subr.mxu0 0.0
    %1381 = vmatpush2.msra.mxu0 0.0
    %1382 = vmatprep.subr.mxu0 0.0
    %1383 = vmatpush2.msra.mxu0 0.0
    %1384 = vmatprep.subr.mxu0 0.0
    %1385 = vmatpush2.msra.mxu0 0.0
    %1386 = vmatprep.subr.mxu0 0.0
    %1387 = vmatpush2.msra.mxu0 0.0
    %1388 = vmatprep.subr.mxu0 0.0
    %1389 = vmatpush2.msra.mxu0 0.0
    %1390 = vmatprep.subr.mxu0 0.0
    %1391 = vmatpush2.msra.mxu0 0.0
    %1392 = vmatprep.subr.mxu0 0.0
    %1393 = vmatpush2.msra.mxu0 0.0
    %1394 = vmatprep.subr.mxu0 0.0
    %1395 = vmatpush2.msra.mxu0 0.0
    %1396 = vmatprep.subr.mxu0 0.0
    %1397 = vmatpush2.msra.mxu0 0.0
    %1398 = vmatprep.subr.mxu0 0.0
    %1399 = vmatpush2.msra.mxu0 0.0
    %1400 = vmatprep.subr.mxu0 0.0
    %1401 = vmatpush2.msra.mxu0 0.0
    %1402 = vmatprep.subr.mxu0 0.0
    %1403 = vmatpush2.msra.mxu0 0.0
    %1404 = vmatprep.subr.mxu0 0.0
    %1405 = vmatpush2.msra.mxu0 0.0
    %1406 = vmatprep.subr.mxu0 0.0
    %1407 = vmatpush2.msra.mxu0 0.0
    %1408 = vmatprep.mubr.f32.mxu0 0.0
    %v1409 = vand.u32 %v750, 4294901760
    %1410 = vmatmul.mubr.f32.gmra.mxu0 %v1409
    %v1411 = vpop.f32.mrf.mxu0
    %v1412 = vadd.f32 %v1325, %v1411
    %v1413 = vpop.f32.mrf.mxu0
    %1414 = vdwg.mxu0
    %v1415 = vxor.u32 %v1412, 2147483648
    %v1416 = vmul.f32 %v1415, 1.442695
    %v1417 = vpow.pop %v1416
    %v1418 = vadd.f32 %v1417, 1.0
    %v1419 = vrcp.pop %v1418
    %v1420 = vmul.f32 1.0, %v1419
    %v1421 = vld [vmem:[#allocation8] sm:$0xff]
    %v1422 = vld [vmem:[#allocation8 + $0x8] sm:$0xff]
    %v1423 = vld [vmem:[#allocation8 + $0x10] sm:$0xff]
    %v1424 = vld [vmem:[#allocation8 + $0x18] sm:$0xff]
    %v1425 = vld [vmem:[#allocation8 + $0x20] sm:$0xff]
    %v1426 = vld [vmem:[#allocation8 + $0x28] sm:$0xff]
    %v1427 = vld [vmem:[#allocation8 + $0x30] sm:$0xff]
    %v1428 = vld [vmem:[#allocation8 + $0x38] sm:$0xff]
    %v1429 = vld [vmem:[#allocation8 + $0x40] sm:$0xff]
    %v1430 = vld [vmem:[#allocation8 + $0x48] sm:$0xff]
    %v1431 = vld [vmem:[#allocation8 + $0x50] sm:$0xff]
    %v1432 = vld [vmem:[#allocation8 + $0x58] sm:$0xff]
    %v1433 = vld [vmem:[#allocation8 + $0x60] sm:$0xff]
    %v1434 = vld [vmem:[#allocation8 + $0x68] sm:$0xff]
    %v1435 = vld [vmem:[#allocation8 + $0x70] sm:$0xff]
    %v1436 = vld [vmem:[#allocation8 + $0x78] sm:$0xff]
    %v1437 = vld [vmem:[%s6] sm:$0x1]
    %v1439 = vlaneseq
    %v1440 = vshrl.u32 %v1439, 7
    %v1441 = vsub.s32 0, %v1440
    %v1442 = vrot.slane %v1437, %v1441
    %1444 = vmatprep.subr.mxu0 0.0
    %v1445 = vand.u32 %v1436, 4294901760
    %1446 = vmatpush1.msra.mxu0 %v1445
    %1447 = vmatprep.subr.mxu0 0.0
    %v1448 = vand.u32 %v1435, 4294901760
    %1449 = vmatpush1.msra.mxu0 %v1448
    %1450 = vmatprep.subr.mxu0 0.0
    %v1451 = vand.u32 %v1434, 4294901760
    %1452 = vmatpush1.msra.mxu0 %v1451
    %1453 = vmatprep.subr.mxu0 0.0
    %v1454 = vand.u32 %v1433, 4294901760
    %1455 = vmatpush1.msra.mxu0 %v1454
    %1456 = vmatprep.subr.mxu0 0.0
    %v1457 = vand.u32 %v1432, 4294901760
    %1458 = vmatpush1.msra.mxu0 %v1457
    %1459 = vmatprep.subr.mxu0 0.0
    %v1460 = vand.u32 %v1431, 4294901760
    %1461 = vmatpush1.msra.mxu0 %v1460
    %1462 = vmatprep.subr.mxu0 0.0
    %v1463 = vand.u32 %v1430, 4294901760
    %1464 = vmatpush1.msra.mxu0 %v1463
    %1465 = vmatprep.subr.mxu0 0.0
    %v1466 = vand.u32 %v1429, 4294901760
    %1467 = vmatpush1.msra.mxu0 %v1466
    %1468 = vmatprep.subr.mxu0 0.0
    %v1469 = vand.u32 %v1428, 4294901760
    %1470 = vmatpush1.msra.mxu0 %v1469
    %1471 = vmatprep.subr.mxu0 0.0
    %v1472 = vand.u32 %v1427, 4294901760
    %1473 = vmatpush1.msra.mxu0 %v1472
    %1474 = vmatprep.subr.mxu0 0.0
    %v1475 = vand.u32 %v1426, 4294901760
    %1476 = vmatpush1.msra.mxu0 %v1475
    %1477 = vmatprep.subr.mxu0 0.0
    %v1478 = vand.u32 %v1425, 4294901760
    %1479 = vmatpush1.msra.mxu0 %v1478
    %1480 = vmatprep.subr.mxu0 0.0
    %v1481 = vand.u32 %v1424, 4294901760
    %1482 = vmatpush1.msra.mxu0 %v1481
    %1483 = vmatprep.subr.mxu0 0.0
    %v1484 = vand.u32 %v1423, 4294901760
    %1485 = vmatpush1.msra.mxu0 %v1484
    %1486 = vmatprep.subr.mxu0 0.0
    %v1487 = vand.u32 %v1422, 4294901760
    %1488 = vmatpush1.msra.mxu0 %v1487
    %1489 = vmatprep.subr.mxu0 0.0
    %v1490 = vand.u32 %v1421, 4294901760
    %1491 = vmatpush1.msra.mxu0 %v1490
    %1492 = vmatprep.subr.mxu0 0.0
    %1493 = vmatpush2.msra.mxu0 0.0
    %1494 = vmatprep.subr.mxu0 0.0
    %1495 = vmatpush2.msra.mxu0 0.0
    %1496 = vmatprep.subr.mxu0 0.0
    %1497 = vmatpush2.msra.mxu0 0.0
    %1498 = vmatprep.subr.mxu0 0.0
    %1499 = vmatpush2.msra.mxu0 0.0
    %1500 = vmatprep.subr.mxu0 0.0
    %1501 = vmatpush2.msra.mxu0 0.0
    %1502 = vmatprep.subr.mxu0 0.0
    %1503 = vmatpush2.msra.mxu0 0.0
    %1504 = vmatprep.subr.mxu0 0.0
    %1505 = vmatpush2.msra.mxu0 0.0
    %1506 = vmatprep.subr.mxu0 0.0
    %1507 = vmatpush2.msra.mxu0 0.0
    %1508 = vmatprep.subr.mxu0 0.0
    %1509 = vmatpush2.msra.mxu0 0.0
    %1510 = vmatprep.subr.mxu0 0.0
    %1511 = vmatpush2.msra.mxu0 0.0
    %1512 = vmatprep.subr.mxu0 0.0
    %1513 = vmatpush2.msra.mxu0 0.0
    %1514 = vmatprep.subr.mxu0 0.0
    %1515 = vmatpush2.msra.mxu0 0.0
    %1516 = vmatprep.subr.mxu0 0.0
    %1517 = vmatpush2.msra.mxu0 0.0
    %1518 = vmatprep.subr.mxu0 0.0
    %1519 = vmatpush2.msra.mxu0 0.0
    %1520 = vmatprep.subr.mxu0 0.0
    %1521 = vmatpush2.msra.mxu0 0.0
    %1522 = vmatprep.subr.mxu0 0.0
    %1523 = vmatpush2.msra.mxu0 0.0
    %1524 = vmatprep.mubr.f32.mxu0 0.0
    %v1525 = vand.u32 %v1420, 4294901760
    %v1526 = vsub.f32 %v1420, %v1525
    %v1527 = vand.u32 %v1526, 4294901760
    %v1528 = vsub.f32 %v1526, %v1527
    %v1529 = vand.u32 %v1528, 4294901760
    %1530 = vmatmul.mubr.f32.gmra.mxu0 %v1529
    %v1531 = vpop.f32.mrf.mxu0
    %v1532 = vadd.f32 %v1442, %v1531
    %v1533 = vpop.f32.mrf.mxu0
    %1534 = vdwg.mxu0
    %1535 = vmatprep.subr.mxu0 0.0
    %v1536 = vand.u32 %v1436, 4294901760
    %v1537 = vsub.f32 %v1436, %v1536
    %v1538 = vand.u32 %v1537, 4294901760
    %v1539 = vsub.f32 %v1537, %v1538
    %v1540 = vand.u32 %v1539, 4294901760
    %1541 = vmatpush1.msra.mxu0 %v1540
    %1542 = vmatprep.subr.mxu0 0.0
    %v1543 = vand.u32 %v1435, 4294901760
    %v1544 = vsub.f32 %v1435, %v1543
    %v1545 = vand.u32 %v1544, 4294901760
    %v1546 = vsub.f32 %v1544, %v1545
    %v1547 = vand.u32 %v1546, 4294901760
    %1548 = vmatpush1.msra.mxu0 %v1547
    %1549 = vmatprep.subr.mxu0 0.0
    %v1550 = vand.u32 %v1434, 4294901760
    %v1551 = vsub.f32 %v1434, %v1550
    %v1552 = vand.u32 %v1551, 4294901760
    %v1553 = vsub.f32 %v1551, %v1552
    %v1554 = vand.u32 %v1553, 4294901760
    %1555 = vmatpush1.msra.mxu0 %v1554
    %1556 = vmatprep.subr.mxu0 0.0
    %v1557 = vand.u32 %v1433, 4294901760
    %v1558 = vsub.f32 %v1433, %v1557
    %v1559 = vand.u32 %v1558, 4294901760
    %v1560 = vsub.f32 %v1558, %v1559
    %v1561 = vand.u32 %v1560, 4294901760
    %1562 = vmatpush1.msra.mxu0 %v1561
    %1563 = vmatprep.subr.mxu0 0.0
    %v1564 = vand.u32 %v1432, 4294901760
    %v1565 = vsub.f32 %v1432, %v1564
    %v1566 = vand.u32 %v1565, 4294901760
    %v1567 = vsub.f32 %v1565, %v1566
    %v1568 = vand.u32 %v1567, 4294901760
    %1569 = vmatpush1.msra.mxu0 %v1568
    %1570 = vmatprep.subr.mxu0 0.0
    %v1571 = vand.u32 %v1431, 4294901760
    %v1572 = vsub.f32 %v1431, %v1571
    %v1573 = vand.u32 %v1572, 4294901760
    %v1574 = vsub.f32 %v1572, %v1573
    %v1575 = vand.u32 %v1574, 4294901760
    %1576 = vmatpush1.msra.mxu0 %v1575
    %1577 = vmatprep.subr.mxu0 0.0
    %v1578 = vand.u32 %v1430, 4294901760
    %v1579 = vsub.f32 %v1430, %v1578
    %v1580 = vand.u32 %v1579, 4294901760
    %v1581 = vsub.f32 %v1579, %v1580
    %v1582 = vand.u32 %v1581, 4294901760
    %1583 = vmatpush1.msra.mxu0 %v1582
    %1584 = vmatprep.subr.mxu0 0.0
    %v1585 = vand.u32 %v1429, 4294901760
    %v1586 = vsub.f32 %v1429, %v1585
    %v1587 = vand.u32 %v1586, 4294901760
    %v1588 = vsub.f32 %v1586, %v1587
    %v1589 = vand.u32 %v1588, 4294901760
    %1590 = vmatpush1.msra.mxu0 %v1589
    %1591 = vmatprep.subr.mxu0 0.0
    %v1592 = vand.u32 %v1428, 4294901760
    %v1593 = vsub.f32 %v1428, %v1592
    %v1594 = vand.u32 %v1593, 4294901760
    %v1595 = vsub.f32 %v1593, %v1594
    %v1596 = vand.u32 %v1595, 4294901760
    %1597 = vmatpush1.msra.mxu0 %v1596
    %1598 = vmatprep.subr.mxu0 0.0
    %v1599 = vand.u32 %v1427, 4294901760
    %v1600 = vsub.f32 %v1427, %v1599
    %v1601 = vand.u32 %v1600, 4294901760
    %v1602 = vsub.f32 %v1600, %v1601
    %v1603 = vand.u32 %v1602, 4294901760
    %1604 = vmatpush1.msra.mxu0 %v1603
    %1605 = vmatprep.subr.mxu0 0.0
    %v1606 = vand.u32 %v1426, 4294901760
    %v1607 = vsub.f32 %v1426, %v1606
    %v1608 = vand.u32 %v1607, 4294901760
    %v1609 = vsub.f32 %v1607, %v1608
    %v1610 = vand.u32 %v1609, 4294901760
    %1611 = vmatpush1.msra.mxu0 %v1610
    %1612 = vmatprep.subr.mxu0 0.0
    %v1613 = vand.u32 %v1425, 4294901760
    %v1614 = vsub.f32 %v1425, %v1613
    %v1615 = vand.u32 %v1614, 4294901760
    %v1616 = vsub.f32 %v1614, %v1615
    %v1617 = vand.u32 %v1616, 4294901760
    %1618 = vmatpush1.msra.mxu0 %v1617
    %1619 = vmatprep.subr.mxu0 0.0
    %v1620 = vand.u32 %v1424, 4294901760
    %v1621 = vsub.f32 %v1424, %v1620
    %v1622 = vand.u32 %v1621, 4294901760
    %v1623 = vsub.f32 %v1621, %v1622
    %v1624 = vand.u32 %v1623, 4294901760
    %1625 = vmatpush1.msra.mxu0 %v1624
    %1626 = vmatprep.subr.mxu0 0.0
    %v1627 = vand.u32 %v1423, 4294901760
    %v1628 = vsub.f32 %v1423, %v1627
    %v1629 = vand.u32 %v1628, 4294901760
    %v1630 = vsub.f32 %v1628, %v1629
    %v1631 = vand.u32 %v1630, 4294901760
    %1632 = vmatpush1.msra.mxu0 %v1631
    %1633 = vmatprep.subr.mxu0 0.0
    %v1634 = vand.u32 %v1422, 4294901760
    %v1635 = vsub.f32 %v1422, %v1634
    %v1636 = vand.u32 %v1635, 4294901760
    %v1637 = vsub.f32 %v1635, %v1636
    %v1638 = vand.u32 %v1637, 4294901760
    %1639 = vmatpush1.msra.mxu0 %v1638
    %1640 = vmatprep.subr.mxu0 0.0
    %v1641 = vand.u32 %v1421, 4294901760
    %v1642 = vsub.f32 %v1421, %v1641
    %v1643 = vand.u32 %v1642, 4294901760
    %v1644 = vsub.f32 %v1642, %v1643
    %v1645 = vand.u32 %v1644, 4294901760
    %1646 = vmatpush1.msra.mxu0 %v1645
    %1647 = vmatprep.subr.mxu0 0.0
    %1648 = vmatpush2.msra.mxu0 0.0
    %1649 = vmatprep.subr.mxu0 0.0
    %1650 = vmatpush2.msra.mxu0 0.0
    %1651 = vmatprep.subr.mxu0 0.0
    %1652 = vmatpush2.msra.mxu0 0.0
    %1653 = vmatprep.subr.mxu0 0.0
    %1654 = vmatpush2.msra.mxu0 0.0
    %1655 = vmatprep.subr.mxu0 0.0
    %1656 = vmatpush2.msra.mxu0 0.0
    %1657 = vmatprep.subr.mxu0 0.0
    %1658 = vmatpush2.msra.mxu0 0.0
    %1659 = vmatprep.subr.mxu0 0.0
    %1660 = vmatpush2.msra.mxu0 0.0
    %1661 = vmatprep.subr.mxu0 0.0
    %1662 = vmatpush2.msra.mxu0 0.0
    %1663 = vmatprep.subr.mxu0 0.0
    %1664 = vmatpush2.msra.mxu0 0.0
    %1665 = vmatprep.subr.mxu0 0.0
    %1666 = vmatpush2.msra.mxu0 0.0
    %1667 = vmatprep.subr.mxu0 0.0
    %1668 = vmatpush2.msra.mxu0 0.0
    %1669 = vmatprep.subr.mxu0 0.0
    %1670 = vmatpush2.msra.mxu0 0.0
    %1671 = vmatprep.subr.mxu0 0.0
    %1672 = vmatpush2.msra.mxu0 0.0
    %1673 = vmatprep.subr.mxu0 0.0
    %1674 = vmatpush2.msra.mxu0 0.0
    %1675 = vmatprep.subr.mxu0 0.0
    %1676 = vmatpush2.msra.mxu0 0.0
    %1677 = vmatprep.subr.mxu0 0.0
    %1678 = vmatpush2.msra.mxu0 0.0
    %1679 = vmatprep.mubr.f32.mxu0 0.0
    %v1680 = vand.u32 %v1420, 4294901760
    %1681 = vmatmul.mubr.f32.gmra.mxu0 %v1680
    %v1682 = vpop.f32.mrf.mxu0
    %v1683 = vadd.f32 %v1532, %v1682
    %v1684 = vpop.f32.mrf.mxu0
    %1685 = vdwg.mxu0
    %1686 = vmatprep.subr.mxu0 0.0
    %v1687 = vand.u32 %v1436, 4294901760
    %v1688 = vsub.f32 %v1436, %v1687
    %1689 = vmatpush1.msra.mxu0 %v1688
    %1690 = vmatprep.subr.mxu0 0.0
    %v1691 = vand.u32 %v1435, 4294901760
    %v1692 = vsub.f32 %v1435, %v1691
    %1693 = vmatpush1.msra.mxu0 %v1692
    %1694 = vmatprep.subr.mxu0 0.0
    %v1695 = vand.u32 %v1434, 4294901760
    %v1696 = vsub.f32 %v1434, %v1695
    %1697 = vmatpush1.msra.mxu0 %v1696
    %1698 = vmatprep.subr.mxu0 0.0
    %v1699 = vand.u32 %v1433, 4294901760
    %v1700 = vsub.f32 %v1433, %v1699
    %1701 = vmatpush1.msra.mxu0 %v1700
    %1702 = vmatprep.subr.mxu0 0.0
    %v1703 = vand.u32 %v1432, 4294901760
    %v1704 = vsub.f32 %v1432, %v1703
    %1705 = vmatpush1.msra.mxu0 %v1704
    %1706 = vmatprep.subr.mxu0 0.0
    %v1707 = vand.u32 %v1431, 4294901760
    %v1708 = vsub.f32 %v1431, %v1707
    %1709 = vmatpush1.msra.mxu0 %v1708
    %1710 = vmatprep.subr.mxu0 0.0
    %v1711 = vand.u32 %v1430, 4294901760
    %v1712 = vsub.f32 %v1430, %v1711
    %1713 = vmatpush1.msra.mxu0 %v1712
    %1714 = vmatprep.subr.mxu0 0.0
    %v1715 = vand.u32 %v1429, 4294901760
    %v1716 = vsub.f32 %v1429, %v1715
    %1717 = vmatpush1.msra.mxu0 %v1716
    %1718 = vmatprep.subr.mxu0 0.0
    %v1719 = vand.u32 %v1428, 4294901760
    %v1720 = vsub.f32 %v1428, %v1719
    %1721 = vmatpush1.msra.mxu0 %v1720
    %1722 = vmatprep.subr.mxu0 0.0
    %v1723 = vand.u32 %v1427, 4294901760
    %v1724 = vsub.f32 %v1427, %v1723
    %1725 = vmatpush1.msra.mxu0 %v1724
    %1726 = vmatprep.subr.mxu0 0.0
    %v1727 = vand.u32 %v1426, 4294901760
    %v1728 = vsub.f32 %v1426, %v1727
    %1729 = vmatpush1.msra.mxu0 %v1728
    %1730 = vmatprep.subr.mxu0 0.0
    %v1731 = vand.u32 %v1425, 4294901760
    %v1732 = vsub.f32 %v1425, %v1731
    %1733 = vmatpush1.msra.mxu0 %v1732
    %1734 = vmatprep.subr.mxu0 0.0
    %v1735 = vand.u32 %v1424, 4294901760
    %v1736 = vsub.f32 %v1424, %v1735
    %1737 = vmatpush1.msra.mxu0 %v1736
    %1738 = vmatprep.subr.mxu0 0.0
    %v1739 = vand.u32 %v1423, 4294901760
    %v1740 = vsub.f32 %v1423, %v1739
    %1741 = vmatpush1.msra.mxu0 %v1740
    %1742 = vmatprep.subr.mxu0 0.0
    %v1743 = vand.u32 %v1422, 4294901760
    %v1744 = vsub.f32 %v1422, %v1743
    %1745 = vmatpush1.msra.mxu0 %v1744
    %1746 = vmatprep.subr.mxu0 0.0
    %v1747 = vand.u32 %v1421, 4294901760
    %v1748 = vsub.f32 %v1421, %v1747
    %1749 = vmatpush1.msra.mxu0 %v1748
    %1750 = vmatprep.subr.mxu0 0.0
    %1751 = vmatpush2.msra.mxu0 0.0
    %1752 = vmatprep.subr.mxu0 0.0
    %1753 = vmatpush2.msra.mxu0 0.0
    %1754 = vmatprep.subr.mxu0 0.0
    %1755 = vmatpush2.msra.mxu0 0.0
    %1756 = vmatprep.subr.mxu0 0.0
    %1757 = vmatpush2.msra.mxu0 0.0
    %1758 = vmatprep.subr.mxu0 0.0
    %1759 = vmatpush2.msra.mxu0 0.0
    %1760 = vmatprep.subr.mxu0 0.0
    %1761 = vmatpush2.msra.mxu0 0.0
    %1762 = vmatprep.subr.mxu0 0.0
    %1763 = vmatpush2.msra.mxu0 0.0
    %1764 = vmatprep.subr.mxu0 0.0
    %1765 = vmatpush2.msra.mxu0 0.0
    %1766 = vmatprep.subr.mxu0 0.0
    %1767 = vmatpush2.msra.mxu0 0.0
    %1768 = vmatprep.subr.mxu0 0.0
    %1769 = vmatpush2.msra.mxu0 0.0
    %1770 = vmatprep.subr.mxu0 0.0
    %1771 = vmatpush2.msra.mxu0 0.0
    %1772 = vmatprep.subr.mxu0 0.0
    %1773 = vmatpush2.msra.mxu0 0.0
    %1774 = vmatprep.subr.mxu0 0.0
    %1775 = vmatpush2.msra.mxu0 0.0
    %1776 = vmatprep.subr.mxu0 0.0
    %1777 = vmatpush2.msra.mxu0 0.0
    %1778 = vmatprep.subr.mxu0 0.0
    %1779 = vmatpush2.msra.mxu0 0.0
    %1780 = vmatprep.subr.mxu0 0.0
    %1781 = vmatpush2.msra.mxu0 0.0
    %1782 = vmatprep.mubr.f32.mxu0 0.0
    %v1783 = vand.u32 %v1420, 4294901760
    %v1784 = vsub.f32 %v1420, %v1783
    %1785 = vmatmul.mubr.f32.gmra.mxu0 %v1784
    %v1786 = vpop.f32.mrf.mxu0
    %v1787 = vadd.f32 %v1683, %v1786
    %v1788 = vpop.f32.mrf.mxu0
    %1789 = vdwg.mxu0
    %1790 = vmatprep.subr.mxu0 0.0
    %v1791 = vand.u32 %v1436, 4294901760
    %1792 = vmatpush1.msra.mxu0 %v1791
    %1793 = vmatprep.subr.mxu0 0.0
    %v1794 = vand.u32 %v1435, 4294901760
    %1795 = vmatpush1.msra.mxu0 %v1794
    %1796 = vmatprep.subr.mxu0 0.0
    %v1797 = vand.u32 %v1434, 4294901760
    %1798 = vmatpush1.msra.mxu0 %v1797
    %1799 = vmatprep.subr.mxu0 0.0
    %v1800 = vand.u32 %v1433, 4294901760
    %1801 = vmatpush1.msra.mxu0 %v1800
    %1802 = vmatprep.subr.mxu0 0.0
    %v1803 = vand.u32 %v1432, 4294901760
    %1804 = vmatpush1.msra.mxu0 %v1803
    %1805 = vmatprep.subr.mxu0 0.0
    %v1806 = vand.u32 %v1431, 4294901760
    %1807 = vmatpush1.msra.mxu0 %v1806
    %1808 = vmatprep.subr.mxu0 0.0
    %v1809 = vand.u32 %v1430, 4294901760
    %1810 = vmatpush1.msra.mxu0 %v1809
    %1811 = vmatprep.subr.mxu0 0.0
    %v1812 = vand.u32 %v1429, 4294901760
    %1813 = vmatpush1.msra.mxu0 %v1812
    %1814 = vmatprep.subr.mxu0 0.0
    %v1815 = vand.u32 %v1428, 4294901760
    %1816 = vmatpush1.msra.mxu0 %v1815
    %1817 = vmatprep.subr.mxu0 0.0
    %v1818 = vand.u32 %v1427, 4294901760
    %1819 = vmatpush1.msra.mxu0 %v1818
    %1820 = vmatprep.subr.mxu0 0.0
    %v1821 = vand.u32 %v1426, 4294901760
    %1822 = vmatpush1.msra.mxu0 %v1821
    %1823 = vmatprep.subr.mxu0 0.0
    %v1824 = vand.u32 %v1425, 4294901760
    %1825 = vmatpush1.msra.mxu0 %v1824
    %1826 = vmatprep.subr.mxu0 0.0
    %v1827 = vand.u32 %v1424, 4294901760
    %1828 = vmatpush1.msra.mxu0 %v1827
    %1829 = vmatprep.subr.mxu0 0.0
    %v1830 = vand.u32 %v1423, 4294901760
    %1831 = vmatpush1.msra.mxu0 %v1830
    %1832 = vmatprep.subr.mxu0 0.0
    %v1833 = vand.u32 %v1422, 4294901760
    %1834 = vmatpush1.msra.mxu0 %v1833
    %1835 = vmatprep.subr.mxu0 0.0
    %v1836 = vand.u32 %v1421, 4294901760
    %1837 = vmatpush1.msra.mxu0 %v1836
    %1838 = vmatprep.subr.mxu0 0.0
    %1839 = vmatpush2.msra.mxu0 0.0
    %1840 = vmatprep.subr.mxu0 0.0
    %1841 = vmatpush2.msra.mxu0 0.0
    %1842 = vmatprep.subr.mxu0 0.0
    %1843 = vmatpush2.msra.mxu0 0.0
    %1844 = vmatprep.subr.mxu0 0.0
    %1845 = vmatpush2.msra.mxu0 0.0
    %1846 = vmatprep.subr.mxu0 0.0
    %1847 = vmatpush2.msra.mxu0 0.0
    %1848 = vmatprep.subr.mxu0 0.0
    %1849 = vmatpush2.msra.mxu0 0.0
    %1850 = vmatprep.subr.mxu0 0.0
    %1851 = vmatpush2.msra.mxu0 0.0
    %1852 = vmatprep.subr.mxu0 0.0
    %1853 = vmatpush2.msra.mxu0 0.0
    %1854 = vmatprep.subr.mxu0 0.0
    %1855 = vmatpush2.msra.mxu0 0.0
    %1856 = vmatprep.subr.mxu0 0.0
    %1857 = vmatpush2.msra.mxu0 0.0
    %1858 = vmatprep.subr.mxu0 0.0
    %1859 = vmatpush2.msra.mxu0 0.0
    %1860 = vmatprep.subr.mxu0 0.0
    %1861 = vmatpush2.msra.mxu0 0.0
    %1862 = vmatprep.subr.mxu0 0.0
    %1863 = vmatpush2.msra.mxu0 0.0
    %1864 = vmatprep.subr.mxu0 0.0
    %1865 = vmatpush2.msra.mxu0 0.0
    %1866 = vmatprep.subr.mxu0 0.0
    %1867 = vmatpush2.msra.mxu0 0.0
    %1868 = vmatprep.subr.mxu0 0.0
    %1869 = vmatpush2.msra.mxu0 0.0
    %1870 = vmatprep.mubr.f32.mxu0 0.0
    %v1871 = vand.u32 %v1420, 4294901760
    %v1872 = vsub.f32 %v1420, %v1871
    %v1873 = vand.u32 %v1872, 4294901760
    %1874 = vmatmul.mubr.f32.gmra.mxu0 %v1873
    %v1875 = vpop.f32.mrf.mxu0
    %v1876 = vadd.f32 %v1787, %v1875
    %v1877 = vpop.f32.mrf.mxu0
    %1878 = vdwg.mxu0
    %1879 = vmatprep.subr.mxu0 0.0
    %v1880 = vand.u32 %v1436, 4294901760
    %v1881 = vsub.f32 %v1436, %v1880
    %v1882 = vand.u32 %v1881, 4294901760
    %1883 = vmatpush1.msra.mxu0 %v1882
    %1884 = vmatprep.subr.mxu0 0.0
    %v1885 = vand.u32 %v1435, 4294901760
    %v1886 = vsub.f32 %v1435, %v1885
    %v1887 = vand.u32 %v1886, 4294901760
    %1888 = vmatpush1.msra.mxu0 %v1887
    %1889 = vmatprep.subr.mxu0 0.0
    %v1890 = vand.u32 %v1434, 4294901760
    %v1891 = vsub.f32 %v1434, %v1890
    %v1892 = vand.u32 %v1891, 4294901760
    %1893 = vmatpush1.msra.mxu0 %v1892
    %1894 = vmatprep.subr.mxu0 0.0
    %v1895 = vand.u32 %v1433, 4294901760
    %v1896 = vsub.f32 %v1433, %v1895
    %v1897 = vand.u32 %v1896, 4294901760
    %1898 = vmatpush1.msra.mxu0 %v1897
    %1899 = vmatprep.subr.mxu0 0.0
    %v1900 = vand.u32 %v1432, 4294901760
    %v1901 = vsub.f32 %v1432, %v1900
    %v1902 = vand.u32 %v1901, 4294901760
    %1903 = vmatpush1.msra.mxu0 %v1902
    %1904 = vmatprep.subr.mxu0 0.0
    %v1905 = vand.u32 %v1431, 4294901760
    %v1906 = vsub.f32 %v1431, %v1905
    %v1907 = vand.u32 %v1906, 4294901760
    %1908 = vmatpush1.msra.mxu0 %v1907
    %1909 = vmatprep.subr.mxu0 0.0
    %v1910 = vand.u32 %v1430, 4294901760
    %v1911 = vsub.f32 %v1430, %v1910
    %v1912 = vand.u32 %v1911, 4294901760
    %1913 = vmatpush1.msra.mxu0 %v1912
    %1914 = vmatprep.subr.mxu0 0.0
    %v1915 = vand.u32 %v1429, 4294901760
    %v1916 = vsub.f32 %v1429, %v1915
    %v1917 = vand.u32 %v1916, 4294901760
    %1918 = vmatpush1.msra.mxu0 %v1917
    %1919 = vmatprep.subr.mxu0 0.0
    %v1920 = vand.u32 %v1428, 4294901760
    %v1921 = vsub.f32 %v1428, %v1920
    %v1922 = vand.u32 %v1921, 4294901760
    %1923 = vmatpush1.msra.mxu0 %v1922
    %1924 = vmatprep.subr.mxu0 0.0
    %v1925 = vand.u32 %v1427, 4294901760
    %v1926 = vsub.f32 %v1427, %v1925
    %v1927 = vand.u32 %v1926, 4294901760
    %1928 = vmatpush1.msra.mxu0 %v1927
    %1929 = vmatprep.subr.mxu0 0.0
    %v1930 = vand.u32 %v1426, 4294901760
    %v1931 = vsub.f32 %v1426, %v1930
    %v1932 = vand.u32 %v1931, 4294901760
    %1933 = vmatpush1.msra.mxu0 %v1932
    %1934 = vmatprep.subr.mxu0 0.0
    %v1935 = vand.u32 %v1425, 4294901760
    %v1936 = vsub.f32 %v1425, %v1935
    %v1937 = vand.u32 %v1936, 4294901760
    %1938 = vmatpush1.msra.mxu0 %v1937
    %1939 = vmatprep.subr.mxu0 0.0
    %v1940 = vand.u32 %v1424, 4294901760
    %v1941 = vsub.f32 %v1424, %v1940
    %v1942 = vand.u32 %v1941, 4294901760
    %1943 = vmatpush1.msra.mxu0 %v1942
    %1944 = vmatprep.subr.mxu0 0.0
    %v1945 = vand.u32 %v1423, 4294901760
    %v1946 = vsub.f32 %v1423, %v1945
    %v1947 = vand.u32 %v1946, 4294901760
    %1948 = vmatpush1.msra.mxu0 %v1947
    %1949 = vmatprep.subr.mxu0 0.0
    %v1950 = vand.u32 %v1422, 4294901760
    %v1951 = vsub.f32 %v1422, %v1950
    %v1952 = vand.u32 %v1951, 4294901760
    %1953 = vmatpush1.msra.mxu0 %v1952
    %1954 = vmatprep.subr.mxu0 0.0
    %v1955 = vand.u32 %v1421, 4294901760
    %v1956 = vsub.f32 %v1421, %v1955
    %v1957 = vand.u32 %v1956, 4294901760
    %1958 = vmatpush1.msra.mxu0 %v1957
    %1959 = vmatprep.subr.mxu0 0.0
    %1960 = vmatpush2.msra.mxu0 0.0
    %1961 = vmatprep.subr.mxu0 0.0
    %1962 = vmatpush2.msra.mxu0 0.0
    %1963 = vmatprep.subr.mxu0 0.0
    %1964 = vmatpush2.msra.mxu0 0.0
    %1965 = vmatprep.subr.mxu0 0.0
    %1966 = vmatpush2.msra.mxu0 0.0
    %1967 = vmatprep.subr.mxu0 0.0
    %1968 = vmatpush2.msra.mxu0 0.0
    %1969 = vmatprep.subr.mxu0 0.0
    %1970 = vmatpush2.msra.mxu0 0.0
    %1971 = vmatprep.subr.mxu0 0.0
    %1972 = vmatpush2.msra.mxu0 0.0
    %1973 = vmatprep.subr.mxu0 0.0
    %1974 = vmatpush2.msra.mxu0 0.0
    %1975 = vmatprep.subr.mxu0 0.0
    %1976 = vmatpush2.msra.mxu0 0.0
    %1977 = vmatprep.subr.mxu0 0.0
    %1978 = vmatpush2.msra.mxu0 0.0
    %1979 = vmatprep.subr.mxu0 0.0
    %1980 = vmatpush2.msra.mxu0 0.0
    %1981 = vmatprep.subr.mxu0 0.0
    %1982 = vmatpush2.msra.mxu0 0.0
    %1983 = vmatprep.subr.mxu0 0.0
    %1984 = vmatpush2.msra.mxu0 0.0
    %1985 = vmatprep.subr.mxu0 0.0
    %1986 = vmatpush2.msra.mxu0 0.0
    %1987 = vmatprep.subr.mxu0 0.0
    %1988 = vmatpush2.msra.mxu0 0.0
    %1989 = vmatprep.subr.mxu0 0.0
    %1990 = vmatpush2.msra.mxu0 0.0
    %1991 = vmatprep.mubr.f32.mxu0 0.0
    %v1992 = vand.u32 %v1420, 4294901760
    %1993 = vmatmul.mubr.f32.gmra.mxu0 %v1992
    %v1994 = vpop.f32.mrf.mxu0
    %v1995 = vadd.f32 %v1876, %v1994
    %v1996 = vpop.f32.mrf.mxu0
    %1997 = vdwg.mxu0
    %1998 = vmatprep.subr.mxu0 0.0
    %v1999 = vand.u32 %v1436, 4294901760
    %2000 = vmatpush1.msra.mxu0 %v1999
    %2001 = vmatprep.subr.mxu0 0.0
    %v2002 = vand.u32 %v1435, 4294901760
    %2003 = vmatpush1.msra.mxu0 %v2002
    %2004 = vmatprep.subr.mxu0 0.0
    %v2005 = vand.u32 %v1434, 4294901760
    %2006 = vmatpush1.msra.mxu0 %v2005
    %2007 = vmatprep.subr.mxu0 0.0
    %v2008 = vand.u32 %v1433, 4294901760
    %2009 = vmatpush1.msra.mxu0 %v2008
    %2010 = vmatprep.subr.mxu0 0.0
    %v2011 = vand.u32 %v1432, 4294901760
    %2012 = vmatpush1.msra.mxu0 %v2011
    %2013 = vmatprep.subr.mxu0 0.0
    %v2014 = vand.u32 %v1431, 4294901760
    %2015 = vmatpush1.msra.mxu0 %v2014
    %2016 = vmatprep.subr.mxu0 0.0
    %v2017 = vand.u32 %v1430, 4294901760
    %2018 = vmatpush1.msra.mxu0 %v2017
    %2019 = vmatprep.subr.mxu0 0.0
    %v2020 = vand.u32 %v1429, 4294901760
    %2021 = vmatpush1.msra.mxu0 %v2020
    %2022 = vmatprep.subr.mxu0 0.0
    %v2023 = vand.u32 %v1428, 4294901760
    %2024 = vmatpush1.msra.mxu0 %v2023
    %2025 = vmatprep.subr.mxu0 0.0
    %v2026 = vand.u32 %v1427, 4294901760
    %2027 = vmatpush1.msra.mxu0 %v2026
    %2028 = vmatprep.subr.mxu0 0.0
    %v2029 = vand.u32 %v1426, 4294901760
    %2030 = vmatpush1.msra.mxu0 %v2029
    %2031 = vmatprep.subr.mxu0 0.0
    %v2032 = vand.u32 %v1425, 4294901760
    %2033 = vmatpush1.msra.mxu0 %v2032
    %2034 = vmatprep.subr.mxu0 0.0
    %v2035 = vand.u32 %v1424, 4294901760
    %2036 = vmatpush1.msra.mxu0 %v2035
    %2037 = vmatprep.subr.mxu0 0.0
    %v2038 = vand.u32 %v1423, 4294901760
    %2039 = vmatpush1.msra.mxu0 %v2038
    %2040 = vmatprep.subr.mxu0 0.0
    %v2041 = vand.u32 %v1422, 4294901760
    %2042 = vmatpush1.msra.mxu0 %v2041
    %2043 = vmatprep.subr.mxu0 0.0
    %v2044 = vand.u32 %v1421, 4294901760
    %2045 = vmatpush1.msra.mxu0 %v2044
    %2046 = vmatprep.subr.mxu0 0.0
    %2047 = vmatpush2.msra.mxu0 0.0
    %2048 = vmatprep.subr.mxu0 0.0
    %2049 = vmatpush2.msra.mxu0 0.0
    %2050 = vmatprep.subr.mxu0 0.0
    %2051 = vmatpush2.msra.mxu0 0.0
    %2052 = vmatprep.subr.mxu0 0.0
    %2053 = vmatpush2.msra.mxu0 0.0
    %2054 = vmatprep.subr.mxu0 0.0
    %2055 = vmatpush2.msra.mxu0 0.0
    %2056 = vmatprep.subr.mxu0 0.0
    %2057 = vmatpush2.msra.mxu0 0.0
    %2058 = vmatprep.subr.mxu0 0.0
    %2059 = vmatpush2.msra.mxu0 0.0
    %2060 = vmatprep.subr.mxu0 0.0
    %2061 = vmatpush2.msra.mxu0 0.0
    %2062 = vmatprep.subr.mxu0 0.0
    %2063 = vmatpush2.msra.mxu0 0.0
    %2064 = vmatprep.subr.mxu0 0.0
    %2065 = vmatpush2.msra.mxu0 0.0
    %2066 = vmatprep.subr.mxu0 0.0
    %2067 = vmatpush2.msra.mxu0 0.0
    %2068 = vmatprep.subr.mxu0 0.0
    %2069 = vmatpush2.msra.mxu0 0.0
    %2070 = vmatprep.subr.mxu0 0.0
    %2071 = vmatpush2.msra.mxu0 0.0
    %2072 = vmatprep.subr.mxu0 0.0
    %2073 = vmatpush2.msra.mxu0 0.0
    %2074 = vmatprep.subr.mxu0 0.0
    %2075 = vmatpush2.msra.mxu0 0.0
    %2076 = vmatprep.subr.mxu0 0.0
    %2077 = vmatpush2.msra.mxu0 0.0
    %2078 = vmatprep.mubr.f32.mxu0 0.0
    %v2079 = vand.u32 %v1420, 4294901760
    %2080 = vmatmul.mubr.f32.gmra.mxu0 %v2079
    %v2081 = vpop.f32.mrf.mxu0
    %v2082 = vadd.f32 %v1995, %v2081
    %v2083 = vpop.f32.mrf.mxu0
    %2084 = vdwg.mxu0
    %2085 = vst [vmem:[#allocation10] sm:$0xff] %v2082
    // Predicated region
    $region46: #{tpu_custom_call.1} parent=1 // pred_check
      _
    $region47: #{tpu_custom_call.1} parent=1 // pred_check_branch
      %2087 = sbr.rel (0) target = $region49
    $region48: #{tpu_custom_call.1} parent=1 // pred_region
      %s2089 = ssub.s32 128, 128
      %2090 = vsyncadd [#allocation4], %s2089
      %s2092 = sshll.u32 [#allocation10], 4
      %s2093 = int_to_ptr.vmem [resolvable:$true] %s2092
      %2095 = dma.vmem_to_hbm [thread:$0]  %s2093, 128, %s7, [#allocation4]
    $region49: #{tpu_custom_call.1} parent=1 // pred_fallthru
      _
    // Predicated region
    $region50: #{tpu_custom_call.1} parent=1 // pred_check
      _
    $region51: #{tpu_custom_call.1} parent=1 // pred_check_branch
      %2097 = sbr.rel (0) target = $region53
    $region52: #{tpu_custom_call.1} parent=1 // pred_region
      %2098 = dma.done [#allocation4], 128
    $region53: #{tpu_custom_call.1} parent=1 // pred_fallthru
      _
    %2099 = vsyncpa [#allocation3], 1
    %2100 = vsyncpa [#allocation6], 1
    %2101 = vsyncpa [#allocation9], 1
    %2102 = vsyncpa [#allocation4], 1

// kernel: tpu_custom_call.1
$region0: #{tpu_custom_call.1}
  #allocation0 [shape = 'u32[]', space=smem, size = 0x4, offset = 0x4, fixed_abs, tag = 'smem constant byte address 0x4 - core index']
  #allocation1 [shape = 'u32[144,128]{1,0:T(1,128)}', space=vmem, size = 0x12000, scoped, tag = 'internal scratch']
  %s0 = inlined_call_operand.hbm [shape: f32[8,128], index: 0, kind: input, shape index: {}]
  %s1 = inlined_call_operand.hbm [shape: f32[128,128], index: 1, kind: input, shape index: {}]
  %s2 = inlined_call_operand.vmem [shape: f32[1,128], index: 2, kind: input, shape index: {}]
  %s3 = inlined_call_operand.hbm [shape: f32[128,128], index: 3, kind: input, shape index: {}]
  %s4 = inlined_call_operand.vmem [shape: f32[1,128], index: 4, kind: input, shape index: {}]
  %s5 = inlined_call_operand.hbm [shape: f32[128,128], index: 5, kind: input, shape index: {}]
  %s6 = inlined_call_operand.vmem [shape: f32[1,128], index: 6, kind: input, shape index: {}]
  %s7 = inlined_call_operand.hbm [shape: f32[8,128], index: 7, kind: output, shape index: {}]
  %s8 = sld [smem:[#allocation0]]
  $region54: #{tpu_custom_call.1} parent=0
    _
  %s10 = ssub.s32 1, %s8
  %s11 = scalar_select 0, %s10, %s8
  $region1: #{tpu_custom_call.1} parent=0
    #allocation2 [shape = 'u8[4096]{0}', space=vmem, size = 0x1000, scoped, tag = 'input window, operand 0, single buffered']
    #allocation3 [shape = 's32[1]{0}', space=sflag, size = 0x4, scoped, tag = 'scoped memory for tpu_custom_call.1']
    #allocation4 [shape = 's32[1]{0}', space=sflag, size = 0x4, scoped, tag = 'scoped memory for tpu_custom_call.1']
    #allocation5 [shape = 'u8[65536]{0}', space=vmem, size = 0x10000, scoped, tag = 'input window, operand 1, single buffered']
    #allocation6 [shape = 's32[1]{0}', space=sflag, size = 0x4, scoped, tag = 'scoped memory for tpu_custom_call.1']
    #allocation7 [shape = 'u8[65536]{0}', space=vmem, size = 0x10000, scoped, tag = 'input window, operand 3, single buffered']
    #allocation8 [shape = 'u8[65536]{0}', space=vmem, size = 0x10000, scoped, tag = 'input window, operand 5, single buffered']
    #allocation9 [shape = 's32[1]{0}', space=sflag, size = 0x4, scoped, tag = 'scoped memory for tpu_custom_call.1']
    #allocation10 [shape = 'u8[4096]{0}', space=vmem, size = 0x1000, scoped, tag = 'output window, operand 0, single buffered']
    %12 = vsyncpa [#allocation3], 0
    %13 = vsyncpa [#allocation6], 0
    %14 = vsyncpa [#allocation9], 0
    %15 = vsyncpa [#allocation4], 0
    // Predicated region
    $region2: #{tpu_custom_call.1} parent=1 // pred_check
      _
    $region3: #{tpu_custom_call.1} parent=1 // pred_check_branch
      %17 = sbr.rel (0) target = $region5
    $region4: #{tpu_custom_call.1} parent=1 // pred_region
      %s19 = ssub.s32 128, 128
      %20 = vsyncadd [#allocation3], %s19
      %s22 = sshll.u32 [#allocation2], 4
      %s23 = int_to_ptr.vmem [resolvable:$true] %s22
      %25 = dma.hbm_to_vmem [thread:$0]  %s0, 128, %s23, [#allocation3]
    $region5: #{tpu_custom_call.1} parent=1 // pred_fallthru
      _
    // Predicated region
    $region6: #{tpu_custom_call.1} parent=1 // pred_check
      _
    $region7: #{tpu_custom_call.1} parent=1 // pred_check_branch
      %27 = sbr.rel (0) target = $region9
    $region8: #{tpu_custom_call.1} parent=1 // pred_region
      %s29 = ssub.s32 2048, 2048
      %30 = vsyncadd [#allocation6], %s29
      %s31 = sshll.u32 [#allocation5], 4
      %s32 = int_to_ptr.vmem [resolvable:$true] %s31
      %37 = dma.hbm_to_vmem [thread:$0]  %s1, 2048, %s32, [#allocation6], 128, 128, 8
    $region9: #{tpu_custom_call.1} parent=1 // pred_fallthru
      _
    // Predicated region
    $region10: #{tpu_custom_call.1} parent=1 // pred_check
      _
    $region11: #{tpu_custom_call.1} parent=1 // pred_check_branch
      %39 = sbr.rel (0) target = $region13
    $region12: #{tpu_custom_call.1} parent=1 // pred_region
      _
    $region13: #{tpu_custom_call.1} parent=1 // pred_fallthru
      _
    // Predicated region
    $region14: #{tpu_custom_call.1} parent=1 // pred_check
      _
    $region15: #{tpu_custom_call.1} parent=1 // pred_check_branch
      %41 = sbr.rel (0) target = $region17
    $region16: #{tpu_custom_call.1} parent=1 // pred_region
      %s43 = ssub.s32 2048, 2048
      %44 = vsyncadd [#allocation6], %s43
      %s45 = sshll.u32 [#allocation7], 4
      %s46 = int_to_ptr.vmem [resolvable:$true] %s45
      %51 = dma.hbm_to_vmem [thread:$0]  %s3, 2048, %s46, [#allocation6], 128, 128, 8
    $region17: #{tpu_custom_call.1} parent=1 // pred_fallthru
      _
    // Predicated region
    $region18: #{tpu_custom_call.1} parent=1 // pred_check
      _
    $region19: #{tpu_custom_call.1} parent=1 // pred_check_branch
      %53 = sbr.rel (0) target = $region21
    $region20: #{tpu_custom_call.1} parent=1 // pred_region
      _
    $region21: #{tpu_custom_call.1} parent=1 // pred_fallthru
      _
    // Predicated region
    $region22: #{tpu_custom_call.1} parent=1 // pred_check
      _
    $region23: #{tpu_custom_call.1} parent=1 // pred_check_branch
      %55 = sbr.rel (0) target = $region25
    $region24: #{tpu_custom_call.1} parent=1 // pred_region
      %s57 = ssub.s32 2048, 2048
      %58 = vsyncadd [#allocation9], %s57
      %s59 = sshll.u32 [#allocation8], 4
      %s60 = int_to_ptr.vmem [resolvable:$true] %s59
      %65 = dma.hbm_to_vmem [thread:$0]  %s5, 2048, %s60, [#allocation9], 128, 128, 8
    $region25: #{tpu_custom_call.1} parent=1 // pred_fallthru
      _
    // Predicated region
    $region26: #{tpu_custom_call.1} parent=1 // pred_check
      _
    $region27: #{tpu_custom_call.1} parent=1 // pred_check_branch
      %67 = sbr.rel (0) target = $region29
    $region28: #{tpu_custom_call.1} parent=1 // pred_region
      _
    $region29: #{tpu_custom_call.1} parent=1 // pred_fallthru
      _
    // Predicated region
    $region30: #{tpu_custom_call.1} parent=1 // pred_check
      _
    $region31: #{tpu_custom_call.1} parent=1 // pred_check_branch
      %69 = sbr.rel (0) target = $region33
    $region32: #{tpu_custom_call.1} parent=1 // pred_region
      %70 = dma.done [#allocation3], 128
    $region33: #{tpu_custom_call.1} parent=1 // pred_fallthru
      _
    // Predicated region
    $region34: #{tpu_custom_call.1} parent=1 // pred_check
      _
    $region35: #{tpu_custom_call.1} parent=1 // pred_check_branch
      %72 = sbr.rel (0) target = $region37
    $region36: #{tpu_custom_call.1} parent=1 // pred_region
      %73 = dma.done [#allocation6], 2048
    $region37: #{tpu_custom_call.1} parent=1 // pred_fallthru
      _
    // Predicated region
    $region38: #{tpu_custom_call.1} parent=1 // pred_check
      _
    $region39: #{tpu_custom_call.1} parent=1 // pred_check_branch
      %75 = sbr.rel (0) target = $region41
    $region40: #{tpu_custom_call.1} parent=1 // pred_region
      %76 = dma.done [#allocation6], 2048
    $region41: #{tpu_custom_call.1} parent=1 // pred_fallthru
      _
    // Predicated region
    $region42: #{tpu_custom_call.1} parent=1 // pred_check
      _
    $region43: #{tpu_custom_call.1} parent=1 // pred_check_branch
      %78 = sbr.rel (0) target = $region45
    $region44: #{tpu_custom_call.1} parent=1 // pred_region
      %79 = dma.done [#allocation9], 2048
    $region45: #{tpu_custom_call.1} parent=1 // pred_fallthru
      _
    %v80 = vld [vmem:[#allocation2] sm:$0xff]
    %v81 = vld [vmem:[#allocation5] sm:$0xff]
    %v82 = vld [vmem:[#allocation5 + $0x8] sm:$0xff]
    %v83 = vld [vmem:[#allocation5 + $0x10] sm:$0xff]
    %v84 = vld [vmem:[#allocation5 + $0x18] sm:$0xff]
    %v85 = vld [vmem:[#allocation5 + $0x20] sm:$0xff]
    %v86 = vld [vmem:[#allocation5 + $0x28] sm:$0xff]
    %v87 = vld [vmem:[#allocation5 + $0x30] sm:$0xff]
    %v88 = vld [vmem:[#allocation5 + $0x38] sm:$0xff]
    %v89 = vld [vmem:[#allocation5 + $0x40] sm:$0xff]
    %v90 = vld [vmem:[#allocation5 + $0x48] sm:$0xff]
    %v91 = vld [vmem:[#allocation5 + $0x50] sm:$0xff]
    %v92 = vld [vmem:[#allocation5 + $0x58] sm:$0xff]
    %v93 = vld [vmem:[#allocation5 + $0x60] sm:$0xff]
    %v94 = vld [vmem:[#allocation5 + $0x68] sm:$0xff]
    %v95 = vld [vmem:[#allocation5 + $0x70] sm:$0xff]
    %v96 = vld [vmem:[#allocation5 + $0x78] sm:$0xff]
    %v97 = vld [vmem:[%s2] sm:$0x1]
    %v99 = vlaneseq
    %v100 = vshrl.u32 %v99, 7
    %v101 = vsub.s32 0, %v100
    %v102 = vrot.slane %v97, %v101
    %104 = vmatprep.subr.mxu0 0.0
    %v105 = vand.u32 %v96, 4294901760
    %106 = vmatpush1.msra.mxu0 %v105
    %107 = vmatprep.subr.mxu0 0.0
    %v108 = vand.u32 %v95, 4294901760
    %109 = vmatpush1.msra.mxu0 %v108
    %110 = vmatprep.subr.mxu0 0.0
    %v111 = vand.u32 %v94, 4294901760
    %112 = vmatpush1.msra.mxu0 %v111
    %113 = vmatprep.subr.mxu0 0.0
    %v114 = vand.u32 %v93, 4294901760
    %115 = vmatpush1.msra.mxu0 %v114
    %116 = vmatprep.subr.mxu0 0.0
    %v117 = vand.u32 %v92, 4294901760
    %118 = vmatpush1.msra.mxu0 %v117
    %119 = vmatprep.subr.mxu0 0.0
    %v120 = vand.u32 %v91, 4294901760
    %121 = vmatpush1.msra.mxu0 %v120
    %122 = vmatprep.subr.mxu0 0.0
    %v123 = vand.u32 %v90, 4294901760
    %124 = vmatpush1.msra.mxu0 %v123
    %125 = vmatprep.subr.mxu0 0.0
    %v126 = vand.u32 %v89, 4294901760
    %127 = vmatpush1.msra.mxu0 %v126
    %128 = vmatprep.subr.mxu0 0.0
    %v129 = vand.u32 %v88, 4294901760
    %130 = vmatpush1.msra.mxu0 %v129
    %131 = vmatprep.subr.mxu0 0.0
    %v132 = vand.u32 %v87, 4294901760
    %133 = vmatpush1.msra.mxu0 %v132
    %134 = vmatprep.subr.mxu0 0.0
    %v135 = vand.u32 %v86, 4294901760
    %136 = vmatpush1.msra.mxu0 %v135
    %137 = vmatprep.subr.mxu0 0.0
    %v138 = vand.u32 %v85, 4294901760
    %139 = vmatpush1.msra.mxu0 %v138
    %140 = vmatprep.subr.mxu0 0.0
    %v141 = vand.u32 %v84, 4294901760
    %142 = vmatpush1.msra.mxu0 %v141
    %143 = vmatprep.subr.mxu0 0.0
    %v144 = vand.u32 %v83, 4294901760
    %145 = vmatpush1.msra.mxu0 %v144
    %146 = vmatprep.subr.mxu0 0.0
    %v147 = vand.u32 %v82, 4294901760
    %148 = vmatpush1.msra.mxu0 %v147
    %149 = vmatprep.subr.mxu0 0.0
    %v150 = vand.u32 %v81, 4294901760
    %151 = vmatpush1.msra.mxu0 %v150
    %152 = vmatprep.subr.mxu0 0.0
    %153 = vmatpush2.msra.mxu0 0.0
    %154 = vmatprep.subr.mxu0 0.0
    %155 = vmatpush2.msra.mxu0 0.0
    %156 = vmatprep.subr.mxu0 0.0
    %157 = vmatpush2.msra.mxu0 0.0
    %158 = vmatprep.subr.mxu0 0.0
    %159 = vmatpush2.msra.mxu0 0.0
    %160 = vmatprep.subr.mxu0 0.0
    %161 = vmatpush2.msra.mxu0 0.0
    %162 = vmatprep.subr.mxu0 0.0
    %163 = vmatpush2.msra.mxu0 0.0
    %164 = vmatprep.subr.mxu0 0.0
    %165 = vmatpush2.msra.mxu0 0.0
    %166 = vmatprep.subr.mxu0 0.0
    %167 = vmatpush2.msra.mxu0 0.0
    %168 = vmatprep.subr.mxu0 0.0
    %169 = vmatpush2.msra.mxu0 0.0
    %170 = vmatprep.subr.mxu0 0.0
    %171 = vmatpush2.msra.mxu0 0.0
    %172 = vmatprep.subr.mxu0 0.0
    %173 = vmatpush2.msra.mxu0 0.0
    %174 = vmatprep.subr.mxu0 0.0
    %175 = vmatpush2.msra.mxu0 0.0
    %176 = vmatprep.subr.mxu0 0.0
    %177 = vmatpush2.msra.mxu0 0.0
    %178 = vmatprep.subr.mxu0 0.0
    %179 = vmatpush2.msra.mxu0 0.0
    %180 = vmatprep.subr.mxu0 0.0
    %181 = vmatpush2.msra.mxu0 0.0
    %182 = vmatprep.subr.mxu0 0.0
    %183 = vmatpush2.msra.mxu0 0.0
    %184 = vmatprep.mubr.f32.mxu0 0.0
    %v185 = vand.u32 %v80, 4294901760
    %v186 = vsub.f32 %v80, %v185
    %v187 = vand.u32 %v186, 4294901760
    %v188 = vsub.f32 %v186, %v187
    %v189 = vand.u32 %v188, 4294901760
    %190 = vmatmul.mubr.f32.gmra.mxu0 %v189
    %v191 = vpop.f32.mrf.mxu0
    %v192 = vadd.f32 %v102, %v191
    %v193 = vpop.f32.mrf.mxu0
    %194 = vdwg.mxu0
    %195 = vmatprep.subr.mxu0 0.0
    %v196 = vand.u32 %v96, 4294901760
    %v197 = vsub.f32 %v96, %v196
    %v198 = vand.u32 %v197, 4294901760
    %v199 = vsub.f32 %v197, %v198
    %v200 = vand.u32 %v199, 4294901760
    %201 = vmatpush1.msra.mxu0 %v200
    %202 = vmatprep.subr.mxu0 0.0
    %v203 = vand.u32 %v95, 4294901760
    %v204 = vsub.f32 %v95, %v203
    %v205 = vand.u32 %v204, 4294901760
    %v206 = vsub.f32 %v204, %v205
    %v207 = vand.u32 %v206, 4294901760
    %208 = vmatpush1.msra.mxu0 %v207
    %209 = vmatprep.subr.mxu0 0.0
    %v210 = vand.u32 %v94, 4294901760
    %v211 = vsub.f32 %v94, %v210
    %v212 = vand.u32 %v211, 4294901760
    %v213 = vsub.f32 %v211, %v212
    %v214 = vand.u32 %v213, 4294901760
    %215 = vmatpush1.msra.mxu0 %v214
    %216 = vmatprep.subr.mxu0 0.0
    %v217 = vand.u32 %v93, 4294901760
    %v218 = vsub.f32 %v93, %v217
    %v219 = vand.u32 %v218, 4294901760
    %v220 = vsub.f32 %v218, %v219
    %v221 = vand.u32 %v220, 4294901760
    %222 = vmatpush1.msra.mxu0 %v221
    %223 = vmatprep.subr.mxu0 0.0
    %v224 = vand.u32 %v92, 4294901760
    %v225 = vsub.f32 %v92, %v224
    %v226 = vand.u32 %v225, 4294901760
    %v227 = vsub.f32 %v225, %v226
    %v228 = vand.u32 %v227, 4294901760
    %229 = vmatpush1.msra.mxu0 %v228
    %230 = vmatprep.subr.mxu0 0.0
    %v231 = vand.u32 %v91, 4294901760
    %v232 = vsub.f32 %v91, %v231
    %v233 = vand.u32 %v232, 4294901760
    %v234 = vsub.f32 %v232, %v233
    %v235 = vand.u32 %v234, 4294901760
    %236 = vmatpush1.msra.mxu0 %v235
    %237 = vmatprep.subr.mxu0 0.0
    %v238 = vand.u32 %v90, 4294901760
    %v239 = vsub.f32 %v90, %v238
    %v240 = vand.u32 %v239, 4294901760
    %v241 = vsub.f32 %v239, %v240
    %v242 = vand.u32 %v241, 4294901760
    %243 = vmatpush1.msra.mxu0 %v242
    %244 = vmatprep.subr.mxu0 0.0
    %v245 = vand.u32 %v89, 4294901760
    %v246 = vsub.f32 %v89, %v245
    %v247 = vand.u32 %v246, 4294901760
    %v248 = vsub.f32 %v246, %v247
    %v249 = vand.u32 %v248, 4294901760
    %250 = vmatpush1.msra.mxu0 %v249
    %251 = vmatprep.subr.mxu0 0.0
    %v252 = vand.u32 %v88, 4294901760
    %v253 = vsub.f32 %v88, %v252
    %v254 = vand.u32 %v253, 4294901760
    %v255 = vsub.f32 %v253, %v254
    %v256 = vand.u32 %v255, 4294901760
    %257 = vmatpush1.msra.mxu0 %v256
    %258 = vmatprep.subr.mxu0 0.0
    %v259 = vand.u32 %v87, 4294901760
    %v260 = vsub.f32 %v87, %v259
    %v261 = vand.u32 %v260, 4294901760
    %v262 = vsub.f32 %v260, %v261
    %v263 = vand.u32 %v262, 4294901760
    %264 = vmatpush1.msra.mxu0 %v263
    %265 = vmatprep.subr.mxu0 0.0
    %v266 = vand.u32 %v86, 4294901760
    %v267 = vsub.f32 %v86, %v266
    %v268 = vand.u32 %v267, 4294901760
    %v269 = vsub.f32 %v267, %v268
    %v270 = vand.u32 %v269, 4294901760
    %271 = vmatpush1.msra.mxu0 %v270
    %272 = vmatprep.subr.mxu0 0.0
    %v273 = vand.u32 %v85, 4294901760
    %v274 = vsub.f32 %v85, %v273
    %v275 = vand.u32 %v274, 4294901760
    %v276 = vsub.f32 %v274, %v275
    %v277 = vand.u32 %v276, 4294901760
    %278 = vmatpush1.msra.mxu0 %v277
    %279 = vmatprep.subr.mxu0 0.0
    %v280 = vand.u32 %v84, 4294901760
    %v281 = vsub.f32 %v84, %v280
    %v282 = vand.u32 %v281, 4294901760
    %v283 = vsub.f32 %v281, %v282
    %v284 = vand.u32 %v283, 4294901760
    %285 = vmatpush1.msra.mxu0 %v284
    %286 = vmatprep.subr.mxu0 0.0
    %v287 = vand.u32 %v83, 4294901760
    %v288 = vsub.f32 %v83, %v287
    %v289 = vand.u32 %v288, 4294901760
    %v290 = vsub.f32 %v288, %v289
    %v291 = vand.u32 %v290, 4294901760
    %292 = vmatpush1.msra.mxu0 %v291
    %293 = vmatprep.subr.mxu0 0.0
    %v294 = vand.u32 %v82, 4294901760
    %v295 = vsub.f32 %v82, %v294
    %v296 = vand.u32 %v295, 4294901760
    %v297 = vsub.f32 %v295, %v296
    %v298 = vand.u32 %v297, 4294901760
    %299 = vmatpush1.msra.mxu0 %v298
    %300 = vmatprep.subr.mxu0 0.0
    %v301 = vand.u32 %v81, 4294901760
    %v302 = vsub.f32 %v81, %v301
    %v303 = vand.u32 %v302, 4294901760
    %v304 = vsub.f32 %v302, %v303
    %v305 = vand.u32 %v304, 4294901760
    %306 = vmatpush1.msra.mxu0 %v305
    %307 = vmatprep.subr.mxu0 0.0
    %308 = vmatpush2.msra.mxu0 0.0
    %309 = vmatprep.subr.mxu0 0.0
    %310 = vmatpush2.msra.mxu0 0.0
    %311 = vmatprep.subr.mxu0 0.0
    %312 = vmatpush2.msra.mxu0 0.0
    %313 = vmatprep.subr.mxu0 0.0
    %314 = vmatpush2.msra.mxu0 0.0
    %315 = vmatprep.subr.mxu0 0.0
    %316 = vmatpush2.msra.mxu0 0.0
    %317 = vmatprep.subr.mxu0 0.0
    %318 = vmatpush2.msra.mxu0 0.0
    %319 = vmatprep.subr.mxu0 0.0
    %320 = vmatpush2.msra.mxu0 0.0
    %321 = vmatprep.subr.mxu0 0.0
    %322 = vmatpush2.msra.mxu0 0.0
    %323 = vmatprep.subr.mxu0 0.0
    %324 = vmatpush2.msra.mxu0 0.0
    %325 = vmatprep.subr.mxu0 0.0
    %326 = vmatpush2.msra.mxu0 0.0
    %327 = vmatprep.subr.mxu0 0.0
    %328 = vmatpush2.msra.mxu0 0.0
    %329 = vmatprep.subr.mxu0 0.0
    %330 = vmatpush2.msra.mxu0 0.0
    %331 = vmatprep.subr.mxu0 0.0
    %332 = vmatpush2.msra.mxu0 0.0
    %333 = vmatprep.subr.mxu0 0.0
    %334 = vmatpush2.msra.mxu0 0.0
    %335 = vmatprep.subr.mxu0 0.0
    %336 = vmatpush2.msra.mxu0 0.0
    %337 = vmatprep.subr.mxu0 0.0
    %338 = vmatpush2.msra.mxu0 0.0
    %339 = vmatprep.mubr.f32.mxu0 0.0
    %v340 = vand.u32 %v80, 4294901760
    %341 = vmatmul.mubr.f32.gmra.mxu0 %v340
    %v342 = vpop.f32.mrf.mxu0
    %v343 = vadd.f32 %v192, %v342
    %v344 = vpop.f32.mrf.mxu0
    %345 = vdwg.mxu0
    %346 = vmatprep.subr.mxu0 0.0
    %v347 = vand.u32 %v96, 4294901760
    %v348 = vsub.f32 %v96, %v347
    %349 = vmatpush1.msra.mxu0 %v348
    %350 = vmatprep.subr.mxu0 0.0
    %v351 = vand.u32 %v95, 4294901760
    %v352 = vsub.f32 %v95, %v351
    %353 = vmatpush1.msra.mxu0 %v352
    %354 = vmatprep.subr.mxu0 0.0
    %v355 = vand.u32 %v94, 4294901760
    %v356 = vsub.f32 %v94, %v355
    %357 = vmatpush1.msra.mxu0 %v356
    %358 = vmatprep.subr.mxu0 0.0
    %v359 = vand.u32 %v93, 4294901760
    %v360 = vsub.f32 %v93, %v359
    %361 = vmatpush1.msra.mxu0 %v360
    %362 = vmatprep.subr.mxu0 0.0
    %v363 = vand.u32 %v92, 4294901760
    %v364 = vsub.f32 %v92, %v363
    %365 = vmatpush1.msra.mxu0 %v364
    %366 = vmatprep.subr.mxu0 0.0
    %v367 = vand.u32 %v91, 4294901760
    %v368 = vsub.f32 %v91, %v367
    %369 = vmatpush1.msra.mxu0 %v368
    %370 = vmatprep.subr.mxu0 0.0
    %v371 = vand.u32 %v90, 4294901760
    %v372 = vsub.f32 %v90, %v371
    %373 = vmatpush1.msra.mxu0 %v372
    %374 = vmatprep.subr.mxu0 0.0
    %v375 = vand.u32 %v89, 4294901760
    %v376 = vsub.f32 %v89, %v375
    %377 = vmatpush1.msra.mxu0 %v376
    %378 = vmatprep.subr.mxu0 0.0
    %v379 = vand.u32 %v88, 4294901760
    %v380 = vsub.f32 %v88, %v379
    %381 = vmatpush1.msra.mxu0 %v380
    %382 = vmatprep.subr.mxu0 0.0
    %v383 = vand.u32 %v87, 4294901760
    %v384 = vsub.f32 %v87, %v383
    %385 = vmatpush1.msra.mxu0 %v384
    %386 = vmatprep.subr.mxu0 0.0
    %v387 = vand.u32 %v86, 4294901760
    %v388 = vsub.f32 %v86, %v387
    %389 = vmatpush1.msra.mxu0 %v388
    %390 = vmatprep.subr.mxu0 0.0
    %v391 = vand.u32 %v85, 4294901760
    %v392 = vsub.f32 %v85, %v391
    %393 = vmatpush1.msra.mxu0 %v392
    %394 = vmatprep.subr.mxu0 0.0
    %v395 = vand.u32 %v84, 4294901760
    %v396 = vsub.f32 %v84, %v395
    %397 = vmatpush1.msra.mxu0 %v396
    %398 = vmatprep.subr.mxu0 0.0
    %v399 = vand.u32 %v83, 4294901760
    %v400 = vsub.f32 %v83, %v399
    %401 = vmatpush1.msra.mxu0 %v400
    %402 = vmatprep.subr.mxu0 0.0
    %v403 = vand.u32 %v82, 4294901760
    %v404 = vsub.f32 %v82, %v403
    %405 = vmatpush1.msra.mxu0 %v404
    %406 = vmatprep.subr.mxu0 0.0
    %v407 = vand.u32 %v81, 4294901760
    %v408 = vsub.f32 %v81, %v407
    %409 = vmatpush1.msra.mxu0 %v408
    %410 = vmatprep.subr.mxu0 0.0
    %411 = vmatpush2.msra.mxu0 0.0
    %412 = vmatprep.subr.mxu0 0.0
    %413 = vmatpush2.msra.mxu0 0.0
    %414 = vmatprep.subr.mxu0 0.0
    %415 = vmatpush2.msra.mxu0 0.0
    %416 = vmatprep.subr.mxu0 0.0
    %417 = vmatpush2.msra.mxu0 0.0
    %418 = vmatprep.subr.mxu0 0.0
    %419 = vmatpush2.msra.mxu0 0.0
    %420 = vmatprep.subr.mxu0 0.0
    %421 = vmatpush2.msra.mxu0 0.0
    %422 = vmatprep.subr.mxu0 0.0
    %423 = vmatpush2.msra.mxu0 0.0
    %424 = vmatprep.subr.mxu0 0.0
    %425 = vmatpush2.msra.mxu0 0.0
    %426 = vmatprep.subr.mxu0 0.0
    %427 = vmatpush2.msra.mxu0 0.0
    %428 = vmatprep.subr.mxu0 0.0
    %429 = vmatpush2.msra.mxu0 0.0
    %430 = vmatprep.subr.mxu0 0.0
    %431 = vmatpush2.msra.mxu0 0.0
    %432 = vmatprep.subr.mxu0 0.0
    %433 = vmatpush2.msra.mxu0 0.0
    %434 = vmatprep.subr.mxu0 0.0
    %435 = vmatpush2.msra.mxu0 0.0
    %436 = vmatprep.subr.mxu0 0.0
    %437 = vmatpush2.msra.mxu0 0.0
    %438 = vmatprep.subr.mxu0 0.0
    %439 = vmatpush2.msra.mxu0 0.0
    %440 = vmatprep.subr.mxu0 0.0
    %441 = vmatpush2.msra.mxu0 0.0
    %442 = vmatprep.mubr.f32.mxu0 0.0
    %v443 = vand.u32 %v80, 4294901760
    %v444 = vsub.f32 %v80, %v443
    %445 = vmatmul.mubr.f32.gmra.mxu0 %v444
    %v446 = vpop.f32.mrf.mxu0
    %v447 = vadd.f32 %v343, %v446
    %v448 = vpop.f32.mrf.mxu0
    %449 = vdwg.mxu0
    %450 = vmatprep.subr.mxu0 0.0
    %v451 = vand.u32 %v96, 4294901760
    %452 = vmatpush1.msra.mxu0 %v451
    %453 = vmatprep.subr.mxu0 0.0
    %v454 = vand.u32 %v95, 4294901760
    %455 = vmatpush1.msra.mxu0 %v454
    %456 = vmatprep.subr.mxu0 0.0
    %v457 = vand.u32 %v94, 4294901760
    %458 = vmatpush1.msra.mxu0 %v457
    %459 = vmatprep.subr.mxu0 0.0
    %v460 = vand.u32 %v93, 4294901760
    %461 = vmatpush1.msra.mxu0 %v460
    %462 = vmatprep.subr.mxu0 0.0
    %v463 = vand.u32 %v92, 4294901760
    %464 = vmatpush1.msra.mxu0 %v463
    %465 = vmatprep.subr.mxu0 0.0
    %v466 = vand.u32 %v91, 4294901760
    %467 = vmatpush1.msra.mxu0 %v466
    %468 = vmatprep.subr.mxu0 0.0
    %v469 = vand.u32 %v90, 4294901760
    %470 = vmatpush1.msra.mxu0 %v469
    %471 = vmatprep.subr.mxu0 0.0
    %v472 = vand.u32 %v89, 4294901760
    %473 = vmatpush1.msra.mxu0 %v472
    %474 = vmatprep.subr.mxu0 0.0
    %v475 = vand.u32 %v88, 4294901760
    %476 = vmatpush1.msra.mxu0 %v475
    %477 = vmatprep.subr.mxu0 0.0
    %v478 = vand.u32 %v87, 4294901760
    %479 = vmatpush1.msra.mxu0 %v478
    %480 = vmatprep.subr.mxu0 0.0
    %v481 = vand.u32 %v86, 4294901760
    %482 = vmatpush1.msra.mxu0 %v481
    %483 = vmatprep.subr.mxu0 0.0
    %v484 = vand.u32 %v85, 4294901760
    %485 = vmatpush1.msra.mxu0 %v484
    %486 = vmatprep.subr.mxu0 0.0
    %v487 = vand.u32 %v84, 4294901760
    %488 = vmatpush1.msra.mxu0 %v487
    %489 = vmatprep.subr.mxu0 0.0
    %v490 = vand.u32 %v83, 4294901760
    %491 = vmatpush1.msra.mxu0 %v490
    %492 = vmatprep.subr.mxu0 0.0
    %v493 = vand.u32 %v82, 4294901760
    %494 = vmatpush1.msra.mxu0 %v493
    %495 = vmatprep.subr.mxu0 0.0
    %v496 = vand.u32 %v81, 4294901760
    %497 = vmatpush1.msra.mxu0 %v496
    %498 = vmatprep.subr.mxu0 0.0
    %499 = vmatpush2.msra.mxu0 0.0
    %500 = vmatprep.subr.mxu0 0.0
    %501 = vmatpush2.msra.mxu0 0.0
    %502 = vmatprep.subr.mxu0 0.0
    %503 = vmatpush2.msra.mxu0 0.0
    %504 = vmatprep.subr.mxu0 0.0
    %505 = vmatpush2.msra.mxu0 0.0
    %506 = vmatprep.subr.mxu0 0.0
    %507 = vmatpush2.msra.mxu0 0.0
    %508 = vmatprep.subr.mxu0 0.0
    %509 = vmatpush2.msra.mxu0 0.0
    %510 = vmatprep.subr.mxu0 0.0
    %511 = vmatpush2.msra.mxu0 0.0
    %512 = vmatprep.subr.mxu0 0.0
    %513 = vmatpush2.msra.mxu0 0.0
    %514 = vmatprep.subr.mxu0 0.0
    %515 = vmatpush2.msra.mxu0 0.0
    %516 = vmatprep.subr.mxu0 0.0
    %517 = vmatpush2.msra.mxu0 0.0
    %518 = vmatprep.subr.mxu0 0.0
    %519 = vmatpush2.msra.mxu0 0.0
    %520 = vmatprep.subr.mxu0 0.0
    %521 = vmatpush2.msra.mxu0 0.0
    %522 = vmatprep.subr.mxu0 0.0
    %523 = vmatpush2.msra.mxu0 0.0
    %524 = vmatprep.subr.mxu0 0.0
    %525 = vmatpush2.msra.mxu0 0.0
    %526 = vmatprep.subr.mxu0 0.0
    %527 = vmatpush2.msra.mxu0 0.0
    %528 = vmatprep.subr.mxu0 0.0
    %529 = vmatpush2.msra.mxu0 0.0
    %530 = vmatprep.mubr.f32.mxu0 0.0
    %v531 = vand.u32 %v80, 4294901760
    %v532 = vsub.f32 %v80, %v531
    %v533 = vand.u32 %v532, 4294901760
    %534 = vmatmul.mubr.f32.gmra.mxu0 %v533
    %v535 = vpop.f32.mrf.mxu0
    %v536 = vadd.f32 %v447, %v535
    %v537 = vpop.f32.mrf.mxu0
    %538 = vdwg.mxu0
    %539 = vmatprep.subr.mxu0 0.0
    %v540 = vand.u32 %v96, 4294901760
    %v541 = vsub.f32 %v96, %v540
    %v542 = vand.u32 %v541, 4294901760
    %543 = vmatpush1.msra.mxu0 %v542
    %544 = vmatprep.subr.mxu0 0.0
    %v545 = vand.u32 %v95, 4294901760
    %v546 = vsub.f32 %v95, %v545
    %v547 = vand.u32 %v546, 4294901760
    %548 = vmatpush1.msra.mxu0 %v547
    %549 = vmatprep.subr.mxu0 0.0
    %v550 = vand.u32 %v94, 4294901760
    %v551 = vsub.f32 %v94, %v550
    %v552 = vand.u32 %v551, 4294901760
    %553 = vmatpush1.msra.mxu0 %v552
    %554 = vmatprep.subr.mxu0 0.0
    %v555 = vand.u32 %v93, 4294901760
    %v556 = vsub.f32 %v93, %v555
    %v557 = vand.u32 %v556, 4294901760
    %558 = vmatpush1.msra.mxu0 %v557
    %559 = vmatprep.subr.mxu0 0.0
    %v560 = vand.u32 %v92, 4294901760
    %v561 = vsub.f32 %v92, %v560
    %v562 = vand.u32 %v561, 4294901760
    %563 = vmatpush1.msra.mxu0 %v562
    %564 = vmatprep.subr.mxu0 0.0
    %v565 = vand.u32 %v91, 4294901760
    %v566 = vsub.f32 %v91, %v565
    %v567 = vand.u32 %v566, 4294901760
    %568 = vmatpush1.msra.mxu0 %v567
    %569 = vmatprep.subr.mxu0 0.0
    %v570 = vand.u32 %v90, 4294901760
    %v571 = vsub.f32 %v90, %v570
    %v572 = vand.u32 %v571, 4294901760
    %573 = vmatpush1.msra.mxu0 %v572
    %574 = vmatprep.subr.mxu0 0.0
    %v575 = vand.u32 %v89, 4294901760
    %v576 = vsub.f32 %v89, %v575
    %v577 = vand.u32 %v576, 4294901760
    %578 = vmatpush1.msra.mxu0 %v577
    %579 = vmatprep.subr.mxu0 0.0
    %v580 = vand.u32 %v88, 4294901760
    %v581 = vsub.f32 %v88, %v580
    %v582 = vand.u32 %v581, 4294901760
    %583 = vmatpush1.msra.mxu0 %v582
    %584 = vmatprep.subr.mxu0 0.0
    %v585 = vand.u32 %v87, 4294901760
    %v586 = vsub.f32 %v87, %v585
    %v587 = vand.u32 %v586, 4294901760
    %588 = vmatpush1.msra.mxu0 %v587
    %589 = vmatprep.subr.mxu0 0.0
    %v590 = vand.u32 %v86, 4294901760
    %v591 = vsub.f32 %v86, %v590
    %v592 = vand.u32 %v591, 4294901760
    %593 = vmatpush1.msra.mxu0 %v592
    %594 = vmatprep.subr.mxu0 0.0
    %v595 = vand.u32 %v85, 4294901760
    %v596 = vsub.f32 %v85, %v595
    %v597 = vand.u32 %v596, 4294901760
    %598 = vmatpush1.msra.mxu0 %v597
    %599 = vmatprep.subr.mxu0 0.0
    %v600 = vand.u32 %v84, 4294901760
    %v601 = vsub.f32 %v84, %v600
    %v602 = vand.u32 %v601, 4294901760
    %603 = vmatpush1.msra.mxu0 %v602
    %604 = vmatprep.subr.mxu0 0.0
    %v605 = vand.u32 %v83, 4294901760
    %v606 = vsub.f32 %v83, %v605
    %v607 = vand.u32 %v606, 4294901760
    %608 = vmatpush1.msra.mxu0 %v607
    %609 = vmatprep.subr.mxu0 0.0
    %v610 = vand.u32 %v82, 4294901760
    %v611 = vsub.f32 %v82, %v610
    %v612 = vand.u32 %v611, 4294901760
    %613 = vmatpush1.msra.mxu0 %v612
    %614 = vmatprep.subr.mxu0 0.0
    %v615 = vand.u32 %v81, 4294901760
    %v616 = vsub.f32 %v81, %v615
    %v617 = vand.u32 %v616, 4294901760
    %618 = vmatpush1.msra.mxu0 %v617
    %619 = vmatprep.subr.mxu0 0.0
    %620 = vmatpush2.msra.mxu0 0.0
    %621 = vmatprep.subr.mxu0 0.0
    %622 = vmatpush2.msra.mxu0 0.0
    %623 = vmatprep.subr.mxu0 0.0
    %624 = vmatpush2.msra.mxu0 0.0
    %625 = vmatprep.subr.mxu0 0.0
    %626 = vmatpush2.msra.mxu0 0.0
    %627 = vmatprep.subr.mxu0 0.0
    %628 = vmatpush2.msra.mxu0 0.0
    %629 = vmatprep.subr.mxu0 0.0
    %630 = vmatpush2.msra.mxu0 0.0
    %631 = vmatprep.subr.mxu0 0.0
    %632 = vmatpush2.msra.mxu0 0.0
    %633 = vmatprep.subr.mxu0 0.0
    %634 = vmatpush2.msra.mxu0 0.0
    %635 = vmatprep.subr.mxu0 0.0
    %636 = vmatpush2.msra.mxu0 0.0
    %637 = vmatprep.subr.mxu0 0.0
    %638 = vmatpush2.msra.mxu0 0.0
    %639 = vmatprep.subr.mxu0 0.0
    %640 = vmatpush2.msra.mxu0 0.0
    %641 = vmatprep.subr.mxu0 0.0
    %642 = vmatpush2.msra.mxu0 0.0
    %643 = vmatprep.subr.mxu0 0.0
    %644 = vmatpush2.msra.mxu0 0.0
    %645 = vmatprep.subr.mxu0 0.0
    %646 = vmatpush2.msra.mxu0 0.0
    %647 = vmatprep.subr.mxu0 0.0
    %648 = vmatpush2.msra.mxu0 0.0
    %649 = vmatprep.subr.mxu0 0.0
    %650 = vmatpush2.msra.mxu0 0.0
    %651 = vmatprep.mubr.f32.mxu0 0.0
    %v652 = vand.u32 %v80, 4294901760
    %653 = vmatmul.mubr.f32.gmra.mxu0 %v652
    %v654 = vpop.f32.mrf.mxu0
    %v655 = vadd.f32 %v536, %v654
    %v656 = vpop.f32.mrf.mxu0
    %657 = vdwg.mxu0
    %658 = vmatprep.subr.mxu0 0.0
    %v659 = vand.u32 %v96, 4294901760
    %660 = vmatpush1.msra.mxu0 %v659
    %661 = vmatprep.subr.mxu0 0.0
    %v662 = vand.u32 %v95, 4294901760
    %663 = vmatpush1.msra.mxu0 %v662
    %664 = vmatprep.subr.mxu0 0.0
    %v665 = vand.u32 %v94, 4294901760
    %666 = vmatpush1.msra.mxu0 %v665
    %667 = vmatprep.subr.mxu0 0.0
    %v668 = vand.u32 %v93, 4294901760
    %669 = vmatpush1.msra.mxu0 %v668
    %670 = vmatprep.subr.mxu0 0.0
    %v671 = vand.u32 %v92, 4294901760
    %672 = vmatpush1.msra.mxu0 %v671
    %673 = vmatprep.subr.mxu0 0.0
    %v674 = vand.u32 %v91, 4294901760
    %675 = vmatpush1.msra.mxu0 %v674
    %676 = vmatprep.subr.mxu0 0.0
    %v677 = vand.u32 %v90, 4294901760
    %678 = vmatpush1.msra.mxu0 %v677
    %679 = vmatprep.subr.mxu0 0.0
    %v680 = vand.u32 %v89, 4294901760
    %681 = vmatpush1.msra.mxu0 %v680
    %682 = vmatprep.subr.mxu0 0.0
    %v683 = vand.u32 %v88, 4294901760
    %684 = vmatpush1.msra.mxu0 %v683
    %685 = vmatprep.subr.mxu0 0.0
    %v686 = vand.u32 %v87, 4294901760
    %687 = vmatpush1.msra.mxu0 %v686
    %688 = vmatprep.subr.mxu0 0.0
    %v689 = vand.u32 %v86, 4294901760
    %690 = vmatpush1.msra.mxu0 %v689
    %691 = vmatprep.subr.mxu0 0.0
    %v692 = vand.u32 %v85, 4294901760
    %693 = vmatpush1.msra.mxu0 %v692
    %694 = vmatprep.subr.mxu0 0.0
    %v695 = vand.u32 %v84, 4294901760
    %696 = vmatpush1.msra.mxu0 %v695
    %697 = vmatprep.subr.mxu0 0.0
    %v698 = vand.u32 %v83, 4294901760
    %699 = vmatpush1.msra.mxu0 %v698
    %700 = vmatprep.subr.mxu0 0.0
    %v701 = vand.u32 %v82, 4294901760
    %702 = vmatpush1.msra.mxu0 %v701
    %703 = vmatprep.subr.mxu0 0.0
    %v704 = vand.u32 %v81, 4294901760
    %705 = vmatpush1.msra.mxu0 %v704
    %706 = vmatprep.subr.mxu0 0.0
    %707 = vmatpush2.msra.mxu0 0.0
    %708 = vmatprep.subr.mxu0 0.0
    %709 = vmatpush2.msra.mxu0 0.0
    %710 = vmatprep.subr.mxu0 0.0
    %711 = vmatpush2.msra.mxu0 0.0
    %712 = vmatprep.subr.mxu0 0.0
    %713 = vmatpush2.msra.mxu0 0.0
    %714 = vmatprep.subr.mxu0 0.0
    %715 = vmatpush2.msra.mxu0 0.0
    %716 = vmatprep.subr.mxu0 0.0
    %717 = vmatpush2.msra.mxu0 0.0
    %718 = vmatprep.subr.mxu0 0.0
    %719 = vmatpush2.msra.mxu0 0.0
    %720 = vmatprep.subr.mxu0 0.0
    %721 = vmatpush2.msra.mxu0 0.0
    %722 = vmatprep.subr.mxu0 0.0
    %723 = vmatpush2.msra.mxu0 0.0
    %724 = vmatprep.subr.mxu0 0.0
    %725 = vmatpush2.msra.mxu0 0.0
    %726 = vmatprep.subr.mxu0 0.0
    %727 = vmatpush2.msra.mxu0 0.0
    %728 = vmatprep.subr.mxu0 0.0
    %729 = vmatpush2.msra.mxu0 0.0
    %730 = vmatprep.subr.mxu0 0.0
    %731 = vmatpush2.msra.mxu0 0.0
    %732 = vmatprep.subr.mxu0 0.0
    %733 = vmatpush2.msra.mxu0 0.0
    %734 = vmatprep.subr.mxu0 0.0
    %735 = vmatpush2.msra.mxu0 0.0
    %736 = vmatprep.subr.mxu0 0.0
    %737 = vmatpush2.msra.mxu0 0.0
    %738 = vmatprep.mubr.f32.mxu0 0.0
    %v739 = vand.u32 %v80, 4294901760
    %740 = vmatmul.mubr.f32.gmra.mxu0 %v739
    %v741 = vpop.f32.mrf.mxu0
    %v742 = vadd.f32 %v655, %v741
    %v743 = vpop.f32.mrf.mxu0
    %744 = vdwg.mxu0
    %v745 = vxor.u32 %v742, 2147483648
    %v746 = vmul.f32 %v745, 1.442695
    %v747 = vpow.pop %v746
    %v748 = vadd.f32 %v747, 1.0
    %v749 = vrcp.pop %v748
    %v750 = vmul.f32 1.0, %v749
    %v751 = vld [vmem:[#allocation7] sm:$0xff]
    %v752 = vld [vmem:[#allocation7 + $0x8] sm:$0xff]
    %v753 = vld [vmem:[#allocation7 + $0x10] sm:$0xff]
    %v754 = vld [vmem:[#allocation7 + $0x18] sm:$0xff]
    %v755 = vld [vmem:[#allocation7 + $0x20] sm:$0xff]
    %v756 = vld [vmem:[#allocation7 + $0x28] sm:$0xff]
    %v757 = vld [vmem:[#allocation7 + $0x30] sm:$0xff]
    %v758 = vld [vmem:[#allocation7 + $0x38] sm:$0xff]
    %v759 = vld [vmem:[#allocation7 + $0x40] sm:$0xff]
    %v760 = vld [vmem:[#allocation7 + $0x48] sm:$0xff]
    %v761 = vld [vmem:[#allocation7 + $0x50] sm:$0xff]
    %v762 = vld [vmem:[#allocation7 + $0x58] sm:$0xff]
    %v763 = vld [vmem:[#allocation7 + $0x60] sm:$0xff]
    %v764 = vld [vmem:[#allocation7 + $0x68] sm:$0xff]
    %v765 = vld [vmem:[#allocation7 + $0x70] sm:$0xff]
    %v766 = vld [vmem:[#allocation7 + $0x78] sm:$0xff]
    %v767 = vld [vmem:[%s4] sm:$0x1]
    %v769 = vlaneseq
    %v770 = vshrl.u32 %v769, 7
    %v771 = vsub.s32 0, %v770
    %v772 = vrot.slane %v767, %v771
    %774 = vmatprep.subr.mxu0 0.0
    %v775 = vand.u32 %v766, 4294901760
    %776 = vmatpush1.msra.mxu0 %v775
    %777 = vmatprep.subr.mxu0 0.0
    %v778 = vand.u32 %v765, 4294901760
    %779 = vmatpush1.msra.mxu0 %v778
    %780 = vmatprep.subr.mxu0 0.0
    %v781 = vand.u32 %v764, 4294901760
    %782 = vmatpush1.msra.mxu0 %v781
    %783 = vmatprep.subr.mxu0 0.0
    %v784 = vand.u32 %v763, 4294901760
    %785 = vmatpush1.msra.mxu0 %v784
    %786 = vmatprep.subr.mxu0 0.0
    %v787 = vand.u32 %v762, 4294901760
    %788 = vmatpush1.msra.mxu0 %v787
    %789 = vmatprep.subr.mxu0 0.0
    %v790 = vand.u32 %v761, 4294901760
    %791 = vmatpush1.msra.mxu0 %v790
    %792 = vmatprep.subr.mxu0 0.0
    %v793 = vand.u32 %v760, 4294901760
    %794 = vmatpush1.msra.mxu0 %v793
    %795 = vmatprep.subr.mxu0 0.0
    %v796 = vand.u32 %v759, 4294901760
    %797 = vmatpush1.msra.mxu0 %v796
    %798 = vmatprep.subr.mxu0 0.0
    %v799 = vand.u32 %v758, 4294901760
    %800 = vmatpush1.msra.mxu0 %v799
    %801 = vmatprep.subr.mxu0 0.0
    %v802 = vand.u32 %v757, 4294901760
    %803 = vmatpush1.msra.mxu0 %v802
    %804 = vmatprep.subr.mxu0 0.0
    %v805 = vand.u32 %v756, 4294901760
    %806 = vmatpush1.msra.mxu0 %v805
    %807 = vmatprep.subr.mxu0 0.0
    %v808 = vand.u32 %v755, 4294901760
    %809 = vmatpush1.msra.mxu0 %v808
    %810 = vmatprep.subr.mxu0 0.0
    %v811 = vand.u32 %v754, 4294901760
    %812 = vmatpush1.msra.mxu0 %v811
    %813 = vmatprep.subr.mxu0 0.0
    %v814 = vand.u32 %v753, 4294901760
    %815 = vmatpush1.msra.mxu0 %v814
    %816 = vmatprep.subr.mxu0 0.0
    %v817 = vand.u32 %v752, 4294901760
    %818 = vmatpush1.msra.mxu0 %v817
    %819 = vmatprep.subr.mxu0 0.0
    %v820 = vand.u32 %v751, 4294901760
    %821 = vmatpush1.msra.mxu0 %v820
    %822 = vmatprep.subr.mxu0 0.0
    %823 = vmatpush2.msra.mxu0 0.0
    %824 = vmatprep.subr.mxu0 0.0
    %825 = vmatpush2.msra.mxu0 0.0
    %826 = vmatprep.subr.mxu0 0.0
    %827 = vmatpush2.msra.mxu0 0.0
    %828 = vmatprep.subr.mxu0 0.0
    %829 = vmatpush2.msra.mxu0 0.0
    %830 = vmatprep.subr.mxu0 0.0
    %831 = vmatpush2.msra.mxu0 0.0
    %832 = vmatprep.subr.mxu0 0.0
    %833 = vmatpush2.msra.mxu0 0.0
    %834 = vmatprep.subr.mxu0 0.0
    %835 = vmatpush2.msra.mxu0 0.0
    %836 = vmatprep.subr.mxu0 0.0
    %837 = vmatpush2.msra.mxu0 0.0
    %838 = vmatprep.subr.mxu0 0.0
    %839 = vmatpush2.msra.mxu0 0.0
    %840 = vmatprep.subr.mxu0 0.0
    %841 = vmatpush2.msra.mxu0 0.0
    %842 = vmatprep.subr.mxu0 0.0
    %843 = vmatpush2.msra.mxu0 0.0
    %844 = vmatprep.subr.mxu0 0.0
    %845 = vmatpush2.msra.mxu0 0.0
    %846 = vmatprep.subr.mxu0 0.0
    %847 = vmatpush2.msra.mxu0 0.0
    %848 = vmatprep.subr.mxu0 0.0
    %849 = vmatpush2.msra.mxu0 0.0
    %850 = vmatprep.subr.mxu0 0.0
    %851 = vmatpush2.msra.mxu0 0.0
    %852 = vmatprep.subr.mxu0 0.0
    %853 = vmatpush2.msra.mxu0 0.0
    %854 = vmatprep.mubr.f32.mxu0 0.0
    %v855 = vand.u32 %v750, 4294901760
    %v856 = vsub.f32 %v750, %v855
    %v857 = vand.u32 %v856, 4294901760
    %v858 = vsub.f32 %v856, %v857
    %v859 = vand.u32 %v858, 4294901760
    %860 = vmatmul.mubr.f32.gmra.mxu0 %v859
    %v861 = vpop.f32.mrf.mxu0
    %v862 = vadd.f32 %v772, %v861
    %v863 = vpop.f32.mrf.mxu0
    %864 = vdwg.mxu0
    %865 = vmatprep.subr.mxu0 0.0
    %v866 = vand.u32 %v766, 4294901760
    %v867 = vsub.f32 %v766, %v866
    %v868 = vand.u32 %v867, 4294901760
    %v869 = vsub.f32 %v867, %v868
    %v870 = vand.u32 %v869, 4294901760
    %871 = vmatpush1.msra.mxu0 %v870
    %872 = vmatprep.subr.mxu0 0.0
    %v873 = vand.u32 %v765, 4294901760
    %v874 = vsub.f32 %v765, %v873
    %v875 = vand.u32 %v874, 4294901760
    %v876 = vsub.f32 %v874, %v875
    %v877 = vand.u32 %v876, 4294901760
    %878 = vmatpush1.msra.mxu0 %v877
    %879 = vmatprep.subr.mxu0 0.0
    %v880 = vand.u32 %v764, 4294901760
    %v881 = vsub.f32 %v764, %v880
    %v882 = vand.u32 %v881, 4294901760
    %v883 = vsub.f32 %v881, %v882
    %v884 = vand.u32 %v883, 4294901760
    %885 = vmatpush1.msra.mxu0 %v884
    %886 = vmatprep.subr.mxu0 0.0
    %v887 = vand.u32 %v763, 4294901760
    %v888 = vsub.f32 %v763, %v887
    %v889 = vand.u32 %v888, 4294901760
    %v890 = vsub.f32 %v888, %v889
    %v891 = vand.u32 %v890, 4294901760
    %892 = vmatpush1.msra.mxu0 %v891
    %893 = vmatprep.subr.mxu0 0.0
    %v894 = vand.u32 %v762, 4294901760
    %v895 = vsub.f32 %v762, %v894
    %v896 = vand.u32 %v895, 4294901760
    %v897 = vsub.f32 %v895, %v896
    %v898 = vand.u32 %v897, 4294901760
    %899 = vmatpush1.msra.mxu0 %v898
    %900 = vmatprep.subr.mxu0 0.0
    %v901 = vand.u32 %v761, 4294901760
    %v902 = vsub.f32 %v761, %v901
    %v903 = vand.u32 %v902, 4294901760
    %v904 = vsub.f32 %v902, %v903
    %v905 = vand.u32 %v904, 4294901760
    %906 = vmatpush1.msra.mxu0 %v905
    %907 = vmatprep.subr.mxu0 0.0
    %v908 = vand.u32 %v760, 4294901760
    %v909 = vsub.f32 %v760, %v908
    %v910 = vand.u32 %v909, 4294901760
    %v911 = vsub.f32 %v909, %v910
    %v912 = vand.u32 %v911, 4294901760
    %913 = vmatpush1.msra.mxu0 %v912
    %914 = vmatprep.subr.mxu0 0.0
    %v915 = vand.u32 %v759, 4294901760
    %v916 = vsub.f32 %v759, %v915
    %v917 = vand.u32 %v916, 4294901760
    %v918 = vsub.f32 %v916, %v917
    %v919 = vand.u32 %v918, 4294901760
    %920 = vmatpush1.msra.mxu0 %v919
    %921 = vmatprep.subr.mxu0 0.0
    %v922 = vand.u32 %v758, 4294901760
    %v923 = vsub.f32 %v758, %v922
    %v924 = vand.u32 %v923, 4294901760
    %v925 = vsub.f32 %v923, %v924
    %v926 = vand.u32 %v925, 4294901760
    %927 = vmatpush1.msra.mxu0 %v926
    %928 = vmatprep.subr.mxu0 0.0
    %v929 = vand.u32 %v757, 4294901760
    %v930 = vsub.f32 %v757, %v929
    %v931 = vand.u32 %v930, 4294901760
    %v932 = vsub.f32 %v930, %v931
    %v933 = vand.u32 %v932, 4294901760
    %934 = vmatpush1.msra.mxu0 %v933
    %935 = vmatprep.subr.mxu0 0.0
    %v936 = vand.u32 %v756, 4294901760
    %v937 = vsub.f32 %v756, %v936
    %v938 = vand.u32 %v937, 4294901760
    %v939 = vsub.f32 %v937, %v938
    %v940 = vand.u32 %v939, 4294901760
    %941 = vmatpush1.msra.mxu0 %v940
    %942 = vmatprep.subr.mxu0 0.0
    %v943 = vand.u32 %v755, 4294901760
    %v944 = vsub.f32 %v755, %v943
    %v945 = vand.u32 %v944, 4294901760
    %v946 = vsub.f32 %v944, %v945
    %v947 = vand.u32 %v946, 4294901760
    %948 = vmatpush1.msra.mxu0 %v947
    %949 = vmatprep.subr.mxu0 0.0
    %v950 = vand.u32 %v754, 4294901760
    %v951 = vsub.f32 %v754, %v950
    %v952 = vand.u32 %v951, 4294901760
    %v953 = vsub.f32 %v951, %v952
    %v954 = vand.u32 %v953, 4294901760
    %955 = vmatpush1.msra.mxu0 %v954
    %956 = vmatprep.subr.mxu0 0.0
    %v957 = vand.u32 %v753, 4294901760
    %v958 = vsub.f32 %v753, %v957
    %v959 = vand.u32 %v958, 4294901760
    %v960 = vsub.f32 %v958, %v959
    %v961 = vand.u32 %v960, 4294901760
    %962 = vmatpush1.msra.mxu0 %v961
    %963 = vmatprep.subr.mxu0 0.0
    %v964 = vand.u32 %v752, 4294901760
    %v965 = vsub.f32 %v752, %v964
    %v966 = vand.u32 %v965, 4294901760
    %v967 = vsub.f32 %v965, %v966
    %v968 = vand.u32 %v967, 4294901760
    %969 = vmatpush1.msra.mxu0 %v968
    %970 = vmatprep.subr.mxu0 0.0
    %v971 = vand.u32 %v751, 4294901760
    %v972 = vsub.f32 %v751, %v971
    %v973 = vand.u32 %v972, 4294901760
    %v974 = vsub.f32 %v972, %v973
    %v975 = vand.u32 %v974, 4294901760
    %976 = vmatpush1.msra.mxu0 %v975
    %977 = vmatprep.subr.mxu0 0.0
    %978 = vmatpush2.msra.mxu0 0.0
    %979 = vmatprep.subr.mxu0 0.0
    %980 = vmatpush2.msra.mxu0 0.0
    %981 = vmatprep.subr.mxu0 0.0
    %982 = vmatpush2.msra.mxu0 0.0
    %983 = vmatprep.subr.mxu0 0.0
    %984 = vmatpush2.msra.mxu0 0.0
    %985 = vmatprep.subr.mxu0 0.0
    %986 = vmatpush2.msra.mxu0 0.0
    %987 = vmatprep.subr.mxu0 0.0
    %988 = vmatpush2.msra.mxu0 0.0
    %989 = vmatprep.subr.mxu0 0.0
    %990 = vmatpush2.msra.mxu0 0.0
    %991 = vmatprep.subr.mxu0 0.0
    %992 = vmatpush2.msra.mxu0 0.0
    %993 = vmatprep.subr.mxu0 0.0
    %994 = vmatpush2.msra.mxu0 0.0
    %995 = vmatprep.subr.mxu0 0.0
    %996 = vmatpush2.msra.mxu0 0.0
    %997 = vmatprep.subr.mxu0 0.0
    %998 = vmatpush2.msra.mxu0 0.0
    %999 = vmatprep.subr.mxu0 0.0
    %1000 = vmatpush2.msra.mxu0 0.0
    %1001 = vmatprep.subr.mxu0 0.0
    %1002 = vmatpush2.msra.mxu0 0.0
    %1003 = vmatprep.subr.mxu0 0.0
    %1004 = vmatpush2.msra.mxu0 0.0
    %1005 = vmatprep.subr.mxu0 0.0
    %1006 = vmatpush2.msra.mxu0 0.0
    %1007 = vmatprep.subr.mxu0 0.0
    %1008 = vmatpush2.msra.mxu0 0.0
    %1009 = vmatprep.mubr.f32.mxu0 0.0
    %v1010 = vand.u32 %v750, 4294901760
    %1011 = vmatmul.mubr.f32.gmra.mxu0 %v1010
    %v1012 = vpop.f32.mrf.mxu0
    %v1013 = vadd.f32 %v862, %v1012
    %v1014 = vpop.f32.mrf.mxu0
    %1015 = vdwg.mxu0
    %1016 = vmatprep.subr.mxu0 0.0
    %v1017 = vand.u32 %v766, 4294901760
    %v1018 = vsub.f32 %v766, %v1017
    %1019 = vmatpush1.msra.mxu0 %v1018
    %1020 = vmatprep.subr.mxu0 0.0
    %v1021 = vand.u32 %v765, 4294901760
    %v1022 = vsub.f32 %v765, %v1021
    %1023 = vmatpush1.msra.mxu0 %v1022
    %1024 = vmatprep.subr.mxu0 0.0
    %v1025 = vand.u32 %v764, 4294901760
    %v1026 = vsub.f32 %v764, %v1025
    %1027 = vmatpush1.msra.mxu0 %v1026
    %1028 = vmatprep.subr.mxu0 0.0
    %v1029 = vand.u32 %v763, 4294901760
    %v1030 = vsub.f32 %v763, %v1029
    %1031 = vmatpush1.msra.mxu0 %v1030
    %1032 = vmatprep.subr.mxu0 0.0
    %v1033 = vand.u32 %v762, 4294901760
    %v1034 = vsub.f32 %v762, %v1033
    %1035 = vmatpush1.msra.mxu0 %v1034
    %1036 = vmatprep.subr.mxu0 0.0
    %v1037 = vand.u32 %v761, 4294901760
    %v1038 = vsub.f32 %v761, %v1037
    %1039 = vmatpush1.msra.mxu0 %v1038
    %1040 = vmatprep.subr.mxu0 0.0
    %v1041 = vand.u32 %v760, 4294901760
    %v1042 = vsub.f32 %v760, %v1041
    %1043 = vmatpush1.msra.mxu0 %v1042
    %1044 = vmatprep.subr.mxu0 0.0
    %v1045 = vand.u32 %v759, 4294901760
    %v1046 = vsub.f32 %v759, %v1045
    %1047 = vmatpush1.msra.mxu0 %v1046
    %1048 = vmatprep.subr.mxu0 0.0
    %v1049 = vand.u32 %v758, 4294901760
    %v1050 = vsub.f32 %v758, %v1049
    %1051 = vmatpush1.msra.mxu0 %v1050
    %1052 = vmatprep.subr.mxu0 0.0
    %v1053 = vand.u32 %v757, 4294901760
    %v1054 = vsub.f32 %v757, %v1053
    %1055 = vmatpush1.msra.mxu0 %v1054
    %1056 = vmatprep.subr.mxu0 0.0
    %v1057 = vand.u32 %v756, 4294901760
    %v1058 = vsub.f32 %v756, %v1057
    %1059 = vmatpush1.msra.mxu0 %v1058
    %1060 = vmatprep.subr.mxu0 0.0
    %v1061 = vand.u32 %v755, 4294901760
    %v1062 = vsub.f32 %v755, %v1061
    %1063 = vmatpush1.msra.mxu0 %v1062
    %1064 = vmatprep.subr.mxu0 0.0
    %v1065 = vand.u32 %v754, 4294901760
    %v1066 = vsub.f32 %v754, %v1065
    %1067 = vmatpush1.msra.mxu0 %v1066
    %1068 = vmatprep.subr.mxu0 0.0
    %v1069 = vand.u32 %v753, 4294901760
    %v1070 = vsub.f32 %v753, %v1069
    %1071 = vmatpush1.msra.mxu0 %v1070
    %1072 = vmatprep.subr.mxu0 0.0
    %v1073 = vand.u32 %v752, 4294901760
    %v1074 = vsub.f32 %v752, %v1073
    %1075 = vmatpush1.msra.mxu0 %v1074
    %1076 = vmatprep.subr.mxu0 0.0
    %v1077 = vand.u32 %v751, 4294901760
    %v1078 = vsub.f32 %v751, %v1077
    %1079 = vmatpush1.msra.mxu0 %v1078
    %1080 = vmatprep.subr.mxu0 0.0
    %1081 = vmatpush2.msra.mxu0 0.0
    %1082 = vmatprep.subr.mxu0 0.0
    %1083 = vmatpush2.msra.mxu0 0.0
    %1084 = vmatprep.subr.mxu0 0.0
    %1085 = vmatpush2.msra.mxu0 0.0
    %1086 = vmatprep.subr.mxu0 0.0
    %1087 = vmatpush2.msra.mxu0 0.0
    %1088 = vmatprep.subr.mxu0 0.0
    %1089 = vmatpush2.msra.mxu0 0.0
    %1090 = vmatprep.subr.mxu0 0.0
    %1091 = vmatpush2.msra.mxu0 0.0
    %1092 = vmatprep.subr.mxu0 0.0
    %1093 = vmatpush2.msra.mxu0 0.0
    %1094 = vmatprep.subr.mxu0 0.0
    %1095 = vmatpush2.msra.mxu0 0.0
    %1096 = vmatprep.subr.mxu0 0.0
    %1097 = vmatpush2.msra.mxu0 0.0
    %1098 = vmatprep.subr.mxu0 0.0
    %1099 = vmatpush2.msra.mxu0 0.0
    %1100 = vmatprep.subr.mxu0 0.0
    %1101 = vmatpush2.msra.mxu0 0.0
    %1102 = vmatprep.subr.mxu0 0.0
    %1103 = vmatpush2.msra.mxu0 0.0
    %1104 = vmatprep.subr.mxu0 0.0
    %1105 = vmatpush2.msra.mxu0 0.0
    %1106 = vmatprep.subr.mxu0 0.0
    %1107 = vmatpush2.msra.mxu0 0.0
    %1108 = vmatprep.subr.mxu0 0.0
    %1109 = vmatpush2.msra.mxu0 0.0
    %1110 = vmatprep.subr.mxu0 0.0
    %1111 = vmatpush2.msra.mxu0 0.0
    %1112 = vmatprep.mubr.f32.mxu0 0.0
    %v1113 = vand.u32 %v750, 4294901760
    %v1114 = vsub.f32 %v750, %v1113
    %1115 = vmatmul.mubr.f32.gmra.mxu0 %v1114
    %v1116 = vpop.f32.mrf.mxu0
    %v1117 = vadd.f32 %v1013, %v1116
    %v1118 = vpop.f32.mrf.mxu0
    %1119 = vdwg.mxu0
    %1120 = vmatprep.subr.mxu0 0.0
    %v1121 = vand.u32 %v766, 4294901760
    %1122 = vmatpush1.msra.mxu0 %v1121
    %1123 = vmatprep.subr.mxu0 0.0
    %v1124 = vand.u32 %v765, 4294901760
    %1125 = vmatpush1.msra.mxu0 %v1124
    %1126 = vmatprep.subr.mxu0 0.0
    %v1127 = vand.u32 %v764, 4294901760
    %1128 = vmatpush1.msra.mxu0 %v1127
    %1129 = vmatprep.subr.mxu0 0.0
    %v1130 = vand.u32 %v763, 4294901760
    %1131 = vmatpush1.msra.mxu0 %v1130
    %1132 = vmatprep.subr.mxu0 0.0
    %v1133 = vand.u32 %v762, 4294901760
    %1134 = vmatpush1.msra.mxu0 %v1133
    %1135 = vmatprep.subr.mxu0 0.0
    %v1136 = vand.u32 %v761, 4294901760
    %1137 = vmatpush1.msra.mxu0 %v1136
    %1138 = vmatprep.subr.mxu0 0.0
    %v1139 = vand.u32 %v760, 4294901760
    %1140 = vmatpush1.msra.mxu0 %v1139
    %1141 = vmatprep.subr.mxu0 0.0
    %v1142 = vand.u32 %v759, 4294901760
    %1143 = vmatpush1.msra.mxu0 %v1142
    %1144 = vmatprep.subr.mxu0 0.0
    %v1145 = vand.u32 %v758, 4294901760
    %1146 = vmatpush1.msra.mxu0 %v1145
    %1147 = vmatprep.subr.mxu0 0.0
    %v1148 = vand.u32 %v757, 4294901760
    %1149 = vmatpush1.msra.mxu0 %v1148
    %1150 = vmatprep.subr.mxu0 0.0
    %v1151 = vand.u32 %v756, 4294901760
    %1152 = vmatpush1.msra.mxu0 %v1151
    %1153 = vmatprep.subr.mxu0 0.0
    %v1154 = vand.u32 %v755, 4294901760
    %1155 = vmatpush1.msra.mxu0 %v1154
    %1156 = vmatprep.subr.mxu0 0.0
    %v1157 = vand.u32 %v754, 4294901760
    %1158 = vmatpush1.msra.mxu0 %v1157
    %1159 = vmatprep.subr.mxu0 0.0
    %v1160 = vand.u32 %v753, 4294901760
    %1161 = vmatpush1.msra.mxu0 %v1160
    %1162 = vmatprep.subr.mxu0 0.0
    %v1163 = vand.u32 %v752, 4294901760
    %1164 = vmatpush1.msra.mxu0 %v1163
    %1165 = vmatprep.subr.mxu0 0.0
    %v1166 = vand.u32 %v751, 4294901760
    %1167 = vmatpush1.msra.mxu0 %v1166
    %1168 = vmatprep.subr.mxu0 0.0
    %1169 = vmatpush2.msra.mxu0 0.0
    %1170 = vmatprep.subr.mxu0 0.0
    %1171 = vmatpush2.msra.mxu0 0.0
    %1172 = vmatprep.subr.mxu0 0.0
    %1173 = vmatpush2.msra.mxu0 0.0
    %1174 = vmatprep.subr.mxu0 0.0
    %1175 = vmatpush2.msra.mxu0 0.0
    %1176 = vmatprep.subr.mxu0 0.0
    %1177 = vmatpush2.msra.mxu0 0.0
    %1178 = vmatprep.subr.mxu0 0.0
    %1179 = vmatpush2.msra.mxu0 0.0
    %1180 = vmatprep.subr.mxu0 0.0
    %1181 = vmatpush2.msra.mxu0 0.0
    %1182 = vmatprep.subr.mxu0 0.0
    %1183 = vmatpush2.msra.mxu0 0.0
    %1184 = vmatprep.subr.mxu0 0.0
    %1185 = vmatpush2.msra.mxu0 0.0
    %1186 = vmatprep.subr.mxu0 0.0
    %1187 = vmatpush2.msra.mxu0 0.0
    %1188 = vmatprep.subr.mxu0 0.0
    %1189 = vmatpush2.msra.mxu0 0.0
    %1190 = vmatprep.subr.mxu0 0.0
    %1191 = vmatpush2.msra.mxu0 0.0
    %1192 = vmatprep.subr.mxu0 0.0
    %1193 = vmatpush2.msra.mxu0 0.0
    %1194 = vmatprep.subr.mxu0 0.0
    %1195 = vmatpush2.msra.mxu0 0.0
    %1196 = vmatprep.subr.mxu0 0.0
    %1197 = vmatpush2.msra.mxu0 0.0
    %1198 = vmatprep.subr.mxu0 0.0
    %1199 = vmatpush2.msra.mxu0 0.0
    %1200 = vmatprep.mubr.f32.mxu0 0.0
    %v1201 = vand.u32 %v750, 4294901760
    %v1202 = vsub.f32 %v750, %v1201
    %v1203 = vand.u32 %v1202, 4294901760
    %1204 = vmatmul.mubr.f32.gmra.mxu0 %v1203
    %v1205 = vpop.f32.mrf.mxu0
    %v1206 = vadd.f32 %v1117, %v1205
    %v1207 = vpop.f32.mrf.mxu0
    %1208 = vdwg.mxu0
    %1209 = vmatprep.subr.mxu0 0.0
    %v1210 = vand.u32 %v766, 4294901760
    %v1211 = vsub.f32 %v766, %v1210
    %v1212 = vand.u32 %v1211, 4294901760
    %1213 = vmatpush1.msra.mxu0 %v1212
    %1214 = vmatprep.subr.mxu0 0.0
    %v1215 = vand.u32 %v765, 4294901760
    %v1216 = vsub.f32 %v765, %v1215
    %v1217 = vand.u32 %v1216, 4294901760
    %1218 = vmatpush1.msra.mxu0 %v1217
    %1219 = vmatprep.subr.mxu0 0.0
    %v1220 = vand.u32 %v764, 4294901760
    %v1221 = vsub.f32 %v764, %v1220
    %v1222 = vand.u32 %v1221, 4294901760
    %1223 = vmatpush1.msra.mxu0 %v1222
    %1224 = vmatprep.subr.mxu0 0.0
    %v1225 = vand.u32 %v763, 4294901760
    %v1226 = vsub.f32 %v763, %v1225
    %v1227 = vand.u32 %v1226, 4294901760
    %1228 = vmatpush1.msra.mxu0 %v1227
    %1229 = vmatprep.subr.mxu0 0.0
    %v1230 = vand.u32 %v762, 4294901760
    %v1231 = vsub.f32 %v762, %v1230
    %v1232 = vand.u32 %v1231, 4294901760
    %1233 = vmatpush1.msra.mxu0 %v1232
    %1234 = vmatprep.subr.mxu0 0.0
    %v1235 = vand.u32 %v761, 4294901760
    %v1236 = vsub.f32 %v761, %v1235
    %v1237 = vand.u32 %v1236, 4294901760
    %1238 = vmatpush1.msra.mxu0 %v1237
    %1239 = vmatprep.subr.mxu0 0.0
    %v1240 = vand.u32 %v760, 4294901760
    %v1241 = vsub.f32 %v760, %v1240
    %v1242 = vand.u32 %v1241, 4294901760
    %1243 = vmatpush1.msra.mxu0 %v1242
    %1244 = vmatprep.subr.mxu0 0.0
    %v1245 = vand.u32 %v759, 4294901760
    %v1246 = vsub.f32 %v759, %v1245
    %v1247 = vand.u32 %v1246, 4294901760
    %1248 = vmatpush1.msra.mxu0 %v1247
    %1249 = vmatprep.subr.mxu0 0.0
    %v1250 = vand.u32 %v758, 4294901760
    %v1251 = vsub.f32 %v758, %v1250
    %v1252 = vand.u32 %v1251, 4294901760
    %1253 = vmatpush1.msra.mxu0 %v1252
    %1254 = vmatprep.subr.mxu0 0.0
    %v1255 = vand.u32 %v757, 4294901760
    %v1256 = vsub.f32 %v757, %v1255
    %v1257 = vand.u32 %v1256, 4294901760
    %1258 = vmatpush1.msra.mxu0 %v1257
    %1259 = vmatprep.subr.mxu0 0.0
    %v1260 = vand.u32 %v756, 4294901760
    %v1261 = vsub.f32 %v756, %v1260
    %v1262 = vand.u32 %v1261, 4294901760
    %1263 = vmatpush1.msra.mxu0 %v1262
    %1264 = vmatprep.subr.mxu0 0.0
    %v1265 = vand.u32 %v755, 4294901760
    %v1266 = vsub.f32 %v755, %v1265
    %v1267 = vand.u32 %v1266, 4294901760
    %1268 = vmatpush1.msra.mxu0 %v1267
    %1269 = vmatprep.subr.mxu0 0.0
    %v1270 = vand.u32 %v754, 4294901760
    %v1271 = vsub.f32 %v754, %v1270
    %v1272 = vand.u32 %v1271, 4294901760
    %1273 = vmatpush1.msra.mxu0 %v1272
    %1274 = vmatprep.subr.mxu0 0.0
    %v1275 = vand.u32 %v753, 4294901760
    %v1276 = vsub.f32 %v753, %v1275
    %v1277 = vand.u32 %v1276, 4294901760
    %1278 = vmatpush1.msra.mxu0 %v1277
    %1279 = vmatprep.subr.mxu0 0.0
    %v1280 = vand.u32 %v752, 4294901760
    %v1281 = vsub.f32 %v752, %v1280
    %v1282 = vand.u32 %v1281, 4294901760
    %1283 = vmatpush1.msra.mxu0 %v1282
    %1284 = vmatprep.subr.mxu0 0.0
    %v1285 = vand.u32 %v751, 4294901760
    %v1286 = vsub.f32 %v751, %v1285
    %v1287 = vand.u32 %v1286, 4294901760
    %1288 = vmatpush1.msra.mxu0 %v1287
    %1289 = vmatprep.subr.mxu0 0.0
    %1290 = vmatpush2.msra.mxu0 0.0
    %1291 = vmatprep.subr.mxu0 0.0
    %1292 = vmatpush2.msra.mxu0 0.0
    %1293 = vmatprep.subr.mxu0 0.0
    %1294 = vmatpush2.msra.mxu0 0.0
    %1295 = vmatprep.subr.mxu0 0.0
    %1296 = vmatpush2.msra.mxu0 0.0
    %1297 = vmatprep.subr.mxu0 0.0
    %1298 = vmatpush2.msra.mxu0 0.0
    %1299 = vmatprep.subr.mxu0 0.0
    %1300 = vmatpush2.msra.mxu0 0.0
    %1301 = vmatprep.subr.mxu0 0.0
    %1302 = vmatpush2.msra.mxu0 0.0
    %1303 = vmatprep.subr.mxu0 0.0
    %1304 = vmatpush2.msra.mxu0 0.0
    %1305 = vmatprep.subr.mxu0 0.0
    %1306 = vmatpush2.msra.mxu0 0.0
    %1307 = vmatprep.subr.mxu0 0.0
    %1308 = vmatpush2.msra.mxu0 0.0
    %1309 = vmatprep.subr.mxu0 0.0
    %1310 = vmatpush2.msra.mxu0 0.0
    %1311 = vmatprep.subr.mxu0 0.0
    %1312 = vmatpush2.msra.mxu0 0.0
    %1313 = vmatprep.subr.mxu0 0.0
    %1314 = vmatpush2.msra.mxu0 0.0
    %1315 = vmatprep.subr.mxu0 0.0
    %1316 = vmatpush2.msra.mxu0 0.0
    %1317 = vmatprep.subr.mxu0 0.0
    %1318 = vmatpush2.msra.mxu0 0.0
    %1319 = vmatprep.subr.mxu0 0.0
    %1320 = vmatpush2.msra.mxu0 0.0
    %1321 = vmatprep.mubr.f32.mxu0 0.0
    %v1322 = vand.u32 %v750, 4294901760
    %1323 = vmatmul.mubr.f32.gmra.mxu0 %v1322
    %v1324 = vpop.f32.mrf.mxu0
    %v1325 = vadd.f32 %v1206, %v1324
    %v1326 = vpop.f32.mrf.mxu0
    %1327 = vdwg.mxu0
    %1328 = vmatprep.subr.mxu0 0.0
    %v1329 = vand.u32 %v766, 4294901760
    %1330 = vmatpush1.msra.mxu0 %v1329
    %1331 = vmatprep.subr.mxu0 0.0
    %v1332 = vand.u32 %v765, 4294901760
    %1333 = vmatpush1.msra.mxu0 %v1332
    %1334 = vmatprep.subr.mxu0 0.0
    %v1335 = vand.u32 %v764, 4294901760
    %1336 = vmatpush1.msra.mxu0 %v1335
    %1337 = vmatprep.subr.mxu0 0.0
    %v1338 = vand.u32 %v763, 4294901760
    %1339 = vmatpush1.msra.mxu0 %v1338
    %1340 = vmatprep.subr.mxu0 0.0
    %v1341 = vand.u32 %v762, 4294901760
    %1342 = vmatpush1.msra.mxu0 %v1341
    %1343 = vmatprep.subr.mxu0 0.0
    %v1344 = vand.u32 %v761, 4294901760
    %1345 = vmatpush1.msra.mxu0 %v1344
    %1346 = vmatprep.subr.mxu0 0.0
    %v1347 = vand.u32 %v760, 4294901760
    %1348 = vmatpush1.msra.mxu0 %v1347
    %1349 = vmatprep.subr.mxu0 0.0
    %v1350 = vand.u32 %v759, 4294901760
    %1351 = vmatpush1.msra.mxu0 %v1350
    %1352 = vmatprep.subr.mxu0 0.0
    %v1353 = vand.u32 %v758, 4294901760
    %1354 = vmatpush1.msra.mxu0 %v1353
    %1355 = vmatprep.subr.mxu0 0.0
    %v1356 = vand.u32 %v757, 4294901760
    %1357 = vmatpush1.msra.mxu0 %v1356
    %1358 = vmatprep.subr.mxu0 0.0
    %v1359 = vand.u32 %v756, 4294901760
    %1360 = vmatpush1.msra.mxu0 %v1359
    %1361 = vmatprep.subr.mxu0 0.0
    %v1362 = vand.u32 %v755, 4294901760
    %1363 = vmatpush1.msra.mxu0 %v1362
    %1364 = vmatprep.subr.mxu0 0.0
    %v1365 = vand.u32 %v754, 4294901760
    %1366 = vmatpush1.msra.mxu0 %v1365
    %1367 = vmatprep.subr.mxu0 0.0
    %v1368 = vand.u32 %v753, 4294901760
    %1369 = vmatpush1.msra.mxu0 %v1368
    %1370 = vmatprep.subr.mxu0 0.0
    %v1371 = vand.u32 %v752, 4294901760
    %1372 = vmatpush1.msra.mxu0 %v1371
    %1373 = vmatprep.subr.mxu0 0.0
    %v1374 = vand.u32 %v751, 4294901760
    %1375 = vmatpush1.msra.mxu0 %v1374
    %1376 = vmatprep.subr.mxu0 0.0
    %1377 = vmatpush2.msra.mxu0 0.0
    %1378 = vmatprep.subr.mxu0 0.0
    %1379 = vmatpush2.msra.mxu0 0.0
    %1380 = vmatprep.subr.mxu0 0.0
    %1381 = vmatpush2.msra.mxu0 0.0
    %1382 = vmatprep.subr.mxu0 0.0
    %1383 = vmatpush2.msra.mxu0 0.0
    %1384 = vmatprep.subr.mxu0 0.0
    %1385 = vmatpush2.msra.mxu0 0.0
    %1386 = vmatprep.subr.mxu0 0.0
    %1387 = vmatpush2.msra.mxu0 0.0
    %1388 = vmatprep.subr.mxu0 0.0
    %1389 = vmatpush2.msra.mxu0 0.0
    %1390 = vmatprep.subr.mxu0 0.0
    %1391 = vmatpush2.msra.mxu0 0.0
    %1392 = vmatprep.subr.mxu0 0.0
    %1393 = vmatpush2.msra.mxu0 0.0
    %1394 = vmatprep.subr.mxu0 0.0
    %1395 = vmatpush2.msra.mxu0 0.0
    %1396 = vmatprep.subr.mxu0 0.0
    %1397 = vmatpush2.msra.mxu0 0.0
    %1398 = vmatprep.subr.mxu0 0.0
    %1399 = vmatpush2.msra.mxu0 0.0
    %1400 = vmatprep.subr.mxu0 0.0
    %1401 = vmatpush2.msra.mxu0 0.0
    %1402 = vmatprep.subr.mxu0 0.0
    %1403 = vmatpush2.msra.mxu0 0.0
    %1404 = vmatprep.subr.mxu0 0.0
    %1405 = vmatpush2.msra.mxu0 0.0
    %1406 = vmatprep.subr.mxu0 0.0
    %1407 = vmatpush2.msra.mxu0 0.0
    %1408 = vmatprep.mubr.f32.mxu0 0.0
    %v1409 = vand.u32 %v750, 4294901760
    %1410 = vmatmul.mubr.f32.gmra.mxu0 %v1409
    %v1411 = vpop.f32.mrf.mxu0
    %v1412 = vadd.f32 %v1325, %v1411
    %v1413 = vpop.f32.mrf.mxu0
    %1414 = vdwg.mxu0
    %v1415 = vxor.u32 %v1412, 2147483648
    %v1416 = vmul.f32 %v1415, 1.442695
    %v1417 = vpow.pop %v1416
    %v1418 = vadd.f32 %v1417, 1.0
    %v1419 = vrcp.pop %v1418
    %v1420 = vmul.f32 1.0, %v1419
    %v1421 = vld [vmem:[#allocation8] sm:$0xff]
    %v1422 = vld [vmem:[#allocation8 + $0x8] sm:$0xff]
    %v1423 = vld [vmem:[#allocation8 + $0x10] sm:$0xff]
    %v1424 = vld [vmem:[#allocation8 + $0x18] sm:$0xff]
    %v1425 = vld [vmem:[#allocation8 + $0x20] sm:$0xff]
    %v1426 = vld [vmem:[#allocation8 + $0x28] sm:$0xff]
    %v1427 = vld [vmem:[#allocation8 + $0x30] sm:$0xff]
    %v1428 = vld [vmem:[#allocation8 + $0x38] sm:$0xff]
    %v1429 = vld [vmem:[#allocation8 + $0x40] sm:$0xff]
    %v1430 = vld [vmem:[#allocation8 + $0x48] sm:$0xff]
    %v1431 = vld [vmem:[#allocation8 + $0x50] sm:$0xff]
    %v1432 = vld [vmem:[#allocation8 + $0x58] sm:$0xff]
    %v1433 = vld [vmem:[#allocation8 + $0x60] sm:$0xff]
    %v1434 = vld [vmem:[#allocation8 + $0x68] sm:$0xff]
    %v1435 = vld [vmem:[#allocation8 + $0x70] sm:$0xff]
    %v1436 = vld [vmem:[#allocation8 + $0x78] sm:$0xff]
    %v1437 = vld [vmem:[%s6] sm:$0x1]
    %v1439 = vlaneseq
    %v1440 = vshrl.u32 %v1439, 7
    %v1441 = vsub.s32 0, %v1440
    %v1442 = vrot.slane %v1437, %v1441
    %1444 = vmatprep.subr.mxu0 0.0
    %v1445 = vand.u32 %v1436, 4294901760
    %1446 = vmatpush1.msra.mxu0 %v1445
    %1447 = vmatprep.subr.mxu0 0.0
    %v1448 = vand.u32 %v1435, 4294901760
    %1449 = vmatpush1.msra.mxu0 %v1448
    %1450 = vmatprep.subr.mxu0 0.0
    %v1451 = vand.u32 %v1434, 4294901760
    %1452 = vmatpush1.msra.mxu0 %v1451
    %1453 = vmatprep.subr.mxu0 0.0
    %v1454 = vand.u32 %v1433, 4294901760
    %1455 = vmatpush1.msra.mxu0 %v1454
    %1456 = vmatprep.subr.mxu0 0.0
    %v1457 = vand.u32 %v1432, 4294901760
    %1458 = vmatpush1.msra.mxu0 %v1457
    %1459 = vmatprep.subr.mxu0 0.0
    %v1460 = vand.u32 %v1431, 4294901760
    %1461 = vmatpush1.msra.mxu0 %v1460
    %1462 = vmatprep.subr.mxu0 0.0
    %v1463 = vand.u32 %v1430, 4294901760
    %1464 = vmatpush1.msra.mxu0 %v1463
    %1465 = vmatprep.subr.mxu0 0.0
    %v1466 = vand.u32 %v1429, 4294901760
    %1467 = vmatpush1.msra.mxu0 %v1466
    %1468 = vmatprep.subr.mxu0 0.0
    %v1469 = vand.u32 %v1428, 4294901760
    %1470 = vmatpush1.msra.mxu0 %v1469
    %1471 = vmatprep.subr.mxu0 0.0
    %v1472 = vand.u32 %v1427, 4294901760
    %1473 = vmatpush1.msra.mxu0 %v1472
    %1474 = vmatprep.subr.mxu0 0.0
    %v1475 = vand.u32 %v1426, 4294901760
    %1476 = vmatpush1.msra.mxu0 %v1475
    %1477 = vmatprep.subr.mxu0 0.0
    %v1478 = vand.u32 %v1425, 4294901760
    %1479 = vmatpush1.msra.mxu0 %v1478
    %1480 = vmatprep.subr.mxu0 0.0
    %v1481 = vand.u32 %v1424, 4294901760
    %1482 = vmatpush1.msra.mxu0 %v1481
    %1483 = vmatprep.subr.mxu0 0.0
    %v1484 = vand.u32 %v1423, 4294901760
    %1485 = vmatpush1.msra.mxu0 %v1484
    %1486 = vmatprep.subr.mxu0 0.0
    %v1487 = vand.u32 %v1422, 4294901760
    %1488 = vmatpush1.msra.mxu0 %v1487
    %1489 = vmatprep.subr.mxu0 0.0
    %v1490 = vand.u32 %v1421, 4294901760
    %1491 = vmatpush1.msra.mxu0 %v1490
    %1492 = vmatprep.subr.mxu0 0.0
    %1493 = vmatpush2.msra.mxu0 0.0
    %1494 = vmatprep.subr.mxu0 0.0
    %1495 = vmatpush2.msra.mxu0 0.0
    %1496 = vmatprep.subr.mxu0 0.0
    %1497 = vmatpush2.msra.mxu0 0.0
    %1498 = vmatprep.subr.mxu0 0.0
    %1499 = vmatpush2.msra.mxu0 0.0
    %1500 = vmatprep.subr.mxu0 0.0
    %1501 = vmatpush2.msra.mxu0 0.0
    %1502 = vmatprep.subr.mxu0 0.0
    %1503 = vmatpush2.msra.mxu0 0.0
    %1504 = vmatprep.subr.mxu0 0.0
    %1505 = vmatpush2.msra.mxu0 0.0
    %1506 = vmatprep.subr.mxu0 0.0
    %1507 = vmatpush2.msra.mxu0 0.0
    %1508 = vmatprep.subr.mxu0 0.0
    %1509 = vmatpush2.msra.mxu0 0.0
    %1510 = vmatprep.subr.mxu0 0.0
    %1511 = vmatpush2.msra.mxu0 0.0
    %1512 = vmatprep.subr.mxu0 0.0
    %1513 = vmatpush2.msra.mxu0 0.0
    %1514 = vmatprep.subr.mxu0 0.0
    %1515 = vmatpush2.msra.mxu0 0.0
    %1516 = vmatprep.subr.mxu0 0.0
    %1517 = vmatpush2.msra.mxu0 0.0
    %1518 = vmatprep.subr.mxu0 0.0
    %1519 = vmatpush2.msra.mxu0 0.0
    %1520 = vmatprep.subr.mxu0 0.0
    %1521 = vmatpush2.msra.mxu0 0.0
    %1522 = vmatprep.subr.mxu0 0.0
    %1523 = vmatpush2.msra.mxu0 0.0
    %1524 = vmatprep.mubr.f32.mxu0 0.0
    %v1525 = vand.u32 %v1420, 4294901760
    %v1526 = vsub.f32 %v1420, %v1525
    %v1527 = vand.u32 %v1526, 4294901760
    %v1528 = vsub.f32 %v1526, %v1527
    %v1529 = vand.u32 %v1528, 4294901760
    %1530 = vmatmul.mubr.f32.gmra.mxu0 %v1529
    %v1531 = vpop.f32.mrf.mxu0
    %v1532 = vadd.f32 %v1442, %v1531
    %v1533 = vpop.f32.mrf.mxu0
    %1534 = vdwg.mxu0
    %1535 = vmatprep.subr.mxu0 0.0
    %v1536 = vand.u32 %v1436, 4294901760
    %v1537 = vsub.f32 %v1436, %v1536
    %v1538 = vand.u32 %v1537, 4294901760
    %v1539 = vsub.f32 %v1537, %v1538
    %v1540 = vand.u32 %v1539, 4294901760
    %1541 = vmatpush1.msra.mxu0 %v1540
    %1542 = vmatprep.subr.mxu0 0.0
    %v1543 = vand.u32 %v1435, 4294901760
    %v1544 = vsub.f32 %v1435, %v1543
    %v1545 = vand.u32 %v1544, 4294901760
    %v1546 = vsub.f32 %v1544, %v1545
    %v1547 = vand.u32 %v1546, 4294901760
    %1548 = vmatpush1.msra.mxu0 %v1547
    %1549 = vmatprep.subr.mxu0 0.0
    %v1550 = vand.u32 %v1434, 4294901760
    %v1551 = vsub.f32 %v1434, %v1550
    %v1552 = vand.u32 %v1551, 4294901760
    %v1553 = vsub.f32 %v1551, %v1552
    %v1554 = vand.u32 %v1553, 4294901760
    %1555 = vmatpush1.msra.mxu0 %v1554
    %1556 = vmatprep.subr.mxu0 0.0
    %v1557 = vand.u32 %v1433, 4294901760
    %v1558 = vsub.f32 %v1433, %v1557
    %v1559 = vand.u32 %v1558, 4294901760
    %v1560 = vsub.f32 %v1558, %v1559
    %v1561 = vand.u32 %v1560, 4294901760
    %1562 = vmatpush1.msra.mxu0 %v1561
    %1563 = vmatprep.subr.mxu0 0.0
    %v1564 = vand.u32 %v1432, 4294901760
    %v1565 = vsub.f32 %v1432, %v1564
    %v1566 = vand.u32 %v1565, 4294901760
    %v1567 = vsub.f32 %v1565, %v1566
    %v1568 = vand.u32 %v1567, 4294901760
    %1569 = vmatpush1.msra.mxu0 %v1568
    %1570 = vmatprep.subr.mxu0 0.0
    %v1571 = vand.u32 %v1431, 4294901760
    %v1572 = vsub.f32 %v1431, %v1571
    %v1573 = vand.u32 %v1572, 4294901760
    %v1574 = vsub.f32 %v1572, %v1573
    %v1575 = vand.u32 %v1574, 4294901760
    %1576 = vmatpush1.msra.mxu0 %v1575
    %1577 = vmatprep.subr.mxu0 0.0
    %v1578 = vand.u32 %v1430, 4294901760
    %v1579 = vsub.f32 %v1430, %v1578
    %v1580 = vand.u32 %v1579, 4294901760
    %v1581 = vsub.f32 %v1579, %v1580
    %v1582 = vand.u32 %v1581, 4294901760
    %1583 = vmatpush1.msra.mxu0 %v1582
    %1584 = vmatprep.subr.mxu0 0.0
    %v1585 = vand.u32 %v1429, 4294901760
    %v1586 = vsub.f32 %v1429, %v1585
    %v1587 = vand.u32 %v1586, 4294901760
    %v1588 = vsub.f32 %v1586, %v1587
    %v1589 = vand.u32 %v1588, 4294901760
    %1590 = vmatpush1.msra.mxu0 %v1589
    %1591 = vmatprep.subr.mxu0 0.0
    %v1592 = vand.u32 %v1428, 4294901760
    %v1593 = vsub.f32 %v1428, %v1592
    %v1594 = vand.u32 %v1593, 4294901760
    %v1595 = vsub.f32 %v1593, %v1594
    %v1596 = vand.u32 %v1595, 4294901760
    %1597 = vmatpush1.msra.mxu0 %v1596
    %1598 = vmatprep.subr.mxu0 0.0
    %v1599 = vand.u32 %v1427, 4294901760
    %v1600 = vsub.f32 %v1427, %v1599
    %v1601 = vand.u32 %v1600, 4294901760
    %v1602 = vsub.f32 %v1600, %v1601
    %v1603 = vand.u32 %v1602, 4294901760
    %1604 = vmatpush1.msra.mxu0 %v1603
    %1605 = vmatprep.subr.mxu0 0.0
    %v1606 = vand.u32 %v1426, 4294901760
    %v1607 = vsub.f32 %v1426, %v1606
    %v1608 = vand.u32 %v1607, 4294901760
    %v1609 = vsub.f32 %v1607, %v1608
    %v1610 = vand.u32 %v1609, 4294901760
    %1611 = vmatpush1.msra.mxu0 %v1610
    %1612 = vmatprep.subr.mxu0 0.0
    %v1613 = vand.u32 %v1425, 4294901760
    %v1614 = vsub.f32 %v1425, %v1613
    %v1615 = vand.u32 %v1614, 4294901760
    %v1616 = vsub.f32 %v1614, %v1615
    %v1617 = vand.u32 %v1616, 4294901760
    %1618 = vmatpush1.msra.mxu0 %v1617
    %1619 = vmatprep.subr.mxu0 0.0
    %v1620 = vand.u32 %v1424, 4294901760
    %v1621 = vsub.f32 %v1424, %v1620
    %v1622 = vand.u32 %v1621, 4294901760
    %v1623 = vsub.f32 %v1621, %v1622
    %v1624 = vand.u32 %v1623, 4294901760
    %1625 = vmatpush1.msra.mxu0 %v1624
    %1626 = vmatprep.subr.mxu0 0.0
    %v1627 = vand.u32 %v1423, 4294901760
    %v1628 = vsub.f32 %v1423, %v1627
    %v1629 = vand.u32 %v1628, 4294901760
    %v1630 = vsub.f32 %v1628, %v1629
    %v1631 = vand.u32 %v1630, 4294901760
    %1632 = vmatpush1.msra.mxu0 %v1631
    %1633 = vmatprep.subr.mxu0 0.0
    %v1634 = vand.u32 %v1422, 4294901760
    %v1635 = vsub.f32 %v1422, %v1634
    %v1636 = vand.u32 %v1635, 4294901760
    %v1637 = vsub.f32 %v1635, %v1636
    %v1638 = vand.u32 %v1637, 4294901760
    %1639 = vmatpush1.msra.mxu0 %v1638
    %1640 = vmatprep.subr.mxu0 0.0
    %v1641 = vand.u32 %v1421, 4294901760
    %v1642 = vsub.f32 %v1421, %v1641
    %v1643 = vand.u32 %v1642, 4294901760
    %v1644 = vsub.f32 %v1642, %v1643
    %v1645 = vand.u32 %v1644, 4294901760
    %1646 = vmatpush1.msra.mxu0 %v1645
    %1647 = vmatprep.subr.mxu0 0.0
    %1648 = vmatpush2.msra.mxu0 0.0
    %1649 = vmatprep.subr.mxu0 0.0
    %1650 = vmatpush2.msra.mxu0 0.0
    %1651 = vmatprep.subr.mxu0 0.0
    %1652 = vmatpush2.msra.mxu0 0.0
    %1653 = vmatprep.subr.mxu0 0.0
    %1654 = vmatpush2.msra.mxu0 0.0
    %1655 = vmatprep.subr.mxu0 0.0
    %1656 = vmatpush2.msra.mxu0 0.0
    %1657 = vmatprep.subr.mxu0 0.0
    %1658 = vmatpush2.msra.mxu0 0.0
    %1659 = vmatprep.subr.mxu0 0.0
    %1660 = vmatpush2.msra.mxu0 0.0
    %1661 = vmatprep.subr.mxu0 0.0
    %1662 = vmatpush2.msra.mxu0 0.0
    %1663 = vmatprep.subr.mxu0 0.0
    %1664 = vmatpush2.msra.mxu0 0.0
    %1665 = vmatprep.subr.mxu0 0.0
    %1666 = vmatpush2.msra.mxu0 0.0
    %1667 = vmatprep.subr.mxu0 0.0
    %1668 = vmatpush2.msra.mxu0 0.0
    %1669 = vmatprep.subr.mxu0 0.0
    %1670 = vmatpush2.msra.mxu0 0.0
    %1671 = vmatprep.subr.mxu0 0.0
    %1672 = vmatpush2.msra.mxu0 0.0
    %1673 = vmatprep.subr.mxu0 0.0
    %1674 = vmatpush2.msra.mxu0 0.0
    %1675 = vmatprep.subr.mxu0 0.0
    %1676 = vmatpush2.msra.mxu0 0.0
    %1677 = vmatprep.subr.mxu0 0.0
    %1678 = vmatpush2.msra.mxu0 0.0
    %1679 = vmatprep.mubr.f32.mxu0 0.0
    %v1680 = vand.u32 %v1420, 4294901760
    %1681 = vmatmul.mubr.f32.gmra.mxu0 %v1680
    %v1682 = vpop.f32.mrf.mxu0
    %v1683 = vadd.f32 %v1532, %v1682
    %v1684 = vpop.f32.mrf.mxu0
    %1685 = vdwg.mxu0
    %1686 = vmatprep.subr.mxu0 0.0
    %v1687 = vand.u32 %v1436, 4294901760
    %v1688 = vsub.f32 %v1436, %v1687
    %1689 = vmatpush1.msra.mxu0 %v1688
    %1690 = vmatprep.subr.mxu0 0.0
    %v1691 = vand.u32 %v1435, 4294901760
    %v1692 = vsub.f32 %v1435, %v1691
    %1693 = vmatpush1.msra.mxu0 %v1692
    %1694 = vmatprep.subr.mxu0 0.0
    %v1695 = vand.u32 %v1434, 4294901760
    %v1696 = vsub.f32 %v1434, %v1695
    %1697 = vmatpush1.msra.mxu0 %v1696
    %1698 = vmatprep.subr.mxu0 0.0
    %v1699 = vand.u32 %v1433, 4294901760
    %v1700 = vsub.f32 %v1433, %v1699
    %1701 = vmatpush1.msra.mxu0 %v1700
    %1702 = vmatprep.subr.mxu0 0.0
    %v1703 = vand.u32 %v1432, 4294901760
    %v1704 = vsub.f32 %v1432, %v1703
    %1705 = vmatpush1.msra.mxu0 %v1704
    %1706 = vmatprep.subr.mxu0 0.0
    %v1707 = vand.u32 %v1431, 4294901760
    %v1708 = vsub.f32 %v1431, %v1707
    %1709 = vmatpush1.msra.mxu0 %v1708
    %1710 = vmatprep.subr.mxu0 0.0
    %v1711 = vand.u32 %v1430, 4294901760
    %v1712 = vsub.f32 %v1430, %v1711
    %1713 = vmatpush1.msra.mxu0 %v1712
    %1714 = vmatprep.subr.mxu0 0.0
    %v1715 = vand.u32 %v1429, 4294901760
    %v1716 = vsub.f32 %v1429, %v1715
    %1717 = vmatpush1.msra.mxu0 %v1716
    %1718 = vmatprep.subr.mxu0 0.0
    %v1719 = vand.u32 %v1428, 4294901760
    %v1720 = vsub.f32 %v1428, %v1719
    %1721 = vmatpush1.msra.mxu0 %v1720
    %1722 = vmatprep.subr.mxu0 0.0
    %v1723 = vand.u32 %v1427, 4294901760
    %v1724 = vsub.f32 %v1427, %v1723
    %1725 = vmatpush1.msra.mxu0 %v1724
    %1726 = vmatprep.subr.mxu0 0.0
    %v1727 = vand.u32 %v1426, 4294901760
    %v1728 = vsub.f32 %v1426, %v1727
    %1729 = vmatpush1.msra.mxu0 %v1728
    %1730 = vmatprep.subr.mxu0 0.0
    %v1731 = vand.u32 %v1425, 4294901760
    %v1732 = vsub.f32 %v1425, %v1731
    %1733 = vmatpush1.msra.mxu0 %v1732
    %1734 = vmatprep.subr.mxu0 0.0
    %v1735 = vand.u32 %v1424, 4294901760
    %v1736 = vsub.f32 %v1424, %v1735
    %1737 = vmatpush1.msra.mxu0 %v1736
    %1738 = vmatprep.subr.mxu0 0.0
    %v1739 = vand.u32 %v1423, 4294901760
    %v1740 = vsub.f32 %v1423, %v1739
    %1741 = vmatpush1.msra.mxu0 %v1740
    %1742 = vmatprep.subr.mxu0 0.0
    %v1743 = vand.u32 %v1422, 4294901760
    %v1744 = vsub.f32 %v1422, %v1743
    %1745 = vmatpush1.msra.mxu0 %v1744
    %1746 = vmatprep.subr.mxu0 0.0
    %v1747 = vand.u32 %v1421, 4294901760
    %v1748 = vsub.f32 %v1421, %v1747
    %1749 = vmatpush1.msra.mxu0 %v1748
    %1750 = vmatprep.subr.mxu0 0.0
    %1751 = vmatpush2.msra.mxu0 0.0
    %1752 = vmatprep.subr.mxu0 0.0
    %1753 = vmatpush2.msra.mxu0 0.0
    %1754 = vmatprep.subr.mxu0 0.0
    %1755 = vmatpush2.msra.mxu0 0.0
    %1756 = vmatprep.subr.mxu0 0.0
    %1757 = vmatpush2.msra.mxu0 0.0
    %1758 = vmatprep.subr.mxu0 0.0
    %1759 = vmatpush2.msra.mxu0 0.0
    %1760 = vmatprep.subr.mxu0 0.0
    %1761 = vmatpush2.msra.mxu0 0.0
    %1762 = vmatprep.subr.mxu0 0.0
    %1763 = vmatpush2.msra.mxu0 0.0
    %1764 = vmatprep.subr.mxu0 0.0
    %1765 = vmatpush2.msra.mxu0 0.0
    %1766 = vmatprep.subr.mxu0 0.0
    %1767 = vmatpush2.msra.mxu0 0.0
    %1768 = vmatprep.subr.mxu0 0.0
    %1769 = vmatpush2.msra.mxu0 0.0
    %1770 = vmatprep.subr.mxu0 0.0
    %1771 = vmatpush2.msra.mxu0 0.0
    %1772 = vmatprep.subr.mxu0 0.0
    %1773 = vmatpush2.msra.mxu0 0.0
    %1774 = vmatprep.subr.mxu0 0.0
    %1775 = vmatpush2.msra.mxu0 0.0
    %1776 = vmatprep.subr.mxu0 0.0
    %1777 = vmatpush2.msra.mxu0 0.0
    %1778 = vmatprep.subr.mxu0 0.0
    %1779 = vmatpush2.msra.mxu0 0.0
    %1780 = vmatprep.subr.mxu0 0.0
    %1781 = vmatpush2.msra.mxu0 0.0
    %1782 = vmatprep.mubr.f32.mxu0 0.0
    %v1783 = vand.u32 %v1420, 4294901760
    %v1784 = vsub.f32 %v1420, %v1783
    %1785 = vmatmul.mubr.f32.gmra.mxu0 %v1784
    %v1786 = vpop.f32.mrf.mxu0
    %v1787 = vadd.f32 %v1683, %v1786
    %v1788 = vpop.f32.mrf.mxu0
    %1789 = vdwg.mxu0
    %1790 = vmatprep.subr.mxu0 0.0
    %v1791 = vand.u32 %v1436, 4294901760
    %1792 = vmatpush1.msra.mxu0 %v1791
    %1793 = vmatprep.subr.mxu0 0.0
    %v1794 = vand.u32 %v1435, 4294901760
    %1795 = vmatpush1.msra.mxu0 %v1794
    %1796 = vmatprep.subr.mxu0 0.0
    %v1797 = vand.u32 %v1434, 4294901760
    %1798 = vmatpush1.msra.mxu0 %v1797
    %1799 = vmatprep.subr.mxu0 0.0
    %v1800 = vand.u32 %v1433, 4294901760
    %1801 = vmatpush1.msra.mxu0 %v1800
    %1802 = vmatprep.subr.mxu0 0.0
    %v1803 = vand.u32 %v1432, 4294901760
    %1804 = vmatpush1.msra.mxu0 %v1803
    %1805 = vmatprep.subr.mxu0 0.0
    %v1806 = vand.u32 %v1431, 4294901760
    %1807 = vmatpush1.msra.mxu0 %v1806
    %1808 = vmatprep.subr.mxu0 0.0
    %v1809 = vand.u32 %v1430, 4294901760
    %1810 = vmatpush1.msra.mxu0 %v1809
    %1811 = vmatprep.subr.mxu0 0.0
    %v1812 = vand.u32 %v1429, 4294901760
    %1813 = vmatpush1.msra.mxu0 %v1812
    %1814 = vmatprep.subr.mxu0 0.0
    %v1815 = vand.u32 %v1428, 4294901760
    %1816 = vmatpush1.msra.mxu0 %v1815
    %1817 = vmatprep.subr.mxu0 0.0
    %v1818 = vand.u32 %v1427, 4294901760
    %1819 = vmatpush1.msra.mxu0 %v1818
    %1820 = vmatprep.subr.mxu0 0.0
    %v1821 = vand.u32 %v1426, 4294901760
    %1822 = vmatpush1.msra.mxu0 %v1821
    %1823 = vmatprep.subr.mxu0 0.0
    %v1824 = vand.u32 %v1425, 4294901760
    %1825 = vmatpush1.msra.mxu0 %v1824
    %1826 = vmatprep.subr.mxu0 0.0
    %v1827 = vand.u32 %v1424, 4294901760
    %1828 = vmatpush1.msra.mxu0 %v1827
    %1829 = vmatprep.subr.mxu0 0.0
    %v1830 = vand.u32 %v1423, 4294901760
    %1831 = vmatpush1.msra.mxu0 %v1830
    %1832 = vmatprep.subr.mxu0 0.0
    %v1833 = vand.u32 %v1422, 4294901760
    %1834 = vmatpush1.msra.mxu0 %v1833
    %1835 = vmatprep.subr.mxu0 0.0
    %v1836 = vand.u32 %v1421, 4294901760
    %1837 = vmatpush1.msra.mxu0 %v1836
    %1838 = vmatprep.subr.mxu0 0.0
    %1839 = vmatpush2.msra.mxu0 0.0
    %1840 = vmatprep.subr.mxu0 0.0
    %1841 = vmatpush2.msra.mxu0 0.0
    %1842 = vmatprep.subr.mxu0 0.0
    %1843 = vmatpush2.msra.mxu0 0.0
    %1844 = vmatprep.subr.mxu0 0.0
    %1845 = vmatpush2.msra.mxu0 0.0
    %1846 = vmatprep.subr.mxu0 0.0
    %1847 = vmatpush2.msra.mxu0 0.0
    %1848 = vmatprep.subr.mxu0 0.0
    %1849 = vmatpush2.msra.mxu0 0.0
    %1850 = vmatprep.subr.mxu0 0.0
    %1851 = vmatpush2.msra.mxu0 0.0
    %1852 = vmatprep.subr.mxu0 0.0
    %1853 = vmatpush2.msra.mxu0 0.0
    %1854 = vmatprep.subr.mxu0 0.0
    %1855 = vmatpush2.msra.mxu0 0.0
    %1856 = vmatprep.subr.mxu0 0.0
    %1857 = vmatpush2.msra.mxu0 0.0
    %1858 = vmatprep.subr.mxu0 0.0
    %1859 = vmatpush2.msra.mxu0 0.0
    %1860 = vmatprep.subr.mxu0 0.0
    %1861 = vmatpush2.msra.mxu0 0.0
    %1862 = vmatprep.subr.mxu0 0.0
    %1863 = vmatpush2.msra.mxu0 0.0
    %1864 = vmatprep.subr.mxu0 0.0
    %1865 = vmatpush2.msra.mxu0 0.0
    %1866 = vmatprep.subr.mxu0 0.0
    %1867 = vmatpush2.msra.mxu0 0.0
    %1868 = vmatprep.subr.mxu0 0.0
    %1869 = vmatpush2.msra.mxu0 0.0
    %1870 = vmatprep.mubr.f32.mxu0 0.0
    %v1871 = vand.u32 %v1420, 4294901760
    %v1872 = vsub.f32 %v1420, %v1871
    %v1873 = vand.u32 %v1872, 4294901760
    %1874 = vmatmul.mubr.f32.gmra.mxu0 %v1873
    %v1875 = vpop.f32.mrf.mxu0
    %v1876 = vadd.f32 %v1787, %v1875
    %v1877 = vpop.f32.mrf.mxu0
    %1878 = vdwg.mxu0
    %1879 = vmatprep.subr.mxu0 0.0
    %v1880 = vand.u32 %v1436, 4294901760
    %v1881 = vsub.f32 %v1436, %v1880
    %v1882 = vand.u32 %v1881, 4294901760
    %1883 = vmatpush1.msra.mxu0 %v1882
    %1884 = vmatprep.subr.mxu0 0.0
    %v1885 = vand.u32 %v1435, 4294901760
    %v1886 = vsub.f32 %v1435, %v1885
    %v1887 = vand.u32 %v1886, 4294901760
    %1888 = vmatpush1.msra.mxu0 %v1887
    %1889 = vmatprep.subr.mxu0 0.0
    %v1890 = vand.u32 %v1434, 4294901760
    %v1891 = vsub.f32 %v1434, %v1890
    %v1892 = vand.u32 %v1891, 4294901760
    %1893 = vmatpush1.msra.mxu0 %v1892
    %1894 = vmatprep.subr.mxu0 0.0
    %v1895 = vand.u32 %v1433, 4294901760
    %v1896 = vsub.f32 %v1433, %v1895
    %v1897 = vand.u32 %v1896, 4294901760
    %1898 = vmatpush1.msra.mxu0 %v1897
    %1899 = vmatprep.subr.mxu0 0.0
    %v1900 = vand.u32 %v1432, 4294901760
    %v1901 = vsub.f32 %v1432, %v1900
    %v1902 = vand.u32 %v1901, 4294901760
    %1903 = vmatpush1.msra.mxu0 %v1902
    %1904 = vmatprep.subr.mxu0 0.0
    %v1905 = vand.u32 %v1431, 4294901760
    %v1906 = vsub.f32 %v1431, %v1905
    %v1907 = vand.u32 %v1906, 4294901760
    %1908 = vmatpush1.msra.mxu0 %v1907
    %1909 = vmatprep.subr.mxu0 0.0
    %v1910 = vand.u32 %v1430, 4294901760
    %v1911 = vsub.f32 %v1430, %v1910
    %v1912 = vand.u32 %v1911, 4294901760
    %1913 = vmatpush1.msra.mxu0 %v1912
    %1914 = vmatprep.subr.mxu0 0.0
    %v1915 = vand.u32 %v1429, 4294901760
    %v1916 = vsub.f32 %v1429, %v1915
    %v1917 = vand.u32 %v1916, 4294901760
    %1918 = vmatpush1.msra.mxu0 %v1917
    %1919 = vmatprep.subr.mxu0 0.0
    %v1920 = vand.u32 %v1428, 4294901760
    %v1921 = vsub.f32 %v1428, %v1920
    %v1922 = vand.u32 %v1921, 4294901760
    %1923 = vmatpush1.msra.mxu0 %v1922
    %1924 = vmatprep.subr.mxu0 0.0
    %v1925 = vand.u32 %v1427, 4294901760
    %v1926 = vsub.f32 %v1427, %v1925
    %v1927 = vand.u32 %v1926, 4294901760
    %1928 = vmatpush1.msra.mxu0 %v1927
    %1929 = vmatprep.subr.mxu0 0.0
    %v1930 = vand.u32 %v1426, 4294901760
    %v1931 = vsub.f32 %v1426, %v1930
    %v1932 = vand.u32 %v1931, 4294901760
    %1933 = vmatpush1.msra.mxu0 %v1932
    %1934 = vmatprep.subr.mxu0 0.0
    %v1935 = vand.u32 %v1425, 4294901760
    %v1936 = vsub.f32 %v1425, %v1935
    %v1937 = vand.u32 %v1936, 4294901760
    %1938 = vmatpush1.msra.mxu0 %v1937
    %1939 = vmatprep.subr.mxu0 0.0
    %v1940 = vand.u32 %v1424, 4294901760
    %v1941 = vsub.f32 %v1424, %v1940
    %v1942 = vand.u32 %v1941, 4294901760
    %1943 = vmatpush1.msra.mxu0 %v1942
    %1944 = vmatprep.subr.mxu0 0.0
    %v1945 = vand.u32 %v1423, 4294901760
    %v1946 = vsub.f32 %v1423, %v1945
    %v1947 = vand.u32 %v1946, 4294901760
    %1948 = vmatpush1.msra.mxu0 %v1947
    %1949 = vmatprep.subr.mxu0 0.0
    %v1950 = vand.u32 %v1422, 4294901760
    %v1951 = vsub.f32 %v1422, %v1950
    %v1952 = vand.u32 %v1951, 4294901760
    %1953 = vmatpush1.msra.mxu0 %v1952
    %1954 = vmatprep.subr.mxu0 0.0
    %v1955 = vand.u32 %v1421, 4294901760
    %v1956 = vsub.f32 %v1421, %v1955
    %v1957 = vand.u32 %v1956, 4294901760
    %1958 = vmatpush1.msra.mxu0 %v1957
    %1959 = vmatprep.subr.mxu0 0.0
    %1960 = vmatpush2.msra.mxu0 0.0
    %1961 = vmatprep.subr.mxu0 0.0
    %1962 = vmatpush2.msra.mxu0 0.0
    %1963 = vmatprep.subr.mxu0 0.0
    %1964 = vmatpush2.msra.mxu0 0.0
    %1965 = vmatprep.subr.mxu0 0.0
    %1966 = vmatpush2.msra.mxu0 0.0
    %1967 = vmatprep.subr.mxu0 0.0
    %1968 = vmatpush2.msra.mxu0 0.0
    %1969 = vmatprep.subr.mxu0 0.0
    %1970 = vmatpush2.msra.mxu0 0.0
    %1971 = vmatprep.subr.mxu0 0.0
    %1972 = vmatpush2.msra.mxu0 0.0
    %1973 = vmatprep.subr.mxu0 0.0
    %1974 = vmatpush2.msra.mxu0 0.0
    %1975 = vmatprep.subr.mxu0 0.0
    %1976 = vmatpush2.msra.mxu0 0.0
    %1977 = vmatprep.subr.mxu0 0.0
    %1978 = vmatpush2.msra.mxu0 0.0
    %1979 = vmatprep.subr.mxu0 0.0
    %1980 = vmatpush2.msra.mxu0 0.0
    %1981 = vmatprep.subr.mxu0 0.0
    %1982 = vmatpush2.msra.mxu0 0.0
    %1983 = vmatprep.subr.mxu0 0.0
    %1984 = vmatpush2.msra.mxu0 0.0
    %1985 = vmatprep.subr.mxu0 0.0
    %1986 = vmatpush2.msra.mxu0 0.0
    %1987 = vmatprep.subr.mxu0 0.0
    %1988 = vmatpush2.msra.mxu0 0.0
    %1989 = vmatprep.subr.mxu0 0.0
    %1990 = vmatpush2.msra.mxu0 0.0
    %1991 = vmatprep.mubr.f32.mxu0 0.0
    %v1992 = vand.u32 %v1420, 4294901760
    %1993 = vmatmul.mubr.f32.gmra.mxu0 %v1992
    %v1994 = vpop.f32.mrf.mxu0
    %v1995 = vadd.f32 %v1876, %v1994
    %v1996 = vpop.f32.mrf.mxu0
    %1997 = vdwg.mxu0
    %1998 = vmatprep.subr.mxu0 0.0
    %v1999 = vand.u32 %v1436, 4294901760
    %2000 = vmatpush1.msra.mxu0 %v1999
    %2001 = vmatprep.subr.mxu0 0.0
    %v2002 = vand.u32 %v1435, 4294901760
    %2003 = vmatpush1.msra.mxu0 %v2002
    %2004 = vmatprep.subr.mxu0 0.0
    %v2005 = vand.u32 %v1434, 4294901760
    %2006 = vmatpush1.msra.mxu0 %v2005
    %2007 = vmatprep.subr.mxu0 0.0
    %v2008 = vand.u32 %v1433, 4294901760
    %2009 = vmatpush1.msra.mxu0 %v2008
    %2010 = vmatprep.subr.mxu0 0.0
    %v2011 = vand.u32 %v1432, 4294901760
    %2012 = vmatpush1.msra.mxu0 %v2011
    %2013 = vmatprep.subr.mxu0 0.0
    %v2014 = vand.u32 %v1431, 4294901760
    %2015 = vmatpush1.msra.mxu0 %v2014
    %2016 = vmatprep.subr.mxu0 0.0
    %v2017 = vand.u32 %v1430, 4294901760
    %2018 = vmatpush1.msra.mxu0 %v2017
    %2019 = vmatprep.subr.mxu0 0.0
    %v2020 = vand.u32 %v1429, 4294901760
    %2021 = vmatpush1.msra.mxu0 %v2020
    %2022 = vmatprep.subr.mxu0 0.0
    %v2023 = vand.u32 %v1428, 4294901760
    %2024 = vmatpush1.msra.mxu0 %v2023
    %2025 = vmatprep.subr.mxu0 0.0
    %v2026 = vand.u32 %v1427, 4294901760
    %2027 = vmatpush1.msra.mxu0 %v2026
    %2028 = vmatprep.subr.mxu0 0.0
    %v2029 = vand.u32 %v1426, 4294901760
    %2030 = vmatpush1.msra.mxu0 %v2029
    %2031 = vmatprep.subr.mxu0 0.0
    %v2032 = vand.u32 %v1425, 4294901760
    %2033 = vmatpush1.msra.mxu0 %v2032
    %2034 = vmatprep.subr.mxu0 0.0
    %v2035 = vand.u32 %v1424, 4294901760
    %2036 = vmatpush1.msra.mxu0 %v2035
    %2037 = vmatprep.subr.mxu0 0.0
    %v2038 = vand.u32 %v1423, 4294901760
    %2039 = vmatpush1.msra.mxu0 %v2038
    %2040 = vmatprep.subr.mxu0 0.0
    %v2041 = vand.u32 %v1422, 4294901760
    %2042 = vmatpush1.msra.mxu0 %v2041
    %2043 = vmatprep.subr.mxu0 0.0
    %v2044 = vand.u32 %v1421, 4294901760
    %2045 = vmatpush1.msra.mxu0 %v2044
    %2046 = vmatprep.subr.mxu0 0.0
    %2047 = vmatpush2.msra.mxu0 0.0
    %2048 = vmatprep.subr.mxu0 0.0
    %2049 = vmatpush2.msra.mxu0 0.0
    %2050 = vmatprep.subr.mxu0 0.0
    %2051 = vmatpush2.msra.mxu0 0.0
    %2052 = vmatprep.subr.mxu0 0.0
    %2053 = vmatpush2.msra.mxu0 0.0
    %2054 = vmatprep.subr.mxu0 0.0
    %2055 = vmatpush2.msra.mxu0 0.0
    %2056 = vmatprep.subr.mxu0 0.0
    %2057 = vmatpush2.msra.mxu0 0.0
    %2058 = vmatprep.subr.mxu0 0.0
    %2059 = vmatpush2.msra.mxu0 0.0
    %2060 = vmatprep.subr.mxu0 0.0
    %2061 = vmatpush2.msra.mxu0 0.0
    %2062 = vmatprep.subr.mxu0 0.0
    %2063 = vmatpush2.msra.mxu0 0.0
    %2064 = vmatprep.subr.mxu0 0.0
    %2065 = vmatpush2.msra.mxu0 0.0
    %2066 = vmatprep.subr.mxu0 0.0
    %2067 = vmatpush2.msra.mxu0 0.0
    %2068 = vmatprep.subr.mxu0 0.0
    %2069 = vmatpush2.msra.mxu0 0.0
    %2070 = vmatprep.subr.mxu0 0.0
    %2071 = vmatpush2.msra.mxu0 0.0
    %2072 = vmatprep.subr.mxu0 0.0
    %2073 = vmatpush2.msra.mxu0 0.0
    %2074 = vmatprep.subr.mxu0 0.0
    %2075 = vmatpush2.msra.mxu0 0.0
    %2076 = vmatprep.subr.mxu0 0.0
    %2077 = vmatpush2.msra.mxu0 0.0
    %2078 = vmatprep.mubr.f32.mxu0 0.0
    %v2079 = vand.u32 %v1420, 4294901760
    %2080 = vmatmul.mubr.f32.gmra.mxu0 %v2079
    %v2081 = vpop.f32.mrf.mxu0
    %v2082 = vadd.f32 %v1995, %v2081
    %v2083 = vpop.f32.mrf.mxu0
    %2084 = vdwg.mxu0
    %2085 = vst [vmem:[#allocation10] sm:$0xff] %v2082
    // Predicated region
    $region46: #{tpu_custom_call.1} parent=1 // pred_check
      _
    $region47: #{tpu_custom_call.1} parent=1 // pred_check_branch
      %2087 = sbr.rel (0) target = $region49
    $region48: #{tpu_custom_call.1} parent=1 // pred_region
      %s2089 = ssub.s32 128, 128
      %2090 = vsyncadd [#allocation4], %s2089
      %s2092 = sshll.u32 [#allocation10], 4
      %s2093 = int_to_ptr.vmem [resolvable:$true] %s2092
      %2095 = dma.vmem_to_hbm [thread:$0]  %s2093, 128, %s7, [#allocation4]
    $region49: #{tpu_custom_call.1} parent=1 // pred_fallthru
      _
    // Predicated region
    $region50: #{tpu_custom_call.1} parent=1 // pred_check
      _
    $region51: #{tpu_custom_call.1} parent=1 // pred_check_branch
      %2097 = sbr.rel (0) target = $region53
    $region52: #{tpu_custom_call.1} parent=1 // pred_region
      %2098 = dma.done [#allocation4], 128
    $region53: #{tpu_custom_call.1} parent=1 // pred_fallthru
      _
    %2099 = vsyncpa [#allocation3], 1
    %2100 = vsyncpa [#allocation6], 1
    %2101 = vsyncpa [#allocation9], 1
    %2102 = vsyncpa [#allocation4], 1

</llo_original>
